<compile_context>
chip_gen: v6e
topology: v6e:2x2x1
jax: 0.10.0
libtpu: 0.0.40
codegen_flags: <defaults>
</compile_context>

<pallas_src>
import jax
import jax.numpy as jnp
from jax.experimental import pallas as pl
from jax.experimental.pallas import tpu as pltpu


def _round_up(n, m):
    return ((n + m - 1) // m) * m


def _pad2(a, rows, cols, dtype):
    r, c = a.shape
    if r != rows or c != cols:
        a = jnp.pad(a, ((0, rows - r), (0, cols - c)))
    return a.astype(dtype)


# --------------------------------------------------------------------------- #
# Kernel body: four lane-dense matmuls, f32 accumulation, f32 bias/ReLU
# epilogue, bf16 re-cast only for the next MXU pass.
# --------------------------------------------------------------------------- #
def mlp_kernel(x_ref, w1_ref, b1_ref, w2_ref, b2_ref,
               w3_ref, b3_ref, w4_ref, b4_ref, o_ref):
    # x arrives as f32; cast to bf16 in-kernel (VPU slot has slack here).
    x = x_ref[...].astype(jnp.bfloat16)

    h = jnp.dot(x, w1_ref[...], preferred_element_type=jnp.float32) + b1_ref[...]
    h = jnp.maximum(h, 0.0).astype(jnp.bfloat16)

    h = jnp.dot(h, w2_ref[...], preferred_element_type=jnp.float32) + b2_ref[...]
    h = jnp.maximum(h, 0.0).astype(jnp.bfloat16)

    h = jnp.dot(h, w3_ref[...], preferred_element_type=jnp.float32) + b3_ref[...]
    h = jnp.maximum(h, 0.0).astype(jnp.bfloat16)

    out = jnp.dot(h, w4_ref[...], preferred_element_type=jnp.float32) + b4_ref[...]
    o_ref[...] = out.astype(o_ref.dtype)


# --------------------------------------------------------------------------- #
# Generation-aware sizing helpers.
# --------------------------------------------------------------------------- #
def _vmem_capacity_bytes():
    try:
        cap = getattr(pltpu.get_tpu_info(), "vmem_capacity_bytes", None)
        if cap:
            return int(cap)
    except Exception:
        pass
    return 64 << 20          # conservative default (v7x per-TensorCore VMEM)


_SINGLE_TC_KINDS = ("v5e", "v5 lite", "v5lite", "v6e", "v6 lite", "v6lite")


def _tensorcores_per_device():
    """1 for single-TensorCore chips (v5e / v6e); 2 otherwise (megacore / v7x)."""
    try:
        kind = jax.devices()[0].device_kind.lower()
    except Exception:
        return 2
    return 1 if any(s in kind for s in _SINGLE_TC_KINDS) else 2


def _resident_bytes(K, H_pad, P_pad, buffers):
    bf16, f32 = 2, 4
    weights = (K * H_pad + 2 * H_pad * H_pad + H_pad * P_pad) * bf16
    biases = (3 * H_pad + P_pad) * f32
    return buffers * (weights + biases)


def _per_row_bytes(K, H_pad, P_pad):
    f32 = 4
    # double-buffered x tile + double-buffered out tile + live hidden temps
    return 2 * K * f32 + 2 * P_pad * f32 + 4 * H_pad * f32


def _max_tile_rows(K, H_pad, P_pad, vmem_cap):
    usable = int(0.5 * vmem_cap) - _resident_bytes(K, H_pad, P_pad, buffers=2) - (4 << 20)
    usable = max(usable, 2 << 20)
    rows = usable // _per_row_bytes(K, H_pad, P_pad)
    return max(8, (rows // 8) * 8)


def _pick_tile_b(B, K, H_pad, P_pad, vmem_cap):
    B8 = _round_up(max(B, 1), 8)
    if _tensorcores_per_device() >= 2 and B8 >= 16:
        # >= 2 grid steps so ("parallel",) shards the batch across both
        # TensorCores; cap the per-step tile so large batches still get several
        # MXU-filling (>= 256-row) steps with DMA/compute overlap.
        tile = min(_round_up(pl.cdiv(B8, 2), 8), 512)
    else:
        # Single TensorCore: one whole-batch tile minimizes per-step overhead.
        tile = B8
    tile = min(tile, _max_tile_rows(K, H_pad, P_pad, vmem_cap))
    return max(8, (tile // 8) * 8)


def _vmem_limit_bytes(tile_b, K, H_pad, P_pad, vmem_cap, weight_buffers):
    f32 = 4
    budget = (_resident_bytes(K, H_pad, P_pad, weight_buffers)
              + 2 * tile_b * K * f32          # double-buffered x tiles
              + 2 * tile_b * P_pad * f32      # double-buffered out tiles
              + 4 * tile_b * H_pad * f32      # live hidden activations / temps
              + (4 << 20))                    # headroom
    budget = max(budget, 16 << 20)
    return int(min(budget, max(16 << 20, vmem_cap - (8 << 20))))


# --------------------------------------------------------------------------- #
# One-time parameter preparation (pad lane axes to 128, cast weights to bf16).
# --------------------------------------------------------------------------- #
def prepare_params(params):
    """Pad + cast weights/biases once; reuse the result across forwards."""
    K, H = params["w1"].shape
    P = params["w4"].shape[1]
    H_pad = _round_up(H, 128)
    P_pad = _round_up(P, 128)
    prepped = {
        # Weights: bf16 for the MXU; K (layer-1 contraction dim) left unpadded.
        "w1": _pad2(params["w1"], K, H_pad, jnp.bfloat16),
        "w2": _pad2(params["w2"], H_pad, H_pad, jnp.bfloat16),
        "w3": _pad2(params["w3"], H_pad, H_pad, jnp.bfloat16),
        "w4": _pad2(params["w4"], H_pad, P_pad, jnp.bfloat16),
        # Biases stay f32 (the epilogue is f32).
        "b1": _pad2(params["b1"], 1, H_pad, jnp.float32),
        "b2": _pad2(params["b2"], 1, H_pad, jnp.float32),
        "b3": _pad2(params["b3"], 1, H_pad, jnp.float32),
        "b4": _pad2(params["b4"], 1, P_pad, jnp.float32),
    }
    dims = {"K": K, "H": H, "P": P, "H_pad": H_pad, "P_pad": P_pad}
    return prepped, dims


def _build_pallas_call(grid, tile_b, B_pad, K, H_pad, P_pad, vmem_bytes,
                       single_buffer_weights):
    def resident(shape):
        idx = lambda i: (0,) * len(shape)
        if single_buffer_weights:
            # Constant index_map -> never re-fetched; one buffer is enough.
            return pl.BlockSpec(shape, idx, pipeline_mode=pl.Buffered(1))
        return pl.BlockSpec(shape, idx)

    in_specs = [
        pl.BlockSpec((tile_b, K), lambda i: (i, 0)),          # x, tiled over batch
        resident((K, H_pad)), resident((1, H_pad)),            # fc1
        resident((H_pad, H_pad)), resident((1, H_pad)),        # fc2
        resident((H_pad, H_pad)), resident((1, H_pad)),        # fc3
        resident((H_pad, P_pad)), resident((1, P_pad)),        # fc_out
    ]
    out_specs = pl.BlockSpec((tile_b, P_pad), lambda i: (i, 0))  # lane-dense store

    return pl.pallas_call(
        mlp_kernel,
        out_shape=jax.ShapeDtypeStruct((B_pad, P_pad), jnp.float32),
        grid_spec=pltpu.PrefetchScalarGridSpec(
            num_scalar_prefetch=0,
            grid=grid,
            in_specs=in_specs,
            out_specs=out_specs,
        ),
        compiler_params=pltpu.CompilerParams(
            dimension_semantics=("parallel",),
            vmem_limit_bytes=vmem_bytes,
        ),
    )


def net_forward(x, prepped, dims, *, tile_b=None):
    """x: (B, K) float32.  prepped/dims: output of prepare_params().

    Returns (B, P) float32 matching the PyTorch forward (bf16 MXU matmuls with
    f32 accumulation -> ~1e-2-level deviation from a pure-f32 reference).
    """
    B, K = x.shape
    assert K == dims["K"], f"x feature dim {K} != fc1 in_features {dims['K']}"
    H_pad, P_pad, P = dims["H_pad"], dims["P_pad"], dims["P"]

    vmem_cap = _vmem_capacity_bytes()
    # NOTE: the all-weights-resident design assumes the four padded bf16 weight
    # matrices fit comfortably in VMEM.  For hidden sizes >= ~2-4K on v7x
    # (64 MiB VMEM) one would instead add a reduction grid axis over H with an
    # accumulator scratch; not needed for this model's hidden_size (500).
    if tile_b is None:
        tile_b = _pick_tile_b(B, K, H_pad, P_pad, vmem_cap)
    tile_b = max(8, (tile_b // 8) * 8)
    B_pad = _round_up(B, tile_b)
    grid = (B_pad // tile_b,)

    x_p = x.astype(jnp.float32)
    if B_pad != B:
        x_p = jnp.pad(x_p, ((0, B_pad - B), (0, 0)))

    args = (x_p,
            prepped["w1"], prepped["b1"], prepped["w2"], prepped["b2"],
            prepped["w3"], prepped["b3"], prepped["w4"], prepped["b4"])

    try:
        vmem_bytes = _vmem_limit_bytes(tile_b, K, H_pad, P_pad, vmem_cap,
                                       weight_buffers=1)
        out_padded = _build_pallas_call(grid, tile_b, B_pad, K, H_pad, P_pad,
                                        vmem_bytes, True)(*args)
    except Exception:
        # Fallback: if this JAX build rejects pl.Buffered(1), use the default
        # double-buffered resident blocks (VMEM-footprint only, same math).
        vmem_bytes = _vmem_limit_bytes(tile_b, K, H_pad, P_pad, vmem_cap,
                                       weight_buffers=2)
        out_padded = _build_pallas_call(grid, tile_b, B_pad, K, H_pad, P_pad,
                                        vmem_bytes, False)(*args)

    return out_padded[:B, :P]


def init_params(key, K, hidden, p):
    """Deterministic init mimicking nn.Linear default: U(-1/sqrt(fan_in), +...)."""
    def linear(key, fan_in, fan_out):
        kw, kb = jax.random.split(key)
        bound = 1.0 / jnp.sqrt(fan_in)
        w = jax.random.uniform(kw, (fan_in, fan_out), jnp.float32, -bound, bound)
        b = jax.random.uniform(kb, (1, fan_out), jnp.float32, -bound, bound)
        return w, b

    k1, k2, k3, k4 = jax.random.split(key, 4)
    w1, b1 = linear(k1, K, hidden)
    w2, b2 = linear(k2, hidden, hidden)
    w3, b3 = linear(k3, hidden, hidden)
    w4, b4 = linear(k4, hidden, p)
    return dict(w1=w1, b1=b1, w2=w2, b2=b2, w3=w3, b3=b3, w4=w4, b4=b4)


if __name__ == "__main__":
    # Shapes consistent with the module (K events -> hidden x3 -> p covariates),
    # kept small but with enough batch rows that multi-TC chips get >= 2 tiles.
    B, K, hidden, p = 512, 16, 256, 8

    key = jax.random.PRNGKey(0)
    kx, kp = jax.random.split(key)
    x = jax.random.normal(kx, (B, K), dtype=jnp.float32)
    params = init_params(kp, K, hidden, p)

    # Pad + cast weights once (cached), then run the kernel.
    prepped, dims = prepare_params(params)
    out = net_forward(x, prepped, dims)
    out = jax.block_until_ready(out)

    # Reference check in plain JAX (f32 math); tolerance loosened for the bf16
    # MXU path (f32 accumulation keeps the error at the ~1% level).
    def ref(x, pr):
        h = jnp.maximum(x @ pr["w1"] + pr["b1"], 0.0)
        h = jnp.maximum(h @ pr["w2"] + pr["b2"], 0.0)
        h = jnp.maximum(h @ pr["w3"] + pr["b3"], 0.0)
        return h @ pr["w4"] + pr["b4"]

    expected = ref(x, params)
    assert out.shape == (B, p)
    max_err = float(jnp.max(jnp.abs(out - expected)))
    assert jnp.allclose(out, expected, atol=5e-2, rtol=5e-2), max_err

    print("KERNEL_OK")
</pallas_src>

<mosaic_0001>
module attributes {stable_mosaic.version = 11 : i64} {
  func.func @mlp_kernel(%arg0: i32, %arg1: memref<256x16xf32, #tpu.memory_space<vmem>>, %arg2: memref<16x256xbf16, #tpu.memory_space<vmem>>, %arg3: memref<1x256xf32, #tpu.memory_space<vmem>>, %arg4: memref<256x256xbf16, #tpu.memory_space<vmem>>, %arg5: memref<1x256xf32, #tpu.memory_space<vmem>>, %arg6: memref<256x256xbf16, #tpu.memory_space<vmem>>, %arg7: memref<1x256xf32, #tpu.memory_space<vmem>>, %arg8: memref<256x128xbf16, #tpu.memory_space<vmem>>, %arg9: memref<1x128xf32, #tpu.memory_space<vmem>>, %arg10: memref<256x128xf32, #tpu.memory_space<vmem>>) attributes {dimension_semantics = [#tpu.dimension_semantics<parallel>], iteration_bounds = array<i64: 2>, scalar_prefetch = 0 : i64, scratch_operands = 0 : i64, tpu.core_type = #tpu.core_type<tc>, window_params = [{transform_indices = @transform_0, window_bounds = array<i64: 256, 16>}, {pipeline_mode = #tpu.pipeline_mode<synchronous>, transform_indices = @transform_1, window_bounds = array<i64: 16, 256>}, {pipeline_mode = #tpu.pipeline_mode<synchronous>, transform_indices = @transform_2, window_bounds = array<i64: 1, 256>}, {pipeline_mode = #tpu.pipeline_mode<synchronous>, transform_indices = @transform_3, window_bounds = array<i64: 256, 256>}, {pipeline_mode = #tpu.pipeline_mode<synchronous>, transform_indices = @transform_4, window_bounds = array<i64: 1, 256>}, {pipeline_mode = #tpu.pipeline_mode<synchronous>, transform_indices = @transform_5, window_bounds = array<i64: 256, 256>}, {pipeline_mode = #tpu.pipeline_mode<synchronous>, transform_indices = @transform_6, window_bounds = array<i64: 1, 256>}, {pipeline_mode = #tpu.pipeline_mode<synchronous>, transform_indices = @transform_7, window_bounds = array<i64: 256, 128>}, {pipeline_mode = #tpu.pipeline_mode<synchronous>, transform_indices = @transform_8, window_bounds = array<i64: 1, 128>}, {transform_indices = @transform_9, window_bounds = array<i64: 256, 128>}]} {
    %c0 = arith.constant 0 : index
    %c0_0 = arith.constant 0 : index
    %0 = vector.load %arg1[%c0, %c0_0] : memref<256x16xf32, #tpu.memory_space<vmem>>, vector<256x16xf32>
    %1 = arith.truncf %0 : vector<256x16xf32> to vector<256x16xbf16>
    %c0_1 = arith.constant 0 : index
    %c0_2 = arith.constant 0 : index
    %2 = vector.load %arg2[%c0_1, %c0_2] : memref<16x256xbf16, #tpu.memory_space<vmem>>, vector<16x256xbf16>
    %cst = arith.constant dense<0.000000e+00> : vector<256x256xf32>
    %3 = tpu.matmul %1, %2, %cst {dimension_numbers = #tpu.dot_dimension_numbers<[1], [0], [0], [1], [0, 0, 1, 1], [], []>} : vector<256x16xbf16>, vector<16x256xbf16>, vector<256x256xf32> -> vector<256x256xf32>
    %c0_3 = arith.constant 0 : index
    %c0_4 = arith.constant 0 : index
    %4 = vector.load %arg3[%c0_3, %c0_4] : memref<1x256xf32, #tpu.memory_space<vmem>>, vector<1x256xf32>
    %5 = vector.broadcast %4 : vector<1x256xf32> to vector<256x256xf32>
    %6 = arith.addf %3, %5 : vector<256x256xf32>
    %cst_5 = arith.constant 0.000000e+00 : f32
    %7 = vector.broadcast %cst_5 : f32 to vector<256x256xf32>
    %8 = arith.maximumf %6, %7 : vector<256x256xf32>
    %9 = arith.truncf %8 : vector<256x256xf32> to vector<256x256xbf16>
    %c0_6 = arith.constant 0 : index
    %c0_7 = arith.constant 0 : index
    %10 = vector.load %arg4[%c0_6, %c0_7] : memref<256x256xbf16, #tpu.memory_space<vmem>>, vector<256x256xbf16>
    %cst_8 = arith.constant dense<0.000000e+00> : vector<256x256xf32>
    %11 = tpu.matmul %9, %10, %cst_8 {dimension_numbers = #tpu.dot_dimension_numbers<[1], [0], [0], [1], [0, 0, 1, 1], [], []>} : vector<256x256xbf16>, vector<256x256xbf16>, vector<256x256xf32> -> vector<256x256xf32>
    %c0_9 = arith.constant 0 : index
    %c0_10 = arith.constant 0 : index
    %12 = vector.load %arg5[%c0_9, %c0_10] : memref<1x256xf32, #tpu.memory_space<vmem>>, vector<1x256xf32>
    %13 = vector.broadcast %12 : vector<1x256xf32> to vector<256x256xf32>
    %14 = arith.addf %11, %13 : vector<256x256xf32>
    %cst_11 = arith.constant 0.000000e+00 : f32
    %15 = vector.broadcast %cst_11 : f32 to vector<256x256xf32>
    %16 = arith.maximumf %14, %15 : vector<256x256xf32>
    %17 = arith.truncf %16 : vector<256x256xf32> to vector<256x256xbf16>
    %c0_12 = arith.constant 0 : index
    %c0_13 = arith.constant 0 : index
    %18 = vector.load %arg6[%c0_12, %c0_13] : memref<256x256xbf16, #tpu.memory_space<vmem>>, vector<256x256xbf16>
    %cst_14 = arith.constant dense<0.000000e+00> : vector<256x256xf32>
    %19 = tpu.matmul %17, %18, %cst_14 {dimension_numbers = #tpu.dot_dimension_numbers<[1], [0], [0], [1], [0, 0, 1, 1], [], []>} : vector<256x256xbf16>, vector<256x256xbf16>, vector<256x256xf32> -> vector<256x256xf32>
    %c0_15 = arith.constant 0 : index
    %c0_16 = arith.constant 0 : index
    %20 = vector.load %arg7[%c0_15, %c0_16] : memref<1x256xf32, #tpu.memory_space<vmem>>, vector<1x256xf32>
    %21 = vector.broadcast %20 : vector<1x256xf32> to vector<256x256xf32>
    %22 = arith.addf %19, %21 : vector<256x256xf32>
    %cst_17 = arith.constant 0.000000e+00 : f32
    %23 = vector.broadcast %cst_17 : f32 to vector<256x256xf32>
    %24 = arith.maximumf %22, %23 : vector<256x256xf32>
    %25 = arith.truncf %24 : vector<256x256xf32> to vector<256x256xbf16>
    %c0_18 = arith.constant 0 : index
    %c0_19 = arith.constant 0 : index
    %26 = vector.load %arg8[%c0_18, %c0_19] : memref<256x128xbf16, #tpu.memory_space<vmem>>, vector<256x128xbf16>
    %cst_20 = arith.constant dense<0.000000e+00> : vector<256x128xf32>
    %27 = tpu.matmul %25, %26, %cst_20 {dimension_numbers = #tpu.dot_dimension_numbers<[1], [0], [0], [1], [0, 0, 1, 1], [], []>} : vector<256x256xbf16>, vector<256x128xbf16>, vector<256x128xf32> -> vector<256x128xf32>
    %c0_21 = arith.constant 0 : index
    %c0_22 = arith.constant 0 : index
    %28 = vector.load %arg9[%c0_21, %c0_22] : memref<1x128xf32, #tpu.memory_space<vmem>>, vector<1x128xf32>
    %29 = vector.broadcast %28 : vector<1x128xf32> to vector<256x128xf32>
    %30 = arith.addf %27, %29 : vector<256x128xf32>
    %c0_23 = arith.constant 0 : index
    %c0_24 = arith.constant 0 : index
    %31 = vector.load %arg10[%c0_23, %c0_24] : memref<256x128xf32, #tpu.memory_space<vmem>>, vector<256x128xf32>
    tpu.vector_store %arg10[%c0_23, %c0_24], %30 {strides = array<i32>} : memref<256x128xf32, #tpu.memory_space<vmem>>, vector<256x128xf32>,
    return
  }
  func.func @transform_0(%arg0: i32) -> (i32, i32) {
    %c0_i32 = arith.constant 0 : i32
    %c0_i32_0 = arith.constant 0 : i32
    return %arg0, %c0_i32 : i32, i32
  }
  func.func @transform_1(%arg0: i32) -> (i32, i32) {
    %c0_i32 = arith.constant 0 : i32
    %c0_i32_0 = arith.constant 0 : i32
    %c0_i32_1 = arith.constant 0 : i32
    return %c0_i32, %c0_i32_0 : i32, i32
  }
  func.func @transform_2(%arg0: i32) -> (i32, i32) {
    %c0_i32 = arith.constant 0 : i32
    %c0_i32_0 = arith.constant 0 : i32
    %c0_i32_1 = arith.constant 0 : i32
    return %c0_i32, %c0_i32_0 : i32, i32
  }
  func.func @transform_3(%arg0: i32) -> (i32, i32) {
    %c0_i32 = arith.constant 0 : i32
    %c0_i32_0 = arith.constant 0 : i32
    %c0_i32_1 = arith.constant 0 : i32
    return %c0_i32, %c0_i32_0 : i32, i32
  }
  func.func @transform_4(%arg0: i32) -> (i32, i32) {
    %c0_i32 = arith.constant 0 : i32
    %c0_i32_0 = arith.constant 0 : i32
    %c0_i32_1 = arith.constant 0 : i32
    return %c0_i32, %c0_i32_0 : i32, i32
  }
  func.func @transform_5(%arg0: i32) -> (i32, i32) {
    %c0_i32 = arith.constant 0 : i32
    %c0_i32_0 = arith.constant 0 : i32
    %c0_i32_1 = arith.constant 0 : i32
    return %c0_i32, %c0_i32_0 : i32, i32
  }
  func.func @transform_6(%arg0: i32) -> (i32, i32) {
    %c0_i32 = arith.constant 0 : i32
    %c0_i32_0 = arith.constant 0 : i32
    %c0_i32_1 = arith.constant 0 : i32
    return %c0_i32, %c0_i32_0 : i32, i32
  }
  func.func @transform_7(%arg0: i32) -> (i32, i32) {
    %c0_i32 = arith.constant 0 : i32
    %c0_i32_0 = arith.constant 0 : i32
    %c0_i32_1 = arith.constant 0 : i32
    return %c0_i32, %c0_i32_0 : i32, i32
  }
  func.func @transform_8(%arg0: i32) -> (i32, i32) {
    %c0_i32 = arith.constant 0 : i32
    %c0_i32_0 = arith.constant 0 : i32
    %c0_i32_1 = arith.constant 0 : i32
    return %c0_i32, %c0_i32_0 : i32, i32
  }
  func.func @transform_9(%arg0: i32) -> (i32, i32) {
    %c0_i32 = arith.constant 0 : i32
    %c0_i32_0 = arith.constant 0 : i32
    return %arg0, %c0_i32 : i32, i32
  }
}

module attributes {stable_mosaic.version = 11 : i64} {
  func.func @mlp_kernel(%arg0: i32, %arg1: memref<256x16xf32, #tpu.memory_space<vmem>>, %arg2: memref<16x256xbf16, #tpu.memory_space<vmem>>, %arg3: memref<1x256xf32, #tpu.memory_space<vmem>>, %arg4: memref<256x256xbf16, #tpu.memory_space<vmem>>, %arg5: memref<1x256xf32, #tpu.memory_space<vmem>>, %arg6: memref<256x256xbf16, #tpu.memory_space<vmem>>, %arg7: memref<1x256xf32, #tpu.memory_space<vmem>>, %arg8: memref<256x128xbf16, #tpu.memory_space<vmem>>, %arg9: memref<1x128xf32, #tpu.memory_space<vmem>>, %arg10: memref<256x128xf32, #tpu.memory_space<vmem>>) attributes {dimension_semantics = [#tpu.dimension_semantics<parallel>], iteration_bounds = array<i64: 2>, scalar_prefetch = 0 : i64, scratch_operands = 0 : i64, tpu.core_type = #tpu.core_type<tc>, window_params = [{transform_indices = @transform_0, window_bounds = array<i64: 256, 16>}, {pipeline_mode = #tpu.pipeline_mode<synchronous>, transform_indices = @transform_1, window_bounds = array<i64: 16, 256>}, {pipeline_mode = #tpu.pipeline_mode<synchronous>, transform_indices = @transform_2, window_bounds = array<i64: 1, 256>}, {pipeline_mode = #tpu.pipeline_mode<synchronous>, transform_indices = @transform_3, window_bounds = array<i64: 256, 256>}, {pipeline_mode = #tpu.pipeline_mode<synchronous>, transform_indices = @transform_4, window_bounds = array<i64: 1, 256>}, {pipeline_mode = #tpu.pipeline_mode<synchronous>, transform_indices = @transform_5, window_bounds = array<i64: 256, 256>}, {pipeline_mode = #tpu.pipeline_mode<synchronous>, transform_indices = @transform_6, window_bounds = array<i64: 1, 256>}, {pipeline_mode = #tpu.pipeline_mode<synchronous>, transform_indices = @transform_7, window_bounds = array<i64: 256, 128>}, {pipeline_mode = #tpu.pipeline_mode<synchronous>, transform_indices = @transform_8, window_bounds = array<i64: 1, 128>}, {transform_indices = @transform_9, window_bounds = array<i64: 256, 128>}]} {
    %c0 = arith.constant 0 : index
    %c0_0 = arith.constant 0 : index
    %0 = vector.load %arg1[%c0, %c0_0] : memref<256x16xf32, #tpu.memory_space<vmem>>, vector<256x16xf32>
    %1 = arith.truncf %0 : vector<256x16xf32> to vector<256x16xbf16>
    %c0_1 = arith.constant 0 : index
    %c0_2 = arith.constant 0 : index
    %2 = vector.load %arg2[%c0_1, %c0_2] : memref<16x256xbf16, #tpu.memory_space<vmem>>, vector<16x256xbf16>
    %cst = arith.constant dense<0.000000e+00> : vector<256x256xf32>
    %3 = tpu.matmul %1, %2, %cst {dimension_numbers = #tpu.dot_dimension_numbers<[1], [0], [0], [1], [0, 0, 1, 1], [], []>} : vector<256x16xbf16>, vector<16x256xbf16>, vector<256x256xf32> -> vector<256x256xf32>
    %c0_3 = arith.constant 0 : index
    %c0_4 = arith.constant 0 : index
    %4 = vector.load %arg3[%c0_3, %c0_4] : memref<1x256xf32, #tpu.memory_space<vmem>>, vector<1x256xf32>
    %5 = vector.broadcast %4 : vector<1x256xf32> to vector<256x256xf32>
    %6 = arith.addf %3, %5 : vector<256x256xf32>
    %cst_5 = arith.constant 0.000000e+00 : f32
    %7 = vector.broadcast %cst_5 : f32 to vector<256x256xf32>
    %8 = arith.maximumf %6, %7 : vector<256x256xf32>
    %9 = arith.truncf %8 : vector<256x256xf32> to vector<256x256xbf16>
    %c0_6 = arith.constant 0 : index
    %c0_7 = arith.constant 0 : index
    %10 = vector.load %arg4[%c0_6, %c0_7] : memref<256x256xbf16, #tpu.memory_space<vmem>>, vector<256x256xbf16>
    %cst_8 = arith.constant dense<0.000000e+00> : vector<256x256xf32>
    %11 = tpu.matmul %9, %10, %cst_8 {dimension_numbers = #tpu.dot_dimension_numbers<[1], [0], [0], [1], [0, 0, 1, 1], [], []>} : vector<256x256xbf16>, vector<256x256xbf16>, vector<256x256xf32> -> vector<256x256xf32>
    %c0_9 = arith.constant 0 : index
    %c0_10 = arith.constant 0 : index
    %12 = vector.load %arg5[%c0_9, %c0_10] : memref<1x256xf32, #tpu.memory_space<vmem>>, vector<1x256xf32>
    %13 = vector.broadcast %12 : vector<1x256xf32> to vector<256x256xf32>
    %14 = arith.addf %11, %13 : vector<256x256xf32>
    %cst_11 = arith.constant 0.000000e+00 : f32
    %15 = vector.broadcast %cst_11 : f32 to vector<256x256xf32>
    %16 = arith.maximumf %14, %15 : vector<256x256xf32>
    %17 = arith.truncf %16 : vector<256x256xf32> to vector<256x256xbf16>
    %c0_12 = arith.constant 0 : index
    %c0_13 = arith.constant 0 : index
    %18 = vector.load %arg6[%c0_12, %c0_13] : memref<256x256xbf16, #tpu.memory_space<vmem>>, vector<256x256xbf16>
    %cst_14 = arith.constant dense<0.000000e+00> : vector<256x256xf32>
    %19 = tpu.matmul %17, %18, %cst_14 {dimension_numbers = #tpu.dot_dimension_numbers<[1], [0], [0], [1], [0, 0, 1, 1], [], []>} : vector<256x256xbf16>, vector<256x256xbf16>, vector<256x256xf32> -> vector<256x256xf32>
    %c0_15 = arith.constant 0 : index
    %c0_16 = arith.constant 0 : index
    %20 = vector.load %arg7[%c0_15, %c0_16] : memref<1x256xf32, #tpu.memory_space<vmem>>, vector<1x256xf32>
    %21 = vector.broadcast %20 : vector<1x256xf32> to vector<256x256xf32>
    %22 = arith.addf %19, %21 : vector<256x256xf32>
    %cst_17 = arith.constant 0.000000e+00 : f32
    %23 = vector.broadcast %cst_17 : f32 to vector<256x256xf32>
    %24 = arith.maximumf %22, %23 : vector<256x256xf32>
    %25 = arith.truncf %24 : vector<256x256xf32> to vector<256x256xbf16>
    %c0_18 = arith.constant 0 : index
    %c0_19 = arith.constant 0 : index
    %26 = vector.load %arg8[%c0_18, %c0_19] : memref<256x128xbf16, #tpu.memory_space<vmem>>, vector<256x128xbf16>
    %cst_20 = arith.constant dense<0.000000e+00> : vector<256x128xf32>
    %27 = tpu.matmul %25, %26, %cst_20 {dimension_numbers = #tpu.dot_dimension_numbers<[1], [0], [0], [1], [0, 0, 1, 1], [], []>} : vector<256x256xbf16>, vector<256x128xbf16>, vector<256x128xf32> -> vector<256x128xf32>
    %c0_21 = arith.constant 0 : index
    %c0_22 = arith.constant 0 : index
    %28 = vector.load %arg9[%c0_21, %c0_22] : memref<1x128xf32, #tpu.memory_space<vmem>>, vector<1x128xf32>
    %29 = vector.broadcast %28 : vector<1x128xf32> to vector<256x128xf32>
    %30 = arith.addf %27, %29 : vector<256x128xf32>
    %c0_23 = arith.constant 0 : index
    %c0_24 = arith.constant 0 : index
    %31 = vector.load %arg10[%c0_23, %c0_24] : memref<256x128xf32, #tpu.memory_space<vmem>>, vector<256x128xf32>
    tpu.vector_store %arg10[%c0_23, %c0_24], %30 {strides = array<i32>} : memref<256x128xf32, #tpu.memory_space<vmem>>, vector<256x128xf32>,
    return
  }
  func.func @transform_0(%arg0: i32) -> (i32, i32) {
    %c0_i32 = arith.constant 0 : i32
    %c0_i32_0 = arith.constant 0 : i32
    return %arg0, %c0_i32 : i32, i32
  }
  func.func @transform_1(%arg0: i32) -> (i32, i32) {
    %c0_i32 = arith.constant 0 : i32
    %c0_i32_0 = arith.constant 0 : i32
    %c0_i32_1 = arith.constant 0 : i32
    return %c0_i32, %c0_i32_0 : i32, i32
  }
  func.func @transform_2(%arg0: i32) -> (i32, i32) {
    %c0_i32 = arith.constant 0 : i32
    %c0_i32_0 = arith.constant 0 : i32
    %c0_i32_1 = arith.constant 0 : i32
    return %c0_i32, %c0_i32_0 : i32, i32
  }
  func.func @transform_3(%arg0: i32) -> (i32, i32) {
    %c0_i32 = arith.constant 0 : i32
    %c0_i32_0 = arith.constant 0 : i32
    %c0_i32_1 = arith.constant 0 : i32
    return %c0_i32, %c0_i32_0 : i32, i32
  }
  func.func @transform_4(%arg0: i32) -> (i32, i32) {
    %c0_i32 = arith.constant 0 : i32
    %c0_i32_0 = arith.constant 0 : i32
    %c0_i32_1 = arith.constant 0 : i32
    return %c0_i32, %c0_i32_0 : i32, i32
  }
  func.func @transform_5(%arg0: i32) -> (i32, i32) {
    %c0_i32 = arith.constant 0 : i32
    %c0_i32_0 = arith.constant 0 : i32
    %c0_i32_1 = arith.constant 0 : i32
    return %c0_i32, %c0_i32_0 : i32, i32
  }
  func.func @transform_6(%arg0: i32) -> (i32, i32) {
    %c0_i32 = arith.constant 0 : i32
    %c0_i32_0 = arith.constant 0 : i32
    %c0_i32_1 = arith.constant 0 : i32
    return %c0_i32, %c0_i32_0 : i32, i32
  }
  func.func @transform_7(%arg0: i32) -> (i32, i32) {
    %c0_i32 = arith.constant 0 : i32
    %c0_i32_0 = arith.constant 0 : i32
    %c0_i32_1 = arith.constant 0 : i32
    return %c0_i32, %c0_i32_0 : i32, i32
  }
  func.func @transform_8(%arg0: i32) -> (i32, i32) {
    %c0_i32 = arith.constant 0 : i32
    %c0_i32_0 = arith.constant 0 : i32
    %c0_i32_1 = arith.constant 0 : i32
    return %c0_i32, %c0_i32_0 : i32, i32
  }
  func.func @transform_9(%arg0: i32) -> (i32, i32) {
    %c0_i32 = arith.constant 0 : i32
    %c0_i32_0 = arith.constant 0 : i32
    return %arg0, %c0_i32 : i32, i32
  }
}

</mosaic_0001>

<llo_original>
// kernel: tpu_custom_call.1
$region0: #{tpu_custom_call.1}
  #allocation0 [shape = 'u32[]', space=smem, size = 0x4, offset = 0x4, fixed_abs, tag = 'smem constant byte address 0x4 - core index']
  #allocation1 [shape = 'u32[144,128]{1,0:T(1,128)}', space=vmem, size = 0x12000, scoped, tag = 'internal scratch']
  %s0 = inlined_call_operand.vmem [shape: f32[512,16], index: 0, kind: input, shape index: {}]
  %s1 = inlined_call_operand.vmem [shape: bf16[16,256], index: 1, kind: input, shape index: {}]
  %s2 = inlined_call_operand.vmem [shape: f32[1,256], index: 2, kind: input, shape index: {}]
  %s3 = inlined_call_operand.vmem [shape: bf16[256,256], index: 3, kind: input, shape index: {}]
  %s4 = inlined_call_operand.vmem [shape: f32[1,256], index: 4, kind: input, shape index: {}]
  %s5 = inlined_call_operand.vmem [shape: bf16[256,256], index: 5, kind: input, shape index: {}]
  %s6 = inlined_call_operand.vmem [shape: f32[1,256], index: 6, kind: input, shape index: {}]
  %s7 = inlined_call_operand.hbm [shape: bf16[256,128], index: 7, kind: input, shape index: {}]
  %s8 = inlined_call_operand.vmem [shape: f32[1,128], index: 8, kind: input, shape index: {}]
  %s9 = inlined_call_operand.hbm [shape: f32[512,128], index: 9, kind: output, shape index: {}]
  %s10 = sld [smem:[#allocation0]]
  $region73: #{tpu_custom_call.1} parent=0
    _
  %s12 = ssub.s32 1, %s10
  %s13 = scalar_select 0, %s12, %s10
  $region1: #{tpu_custom_call.1} parent=0
    #allocation2 [shape = 'u8[65536]{0}', space=vmem, size = 0x10000, scoped, tag = 'input window, operand 7, single buffered']
    #allocation3 [shape = 's32[2]{0}', space=sflag, size = 0x8, scoped, tag = 'scoped memory for tpu_custom_call.1']
    #allocation4 [shape = 's32[2]{0}', space=sflag, size = 0x8, scoped, tag = 'scoped memory for tpu_custom_call.1']
    #allocation5 [shape = 'u8[262144]{0}', space=vmem, size = 0x40000, scoped, tag = 'output window, operand 0']
    %14 = vsyncpa [#allocation3], 0
    %15 = vsyncpa [#allocation4], 0
    %s16 = scalar_lea.sflag [#allocation4], 1
    %17 = vsyncpa %s16, 0
    loop: start=0, step=1, limit=4
    $region2: #{tpu_custom_call.1} parent=1 // loop_pre_header
      _
    $region3: #{tpu_custom_call.1} parent=1 // loop_header
      %s19 = sphi 0, %s23
      %p20 = scmp.ge.s32.totalorder %s19, 4
      %s29 = sphi 0, %s31
      %s32 = sphi 0, %s29
      %s33 = sphi 0, %s32
      %s49 = sphi 0, %s33
      %s53 = sphi 0, %s53
      %s55 = sphi 0, %s53
      %s56 = sphi 0, %s55
      %s70 = sphi 0, %s56
      %s74 = sphi 0, %s74
      %s76 = sphi 0, %s74
      %s77 = sphi 0, %s76
      %s91 = sphi 0, %s77
      %s95 = sphi 0, %s95
      %s97 = sphi 0, %s95
      %s98 = sphi 0, %s97
      %s112 = sphi 0, %s98
      %s116 = sphi 0, %s116
      %s118 = sphi 0, %s116
      %s119 = sphi 0, %s118
      %s133 = sphi 0, %s119
      %s137 = sphi 0, %s137
      %s139 = sphi 0, %s137
      %s140 = sphi 0, %s139
      %s154 = sphi 0, %s140
      %s158 = sphi 0, %s158
      %s160 = sphi 0, %s158
      %s161 = sphi 0, %s160
      %s175 = sphi 0, %s161
      %s179 = sphi 0, %s179
      %s181 = sphi 0, %s179
      %s182 = sphi 0, %s181
      %s196 = sphi 0, %s182
      %s200 = sphi 0, %s200
      %s202 = sphi 0, %s200
      %s203 = sphi 0, %s202
      %s217 = sphi 0, %s203
      %s223 = sphi 0, %s225
      %s226 = sphi 0, %s223
      %s227 = sphi 0, %s226
      %s243 = sphi 0, %s227
    $region4: #{tpu_custom_call.1} parent=1 // loop_header_branch
      %22 = sbr.rel (%p20) target = $region8
    $region5: #{tpu_custom_call.1} parent=1 // loop_body
      %s24 = ssub.s32 %s19, 1
      %s25 = ssub.s32 %s19, 2
      %s26 = sadd.s32 %s19, 1
      %s27 = ssub.s32 %s19, %s26
      %p28 = scmp.eq.s32.totalorder %s27, 0
      %s30 = sadd.s32 %s29, 1
      %s31 = scalar_select %p28, %s29, %s30
      %p34 = pneg %p28
      %p35 = scmp.eq.s32.totalorder %s19, 1
      %p36 = por %p34, %p35
      %p37 = scmp.ne.s32.totalorder %s29, %s32
      %p38 = scmp.eq.s32.totalorder %s19, 0
      %p39 = por %p37, %p38
      %p40 = scmp.ne.s32.totalorder %s29, %s32
      %p41 = scmp.eq.s32.totalorder %s24, 1
      %p42 = por %p40, %p41
      %p43 = scmp.ne.s32.totalorder %s32, %s33
      %p44 = scmp.eq.s32.totalorder %s24, 0
      %p45 = por %p43, %p44
      %p46 = scmp.ne.s32.totalorder %s32, %s33
      %p47 = scmp.eq.s32.totalorder %s25, 1
      %p48 = por %p46, %p47
      %p50 = scmp.ne.s32.totalorder %s33, %s49
      %p51 = scmp.eq.s32.totalorder %s25, 0
      %p52 = por %p50, %p51
      %s54 = sadd.s32 %s53, 1
      %p57 = scmp.eq.s32.totalorder %s19, 1
      %p58 = scmp.ne.s32.totalorder %s53, %s55
      %p59 = scmp.eq.s32.totalorder %s19, 0
      %p60 = por %p58, %p59
      %p61 = scmp.ne.s32.totalorder %s53, %s55
      %p62 = scmp.eq.s32.totalorder %s24, 1
      %p63 = por %p61, %p62
      %p64 = scmp.ne.s32.totalorder %s55, %s56
      %p65 = scmp.eq.s32.totalorder %s24, 0
      %p66 = por %p64, %p65
      %p67 = scmp.ne.s32.totalorder %s55, %s56
      %p68 = scmp.eq.s32.totalorder %s25, 1
      %p69 = por %p67, %p68
      %p71 = scmp.ne.s32.totalorder %s56, %s70
      %p72 = scmp.eq.s32.totalorder %s25, 0
      %p73 = por %p71, %p72
      %s75 = sadd.s32 %s74, 1
      %p78 = scmp.eq.s32.totalorder %s19, 1
      %p79 = scmp.ne.s32.totalorder %s74, %s76
      %p80 = scmp.eq.s32.totalorder %s19, 0
      %p81 = por %p79, %p80
      %p82 = scmp.ne.s32.totalorder %s74, %s76
      %p83 = scmp.eq.s32.totalorder %s24, 1
      %p84 = por %p82, %p83
      %p85 = scmp.ne.s32.totalorder %s76, %s77
      %p86 = scmp.eq.s32.totalorder %s24, 0
      %p87 = por %p85, %p86
      %p88 = scmp.ne.s32.totalorder %s76, %s77
      %p89 = scmp.eq.s32.totalorder %s25, 1
      %p90 = por %p88, %p89
      %p92 = scmp.ne.s32.totalorder %s77, %s91
      %p93 = scmp.eq.s32.totalorder %s25, 0
      %p94 = por %p92, %p93
      %s96 = sadd.s32 %s95, 1
      %p99 = scmp.eq.s32.totalorder %s19, 1
      %p100 = scmp.ne.s32.totalorder %s95, %s97
      %p101 = scmp.eq.s32.totalorder %s19, 0
      %p102 = por %p100, %p101
      %p103 = scmp.ne.s32.totalorder %s95, %s97
      %p104 = scmp.eq.s32.totalorder %s24, 1
      %p105 = por %p103, %p104
      %p106 = scmp.ne.s32.totalorder %s97, %s98
      %p107 = scmp.eq.s32.totalorder %s24, 0
      %p108 = por %p106, %p107
      %p109 = scmp.ne.s32.totalorder %s97, %s98
      %p110 = scmp.eq.s32.totalorder %s25, 1
      %p111 = por %p109, %p110
      %p113 = scmp.ne.s32.totalorder %s98, %s112
      %p114 = scmp.eq.s32.totalorder %s25, 0
      %p115 = por %p113, %p114
      %s117 = sadd.s32 %s116, 1
      %p120 = scmp.eq.s32.totalorder %s19, 1
      %p121 = scmp.ne.s32.totalorder %s116, %s118
      %p122 = scmp.eq.s32.totalorder %s19, 0
      %p123 = por %p121, %p122
      %p124 = scmp.ne.s32.totalorder %s116, %s118
      %p125 = scmp.eq.s32.totalorder %s24, 1
      %p126 = por %p124, %p125
      %p127 = scmp.ne.s32.totalorder %s118, %s119
      %p128 = scmp.eq.s32.totalorder %s24, 0
      %p129 = por %p127, %p128
      %p130 = scmp.ne.s32.totalorder %s118, %s119
      %p131 = scmp.eq.s32.totalorder %s25, 1
      %p132 = por %p130, %p131
      %p134 = scmp.ne.s32.totalorder %s119, %s133
      %p135 = scmp.eq.s32.totalorder %s25, 0
      %p136 = por %p134, %p135
      %s138 = sadd.s32 %s137, 1
      %p141 = scmp.eq.s32.totalorder %s19, 1
      %p142 = scmp.ne.s32.totalorder %s137, %s139
      %p143 = scmp.eq.s32.totalorder %s19, 0
      %p144 = por %p142, %p143
      %p145 = scmp.ne.s32.totalorder %s137, %s139
      %p146 = scmp.eq.s32.totalorder %s24, 1
      %p147 = por %p145, %p146
      %p148 = scmp.ne.s32.totalorder %s139, %s140
      %p149 = scmp.eq.s32.totalorder %s24, 0
      %p150 = por %p148, %p149
      %p151 = scmp.ne.s32.totalorder %s139, %s140
      %p152 = scmp.eq.s32.totalorder %s25, 1
      %p153 = por %p151, %p152
      %p155 = scmp.ne.s32.totalorder %s140, %s154
      %p156 = scmp.eq.s32.totalorder %s25, 0
      %p157 = por %p155, %p156
      %s159 = sadd.s32 %s158, 1
      %p162 = scmp.eq.s32.totalorder %s19, 1
      %p163 = scmp.ne.s32.totalorder %s158, %s160
      %p164 = scmp.eq.s32.totalorder %s19, 0
      %p165 = por %p163, %p164
      %p166 = scmp.ne.s32.totalorder %s158, %s160
      %p167 = scmp.eq.s32.totalorder %s24, 1
      %p168 = por %p166, %p167
      %p169 = scmp.ne.s32.totalorder %s160, %s161
      %p170 = scmp.eq.s32.totalorder %s24, 0
      %p171 = por %p169, %p170
      %p172 = scmp.ne.s32.totalorder %s160, %s161
      %p173 = scmp.eq.s32.totalorder %s25, 1
      %p174 = por %p172, %p173
      %p176 = scmp.ne.s32.totalorder %s161, %s175
      %p177 = scmp.eq.s32.totalorder %s25, 0
      %p178 = por %p176, %p177
      %s180 = sadd.s32 %s179, 1
      %p183 = scmp.eq.s32.totalorder %s19, 1
      %p184 = scmp.ne.s32.totalorder %s179, %s181
      %p185 = scmp.eq.s32.totalorder %s19, 0
      %p186 = por %p184, %p185
      %p187 = scmp.ne.s32.totalorder %s179, %s181
      %p188 = scmp.eq.s32.totalorder %s24, 1
      %p189 = por %p187, %p188
      %p190 = scmp.ne.s32.totalorder %s181, %s182
      %p191 = scmp.eq.s32.totalorder %s24, 0
      %p192 = por %p190, %p191
      %p193 = scmp.ne.s32.totalorder %s181, %s182
      %p194 = scmp.eq.s32.totalorder %s25, 1
      %p195 = por %p193, %p194
      %p197 = scmp.ne.s32.totalorder %s182, %s196
      %p198 = scmp.eq.s32.totalorder %s25, 0
      %p199 = por %p197, %p198
      %s201 = sadd.s32 %s200, 1
      %p204 = scmp.eq.s32.totalorder %s19, 1
      %p205 = scmp.ne.s32.totalorder %s200, %s202
      %p206 = scmp.eq.s32.totalorder %s19, 0
      %p207 = por %p205, %p206
      %p208 = scmp.ne.s32.totalorder %s200, %s202
      %p209 = scmp.eq.s32.totalorder %s24, 1
      %p210 = por %p208, %p209
      %p211 = scmp.ne.s32.totalorder %s202, %s203
      %p212 = scmp.eq.s32.totalorder %s24, 0
      %p213 = por %p211, %p212
      %p214 = scmp.ne.s32.totalorder %s202, %s203
      %p215 = scmp.eq.s32.totalorder %s25, 1
      %p216 = por %p214, %p215
      %p218 = scmp.ne.s32.totalorder %s203, %s217
      %p219 = scmp.eq.s32.totalorder %s25, 0
      %p220 = por %p218, %p219
      %s221 = ssub.s32 %s19, %s26
      %p222 = scmp.eq.s32.totalorder %s221, 0
      %s224 = sadd.s32 %s223, 1
      %s225 = scalar_select %p222, %s223, %s224
      %p228 = pneg %p222
      %p229 = scmp.eq.s32.totalorder %s19, 1
      %p230 = por %p228, %p229
      %p231 = scmp.ne.s32.totalorder %s223, %s226
      %p232 = scmp.eq.s32.totalorder %s19, 0
      %p233 = por %p231, %p232
      %p234 = scmp.ne.s32.totalorder %s223, %s226
      %p235 = scmp.eq.s32.totalorder %s24, 1
      %p236 = por %p234, %p235
      %p237 = scmp.ne.s32.totalorder %s226, %s227
      %p238 = scmp.eq.s32.totalorder %s24, 0
      %p239 = por %p237, %p238
      %p240 = scmp.ne.s32.totalorder %s226, %s227
      %p241 = scmp.eq.s32.totalorder %s25, 1
      %p242 = por %p240, %p241
      %p244 = scmp.ne.s32.totalorder %s227, %s243
      %p245 = scmp.eq.s32.totalorder %s25, 0
      %p246 = por %p244, %p245
      %p247 = scmp.le.s32.totalorder 1, %s19
      %p248 = scmp.lt.s32.totalorder %s19, 3
      %p249 = pnand %p247, %p248
      %p250 = pneg %p249
      // Predicated region
      $region9: #{tpu_custom_call.1} parent=5 // pred_check
        _
      $region10: #{tpu_custom_call.1} parent=5 // pred_check_branch
        %252 = sbr.rel (%p249) target = $region12
      $region11: #{tpu_custom_call.1} parent=5 // pred_region
        %s253 = ssub.s32 %s19, 1
        // Predicated region
        $region13: #{tpu_custom_call.1} parent=11 // pred_check
          %p254 = pneg %p66
        $region14: #{tpu_custom_call.1} parent=11 // pred_check_branch
          %256 = sbr.rel (%p254) target = $region16
        $region15: #{tpu_custom_call.1} parent=11 // pred_region
          _
        $region16: #{tpu_custom_call.1} parent=11 // pred_fallthru
          _
        // Predicated region
        $region17: #{tpu_custom_call.1} parent=11 // pred_check
          %p257 = pneg %p87
        $region18: #{tpu_custom_call.1} parent=11 // pred_check_branch
          %259 = sbr.rel (%p257) target = $region20
        $region19: #{tpu_custom_call.1} parent=11 // pred_region
          _
        $region20: #{tpu_custom_call.1} parent=11 // pred_fallthru
          _
        // Predicated region
        $region21: #{tpu_custom_call.1} parent=11 // pred_check
          %p260 = pneg %p108
        $region22: #{tpu_custom_call.1} parent=11 // pred_check_branch
          %262 = sbr.rel (%p260) target = $region24
        $region23: #{tpu_custom_call.1} parent=11 // pred_region
          _
        $region24: #{tpu_custom_call.1} parent=11 // pred_fallthru
          _
        // Predicated region
        $region25: #{tpu_custom_call.1} parent=11 // pred_check
          %p263 = pneg %p129
        $region26: #{tpu_custom_call.1} parent=11 // pred_check_branch
          %265 = sbr.rel (%p263) target = $region28
        $region27: #{tpu_custom_call.1} parent=11 // pred_region
          _
        $region28: #{tpu_custom_call.1} parent=11 // pred_fallthru
          _
        // Predicated region
        $region29: #{tpu_custom_call.1} parent=11 // pred_check
          %p266 = pneg %p150
        $region30: #{tpu_custom_call.1} parent=11 // pred_check_branch
          %268 = sbr.rel (%p266) target = $region32
        $region31: #{tpu_custom_call.1} parent=11 // pred_region
          _
        $region32: #{tpu_custom_call.1} parent=11 // pred_fallthru
          _
        // Predicated region
        $region33: #{tpu_custom_call.1} parent=11 // pred_check
          %p269 = pneg %p171
        $region34: #{tpu_custom_call.1} parent=11 // pred_check_branch
          %271 = sbr.rel (%p269) target = $region36
        $region35: #{tpu_custom_call.1} parent=11 // pred_region
          _
        $region36: #{tpu_custom_call.1} parent=11 // pred_fallthru
          _
        // Predicated region
        $region37: #{tpu_custom_call.1} parent=11 // pred_check
          %p272 = pneg %p192
        $region38: #{tpu_custom_call.1} parent=11 // pred_check_branch
          %274 = sbr.rel (%p272) target = $region40
        $region39: #{tpu_custom_call.1} parent=11 // pred_region
          %s276 = ssub.s32 2048, 2048
          %277 = vsyncadd [#allocation3], %s276
          %s278 = sshll.u32 [#allocation2], 4
          %s279 = int_to_ptr.vmem [resolvable:$true] %s278
          %284 = dma.hbm_to_vmem [thread:$0]  %s7, 2048, %s279, [#allocation3], 64, 64, 4
        $region40: #{tpu_custom_call.1} parent=11 // pred_fallthru
          _
        // Predicated region
        $region41: #{tpu_custom_call.1} parent=11 // pred_check
          %p285 = pneg %p213
        $region42: #{tpu_custom_call.1} parent=11 // pred_check_branch
          %287 = sbr.rel (%p285) target = $region44
        $region43: #{tpu_custom_call.1} parent=11 // pred_region
          _
        $region44: #{tpu_custom_call.1} parent=11 // pred_fallthru
          _
      $region12: #{tpu_custom_call.1} parent=5 // pred_fallthru
        _
      %p288 = scmp.lt.s32.totalorder %s19, 2
      // Predicated region
      $region45: #{tpu_custom_call.1} parent=5 // pred_check
        %p289 = pneg %p288
      $region46: #{tpu_custom_call.1} parent=5 // pred_check_branch
        %291 = sbr.rel (%p289) target = $region48
      $region47: #{tpu_custom_call.1} parent=5 // pred_region
        // Predicated region
        $region49: #{tpu_custom_call.1} parent=47 // pred_check
          %p292 = pneg %p39
        $region50: #{tpu_custom_call.1} parent=47 // pred_check_branch
          %294 = sbr.rel (%p292) target = $region52
        $region51: #{tpu_custom_call.1} parent=47 // pred_region
          %s295 = smul.u32 32, %s19
          %p296 = scmp.lt.s32.totalorder %s295, 63
          %s297 = scalar_select %p296, %s295, 63
          %s298 = smul.addr %s297, 8
          %s299 = scalar_lea.vmem %s0, %s298
          %s300 = smul.u32 32, %s19
        $region52: #{tpu_custom_call.1} parent=47 // pred_fallthru
          _
      $region48: #{tpu_custom_call.1} parent=5 // pred_fallthru
        _
      %p301 = scmp.le.s32.totalorder 1, %s19
      %p302 = scmp.lt.s32.totalorder %s19, 3
      %p303 = pnand %p301, %p302
      %p304 = pneg %p303
      // Predicated region
      $region53: #{tpu_custom_call.1} parent=5 // pred_check
        _
      $region54: #{tpu_custom_call.1} parent=5 // pred_check_branch
        %306 = sbr.rel (%p303) target = $region56
      $region55: #{tpu_custom_call.1} parent=5 // pred_region
        %s307 = ssub.s32 %s19, 1
        // Predicated region
        $region57: #{tpu_custom_call.1} parent=55 // pred_check
          %p308 = pneg %p192
        $region58: #{tpu_custom_call.1} parent=55 // pred_check_branch
          %310 = sbr.rel (%p308) target = $region60
        $region59: #{tpu_custom_call.1} parent=55 // pred_region
          %311 = dma.done [#allocation3], 2048
        $region60: #{tpu_custom_call.1} parent=55 // pred_fallthru
          _
        %s312 = smul.u32 32, %s24
        %p313 = scmp.lt.s32.totalorder %s312, 63
        %s314 = scalar_select %p313, %s312, 63
        %s315 = smul.addr %s314, 8
        %s316 = scalar_lea.vmem %s0, %s315
        %p317 = pneg %p45
        %p318 = pneg %p42
        %p319 = pneg %p66
        %p320 = pneg %p63
        %p321 = pneg %p87
        %p322 = pneg %p84
        %p323 = pneg %p108
        %p324 = pneg %p105
        %p325 = pneg %p129
        %p326 = pneg %p126
        %p327 = pneg %p150
        %p328 = pneg %p147
        %p329 = pneg %p171
        %p330 = pneg %p168
        %p331 = pneg %p192
        %p332 = pneg %p189
        %p333 = pneg %p213
        %p334 = pneg %p210
        %p335 = pneg %p239
        %p336 = pneg %p236
        %s337 = sand.u32 %s226, 1
        %s338 = scalar_lea.sflag [#allocation4], %s337
        %s339 = sand.u32 %s226, 1
        %s340 = smul.addr %s339, 256
        %s341 = scalar_lea.vmem [#allocation5], %s340
        %s342 = smul.u32 32, %s24
        %p343 = scmp.lt.s32.totalorder %s342, 63
        %s344 = scalar_select %p343, %s342, 63
        %s345 = smul.addr %s344, 8
        %s346 = scalar_lea.vmem %s0, %s345
        %s347 = smul.u32 32, %s24
        %s348 = smul.u32 32, %s24
        %v350 = vld [vmem:[%s346] sm:$0xff]
        %v351 = vld [vmem:[%s346 + $0x8] sm:$0xff]
        %v352 = vld [vmem:[%s346 + $0x10] sm:$0xff]
        %v353 = vld [vmem:[%s346 + $0x18] sm:$0xff]
        %v354 = vld [vmem:[%s346 + $0x20] sm:$0xff]
        %v355 = vld [vmem:[%s346 + $0x28] sm:$0xff]
        %v356 = vld [vmem:[%s346 + $0x30] sm:$0xff]
        %v357 = vld [vmem:[%s346 + $0x38] sm:$0xff]
        %v358 = vld [vmem:[%s346 + $0x40] sm:$0xff]
        %v359 = vld [vmem:[%s346 + $0x48] sm:$0xff]
        %v360 = vld [vmem:[%s346 + $0x50] sm:$0xff]
        %v361 = vld [vmem:[%s346 + $0x58] sm:$0xff]
        %v362 = vld [vmem:[%s346 + $0x60] sm:$0xff]
        %v363 = vld [vmem:[%s346 + $0x68] sm:$0xff]
        %v364 = vld [vmem:[%s346 + $0x70] sm:$0xff]
        %v365 = vld [vmem:[%s346 + $0x78] sm:$0xff]
        %v366 = vld [vmem:[%s346 + $0x80] sm:$0xff]
        %v367 = vld [vmem:[%s346 + $0x88] sm:$0xff]
        %v368 = vld [vmem:[%s346 + $0x90] sm:$0xff]
        %v369 = vld [vmem:[%s346 + $0x98] sm:$0xff]
        %v370 = vld [vmem:[%s346 + $0xa0] sm:$0xff]
        %v371 = vld [vmem:[%s346 + $0xa8] sm:$0xff]
        %v372 = vld [vmem:[%s346 + $0xb0] sm:$0xff]
        %v373 = vld [vmem:[%s346 + $0xb8] sm:$0xff]
        %v374 = vld [vmem:[%s346 + $0xc0] sm:$0xff]
        %v375 = vld [vmem:[%s346 + $0xc8] sm:$0xff]
        %v376 = vld [vmem:[%s346 + $0xd0] sm:$0xff]
        %v377 = vld [vmem:[%s346 + $0xd8] sm:$0xff]
        %v378 = vld [vmem:[%s346 + $0xe0] sm:$0xff]
        %v379 = vld [vmem:[%s346 + $0xe8] sm:$0xff]
        %v380 = vld [vmem:[%s346 + $0xf0] sm:$0xff]
        %v381 = vld [vmem:[%s346 + $0xf8] sm:$0xff]
        %v382 = vpack.c.bf16 %v351, %v350
        %v383 = vpack.c.bf16 %v353, %v352
        %v384 = vpack.c.bf16 %v355, %v354
        %v385 = vpack.c.bf16 %v357, %v356
        %v386 = vpack.c.bf16 %v359, %v358
        %v387 = vpack.c.bf16 %v361, %v360
        %v388 = vpack.c.bf16 %v363, %v362
        %v389 = vpack.c.bf16 %v365, %v364
        %v390 = vpack.c.bf16 %v367, %v366
        %v391 = vpack.c.bf16 %v369, %v368
        %v392 = vpack.c.bf16 %v371, %v370
        %v393 = vpack.c.bf16 %v373, %v372
        %v394 = vpack.c.bf16 %v375, %v374
        %v395 = vpack.c.bf16 %v377, %v376
        %v396 = vpack.c.bf16 %v379, %v378
        %v397 = vpack.c.bf16 %v381, %v380
        %v398 = vld [vmem:[%s1] sm:$0xff]
        %v399 = vld [vmem:[%s1 + $0x8] sm:$0xff]
        %v400 = vld [vmem:[%s2] sm:$0x3]
        %v402 = vlaneseq
        %v403 = vshrl.u32 %v402, 7
        %v404 = vsub.s32 0, %v403
        %v405 = vrot.slane %v400, %v404
        %v406 = vlaneseq
        %v407 = vshrl.u32 %v406, 7
        %v408 = vsub.s32 1, %v407
        %v409 = vrot.slane %v400, %v408
        %v414 = vunpack.c.l.b16 %v398
        %v415 = vunpack.c.h.b16 %v398
        %v416 = vunpack.c.l.b16 %v399
        %v417 = vunpack.c.h.b16 %v399
        %v418 = vpack.c.b16 %v416, %v414
        %v419 = vpack.c.b16 %v417, %v415
        %vm422 = vcmask 130048
        %v424 = vsel %vm422, %v382, 0
        %v427 = vsel %vm422, %v383, 0
        %v430 = vsel %vm422, %v384, 0
        %v433 = vsel %vm422, %v385, 0
        %v436 = vsel %vm422, %v386, 0
        %v439 = vsel %vm422, %v387, 0
        %v442 = vsel %vm422, %v388, 0
        %v445 = vsel %vm422, %v389, 0
        %v448 = vsel %vm422, %v390, 0
        %v451 = vsel %vm422, %v391, 0
        %v454 = vsel %vm422, %v392, 0
        %v457 = vsel %vm422, %v393, 0
        %v460 = vsel %vm422, %v394, 0
        %v463 = vsel %vm422, %v395, 0
        %v466 = vsel %vm422, %v396, 0
        %v469 = vsel %vm422, %v397, 0
        %471 = vmatprep.subr.bf16.mxu0 0
        %472 = vmatpush1.bf16.msra.mxu0 0
        %473 = vmatprep.subr.bf16.mxu0 0
        %474 = vmatpush1.bf16.msra.mxu0 0
        %475 = vmatprep.subr.bf16.mxu0 0
        %476 = vmatpush1.bf16.msra.mxu0 0
        %477 = vmatprep.subr.bf16.mxu0 0
        %478 = vmatpush1.bf16.msra.mxu0 0
        %479 = vmatprep.subr.bf16.mxu0 0
        %480 = vmatpush1.bf16.msra.mxu0 0
        %481 = vmatprep.subr.bf16.mxu0 0
        %482 = vmatpush1.bf16.msra.mxu0 0
        %483 = vmatprep.subr.bf16.mxu0 0
        %484 = vmatpush1.bf16.msra.mxu0 0
        %485 = vmatprep.subr.bf16.mxu0 %v419
        %486 = vmatpush1.bf16.msra.mxu0 %v418
        %487 = vmatprep.subr.bf16.mxu0 0
        %488 = vmatpush2.bf16.msra.mxu0 0
        %489 = vmatprep.subr.bf16.mxu0 0
        %490 = vmatpush2.bf16.msra.mxu0 0
        %491 = vmatprep.subr.bf16.mxu0 0
        %492 = vmatpush2.bf16.msra.mxu0 0
        %493 = vmatprep.subr.bf16.mxu0 0
        %494 = vmatpush2.bf16.msra.mxu0 0
        %495 = vmatprep.subr.bf16.mxu0 0
        %496 = vmatpush2.bf16.msra.mxu0 0
        %497 = vmatprep.subr.bf16.mxu0 0
        %498 = vmatpush2.bf16.msra.mxu0 0
        %499 = vmatprep.subr.bf16.mxu0 0
        %500 = vmatpush2.bf16.msra.mxu0 0
        %501 = vmatprep.subr.bf16.mxu0 0
        %502 = vmatpush2.bf16.msra.mxu0 0
        %503 = vmatprep.mubr.bf16.mxu0 0
        %504 = vmatmul.mubr.bf16.gmra.mxu0 %v424
        %v505 = vpop.f32.mrf.mxu0
        %v506 = vadd.f32 %v405, %v505
        %v507 = vpop.f32.mrf.mxu0
        %v508 = vadd.f32 %v409, %v507
        %v509 = vpop.f32.mrf.mxu0
        %v510 = vadd.f32 %v405, %v509
        %v511 = vpop.f32.mrf.mxu0
        %v512 = vadd.f32 %v409, %v511
        %513 = vmatprep.mubr.bf16.mxu0 0
        %514 = vmatmul.mubr.bf16.gmra.mxu0 %v427
        %v515 = vpop.f32.mrf.mxu0
        %v516 = vadd.f32 %v405, %v515
        %v517 = vpop.f32.mrf.mxu0
        %v518 = vadd.f32 %v409, %v517
        %v519 = vpop.f32.mrf.mxu0
        %v520 = vadd.f32 %v405, %v519
        %v521 = vpop.f32.mrf.mxu0
        %v522 = vadd.f32 %v409, %v521
        %523 = vmatprep.mubr.bf16.mxu0 0
        %524 = vmatmul.mubr.bf16.gmra.mxu0 %v430
        %v525 = vpop.f32.mrf.mxu0
        %v526 = vadd.f32 %v405, %v525
        %v527 = vpop.f32.mrf.mxu0
        %v528 = vadd.f32 %v409, %v527
        %v529 = vpop.f32.mrf.mxu0
        %v530 = vadd.f32 %v405, %v529
        %v531 = vpop.f32.mrf.mxu0
        %v532 = vadd.f32 %v409, %v531
        %533 = vmatprep.mubr.bf16.mxu0 0
        %534 = vmatmul.mubr.bf16.gmra.mxu0 %v433
        %v535 = vpop.f32.mrf.mxu0
        %v536 = vadd.f32 %v405, %v535
        %v537 = vpop.f32.mrf.mxu0
        %v538 = vadd.f32 %v409, %v537
        %v539 = vpop.f32.mrf.mxu0
        %v540 = vadd.f32 %v405, %v539
        %v541 = vpop.f32.mrf.mxu0
        %v542 = vadd.f32 %v409, %v541
        %543 = vmatprep.mubr.bf16.mxu0 0
        %544 = vmatmul.mubr.bf16.gmra.mxu0 %v436
        %v545 = vpop.f32.mrf.mxu0
        %v546 = vadd.f32 %v405, %v545
        %v547 = vpop.f32.mrf.mxu0
        %v548 = vadd.f32 %v409, %v547
        %v549 = vpop.f32.mrf.mxu0
        %v550 = vadd.f32 %v405, %v549
        %v551 = vpop.f32.mrf.mxu0
        %v552 = vadd.f32 %v409, %v551
        %553 = vmatprep.mubr.bf16.mxu0 0
        %554 = vmatmul.mubr.bf16.gmra.mxu0 %v439
        %v555 = vpop.f32.mrf.mxu0
        %v556 = vadd.f32 %v405, %v555
        %v557 = vpop.f32.mrf.mxu0
        %v558 = vadd.f32 %v409, %v557
        %v559 = vpop.f32.mrf.mxu0
        %v560 = vadd.f32 %v405, %v559
        %v561 = vpop.f32.mrf.mxu0
        %v562 = vadd.f32 %v409, %v561
        %563 = vmatprep.mubr.bf16.mxu0 0
        %564 = vmatmul.mubr.bf16.gmra.mxu0 %v442
        %v565 = vpop.f32.mrf.mxu0
        %v566 = vadd.f32 %v405, %v565
        %v567 = vpop.f32.mrf.mxu0
        %v568 = vadd.f32 %v409, %v567
        %v569 = vpop.f32.mrf.mxu0
        %v570 = vadd.f32 %v405, %v569
        %v571 = vpop.f32.mrf.mxu0
        %v572 = vadd.f32 %v409, %v571
        %573 = vmatprep.mubr.bf16.mxu0 0
        %574 = vmatmul.mubr.bf16.gmra.mxu0 %v445
        %v575 = vpop.f32.mrf.mxu0
        %v576 = vadd.f32 %v405, %v575
        %v577 = vpop.f32.mrf.mxu0
        %v578 = vadd.f32 %v409, %v577
        %v579 = vpop.f32.mrf.mxu0
        %v580 = vadd.f32 %v405, %v579
        %v581 = vpop.f32.mrf.mxu0
        %v582 = vadd.f32 %v409, %v581
        %583 = vmatprep.mubr.bf16.mxu0 0
        %584 = vmatmul.mubr.bf16.gmra.mxu0 %v448
        %v585 = vpop.f32.mrf.mxu0
        %v586 = vadd.f32 %v405, %v585
        %v587 = vpop.f32.mrf.mxu0
        %v588 = vadd.f32 %v409, %v587
        %v589 = vpop.f32.mrf.mxu0
        %v590 = vadd.f32 %v405, %v589
        %v591 = vpop.f32.mrf.mxu0
        %v592 = vadd.f32 %v409, %v591
        %593 = vmatprep.mubr.bf16.mxu0 0
        %594 = vmatmul.mubr.bf16.gmra.mxu0 %v451
        %v595 = vpop.f32.mrf.mxu0
        %v596 = vadd.f32 %v405, %v595
        %v597 = vpop.f32.mrf.mxu0
        %v598 = vadd.f32 %v409, %v597
        %v599 = vpop.f32.mrf.mxu0
        %v600 = vadd.f32 %v405, %v599
        %v601 = vpop.f32.mrf.mxu0
        %v602 = vadd.f32 %v409, %v601
        %603 = vmatprep.mubr.bf16.mxu0 0
        %604 = vmatmul.mubr.bf16.gmra.mxu0 %v454
        %v605 = vpop.f32.mrf.mxu0
        %v606 = vadd.f32 %v405, %v605
        %v607 = vpop.f32.mrf.mxu0
        %v608 = vadd.f32 %v409, %v607
        %v609 = vpop.f32.mrf.mxu0
        %v610 = vadd.f32 %v405, %v609
        %v611 = vpop.f32.mrf.mxu0
        %v612 = vadd.f32 %v409, %v611
        %613 = vmatprep.mubr.bf16.mxu0 0
        %614 = vmatmul.mubr.bf16.gmra.mxu0 %v457
        %v615 = vpop.f32.mrf.mxu0
        %v616 = vadd.f32 %v405, %v615
        %v617 = vpop.f32.mrf.mxu0
        %v618 = vadd.f32 %v409, %v617
        %v619 = vpop.f32.mrf.mxu0
        %v620 = vadd.f32 %v405, %v619
        %v621 = vpop.f32.mrf.mxu0
        %v622 = vadd.f32 %v409, %v621
        %623 = vmatprep.mubr.bf16.mxu0 0
        %624 = vmatmul.mubr.bf16.gmra.mxu0 %v460
        %v625 = vpop.f32.mrf.mxu0
        %v626 = vadd.f32 %v405, %v625
        %v627 = vpop.f32.mrf.mxu0
        %v628 = vadd.f32 %v409, %v627
        %v629 = vpop.f32.mrf.mxu0
        %v630 = vadd.f32 %v405, %v629
        %v631 = vpop.f32.mrf.mxu0
        %v632 = vadd.f32 %v409, %v631
        %633 = vmatprep.mubr.bf16.mxu0 0
        %634 = vmatmul.mubr.bf16.gmra.mxu0 %v463
        %v635 = vpop.f32.mrf.mxu0
        %v636 = vadd.f32 %v405, %v635
        %v637 = vpop.f32.mrf.mxu0
        %v638 = vadd.f32 %v409, %v637
        %v639 = vpop.f32.mrf.mxu0
        %v640 = vadd.f32 %v405, %v639
        %v641 = vpop.f32.mrf.mxu0
        %v642 = vadd.f32 %v409, %v641
        %643 = vmatprep.mubr.bf16.mxu0 0
        %644 = vmatmul.mubr.bf16.gmra.mxu0 %v466
        %v645 = vpop.f32.mrf.mxu0
        %v646 = vadd.f32 %v405, %v645
        %v647 = vpop.f32.mrf.mxu0
        %v648 = vadd.f32 %v409, %v647
        %v649 = vpop.f32.mrf.mxu0
        %v650 = vadd.f32 %v405, %v649
        %v651 = vpop.f32.mrf.mxu0
        %v652 = vadd.f32 %v409, %v651
        %653 = vmatprep.mubr.bf16.mxu0 0
        %654 = vmatmul.mubr.bf16.gmra.mxu0 %v469
        %v655 = vpop.f32.mrf.mxu0
        %v656 = vadd.f32 %v405, %v655
        %v657 = vpop.f32.mrf.mxu0
        %v658 = vadd.f32 %v409, %v657
        %v659 = vpop.f32.mrf.mxu0
        %v660 = vadd.f32 %v405, %v659
        %v661 = vpop.f32.mrf.mxu0
        %v662 = vadd.f32 %v409, %v661
        %663 = vdwg.mxu0
        %v664 = vmax.f32 %v506, 0.0
        %v665 = vmax.f32 %v508, 0.0
        %v666 = vmax.f32 %v510, 0.0
        %v667 = vmax.f32 %v512, 0.0
        %v668 = vmax.f32 %v516, 0.0
        %v669 = vmax.f32 %v518, 0.0
        %v670 = vmax.f32 %v520, 0.0
        %v671 = vmax.f32 %v522, 0.0
        %v672 = vmax.f32 %v526, 0.0
        %v673 = vmax.f32 %v528, 0.0
        %v674 = vmax.f32 %v530, 0.0
        %v675 = vmax.f32 %v532, 0.0
        %v676 = vmax.f32 %v536, 0.0
        %v677 = vmax.f32 %v538, 0.0
        %v678 = vmax.f32 %v540, 0.0
        %v679 = vmax.f32 %v542, 0.0
        %v680 = vmax.f32 %v546, 0.0
        %v681 = vmax.f32 %v548, 0.0
        %v682 = vmax.f32 %v550, 0.0
        %v683 = vmax.f32 %v552, 0.0
        %v684 = vmax.f32 %v556, 0.0
        %v685 = vmax.f32 %v558, 0.0
        %v686 = vmax.f32 %v560, 0.0
        %v687 = vmax.f32 %v562, 0.0
        %v688 = vmax.f32 %v566, 0.0
        %v689 = vmax.f32 %v568, 0.0
        %v690 = vmax.f32 %v570, 0.0
        %v691 = vmax.f32 %v572, 0.0
        %v692 = vmax.f32 %v576, 0.0
        %v693 = vmax.f32 %v578, 0.0
        %v694 = vmax.f32 %v580, 0.0
        %v695 = vmax.f32 %v582, 0.0
        %v696 = vmax.f32 %v586, 0.0
        %v697 = vmax.f32 %v588, 0.0
        %v698 = vmax.f32 %v590, 0.0
        %v699 = vmax.f32 %v592, 0.0
        %v700 = vmax.f32 %v596, 0.0
        %v701 = vmax.f32 %v598, 0.0
        %v702 = vmax.f32 %v600, 0.0
        %v703 = vmax.f32 %v602, 0.0
        %v704 = vmax.f32 %v606, 0.0
        %v705 = vmax.f32 %v608, 0.0
        %v706 = vmax.f32 %v610, 0.0
        %v707 = vmax.f32 %v612, 0.0
        %v708 = vmax.f32 %v616, 0.0
        %v709 = vmax.f32 %v618, 0.0
        %v710 = vmax.f32 %v620, 0.0
        %v711 = vmax.f32 %v622, 0.0
        %v712 = vmax.f32 %v626, 0.0
        %v713 = vmax.f32 %v628, 0.0
        %v714 = vmax.f32 %v630, 0.0
        %v715 = vmax.f32 %v632, 0.0
        %v716 = vmax.f32 %v636, 0.0
        %v717 = vmax.f32 %v638, 0.0
        %v718 = vmax.f32 %v640, 0.0
        %v719 = vmax.f32 %v642, 0.0
        %v720 = vmax.f32 %v646, 0.0
        %v721 = vmax.f32 %v648, 0.0
        %v722 = vmax.f32 %v650, 0.0
        %v723 = vmax.f32 %v652, 0.0
        %v724 = vmax.f32 %v656, 0.0
        %v725 = vmax.f32 %v658, 0.0
        %v726 = vmax.f32 %v660, 0.0
        %v727 = vmax.f32 %v662, 0.0
        %v728 = vpack.c.bf16 %v666, %v664
        %v729 = vpack.c.bf16 %v667, %v665
        %v730 = vpack.c.bf16 %v670, %v668
        %v731 = vpack.c.bf16 %v671, %v669
        %v732 = vpack.c.bf16 %v674, %v672
        %v733 = vpack.c.bf16 %v675, %v673
        %v734 = vpack.c.bf16 %v678, %v676
        %v735 = vpack.c.bf16 %v679, %v677
        %v736 = vpack.c.bf16 %v682, %v680
        %v737 = vpack.c.bf16 %v683, %v681
        %v738 = vpack.c.bf16 %v686, %v684
        %v739 = vpack.c.bf16 %v687, %v685
        %v740 = vpack.c.bf16 %v690, %v688
        %v741 = vpack.c.bf16 %v691, %v689
        %v742 = vpack.c.bf16 %v694, %v692
        %v743 = vpack.c.bf16 %v695, %v693
        %v744 = vpack.c.bf16 %v698, %v696
        %v745 = vpack.c.bf16 %v699, %v697
        %v746 = vpack.c.bf16 %v702, %v700
        %v747 = vpack.c.bf16 %v703, %v701
        %v748 = vpack.c.bf16 %v706, %v704
        %v749 = vpack.c.bf16 %v707, %v705
        %v750 = vpack.c.bf16 %v710, %v708
        %v751 = vpack.c.bf16 %v711, %v709
        %v752 = vpack.c.bf16 %v714, %v712
        %v753 = vpack.c.bf16 %v715, %v713
        %v754 = vpack.c.bf16 %v718, %v716
        %v755 = vpack.c.bf16 %v719, %v717
        %v756 = vpack.c.bf16 %v722, %v720
        %v757 = vpack.c.bf16 %v723, %v721
        %v758 = vpack.c.bf16 %v726, %v724
        %v759 = vpack.c.bf16 %v727, %v725
        %v760 = vld [vmem:[%s3] sm:$0xff]
        %v761 = vld [vmem:[%s3 + $0x8] sm:$0xff]
        %v762 = vld [vmem:[%s3 + $0x10] sm:$0xff]
        %v763 = vld [vmem:[%s3 + $0x18] sm:$0xff]
        %v764 = vld [vmem:[%s3 + $0x20] sm:$0xff]
        %v765 = vld [vmem:[%s3 + $0x28] sm:$0xff]
        %v766 = vld [vmem:[%s3 + $0x30] sm:$0xff]
        %v767 = vld [vmem:[%s3 + $0x38] sm:$0xff]
        %v768 = vld [vmem:[%s3 + $0x40] sm:$0xff]
        %v769 = vld [vmem:[%s3 + $0x48] sm:$0xff]
        %v770 = vld [vmem:[%s3 + $0x50] sm:$0xff]
        %v771 = vld [vmem:[%s3 + $0x58] sm:$0xff]
        %v772 = vld [vmem:[%s3 + $0x60] sm:$0xff]
        %v773 = vld [vmem:[%s3 + $0x68] sm:$0xff]
        %v774 = vld [vmem:[%s3 + $0x70] sm:$0xff]
        %v775 = vld [vmem:[%s3 + $0x78] sm:$0xff]
        %v776 = vld [vmem:[%s3 + $0x80] sm:$0xff]
        %v777 = vld [vmem:[%s3 + $0x88] sm:$0xff]
        %v778 = vld [vmem:[%s3 + $0x90] sm:$0xff]
        %v779 = vld [vmem:[%s3 + $0x98] sm:$0xff]
        %v780 = vld [vmem:[%s3 + $0xa0] sm:$0xff]
        %v781 = vld [vmem:[%s3 + $0xa8] sm:$0xff]
        %v782 = vld [vmem:[%s3 + $0xb0] sm:$0xff]
        %v783 = vld [vmem:[%s3 + $0xb8] sm:$0xff]
        %v784 = vld [vmem:[%s3 + $0xc0] sm:$0xff]
        %v785 = vld [vmem:[%s3 + $0xc8] sm:$0xff]
        %v786 = vld [vmem:[%s3 + $0xd0] sm:$0xff]
        %v787 = vld [vmem:[%s3 + $0xd8] sm:$0xff]
        %v788 = vld [vmem:[%s3 + $0xe0] sm:$0xff]
        %v789 = vld [vmem:[%s3 + $0xe8] sm:$0xff]
        %v790 = vld [vmem:[%s3 + $0xf0] sm:$0xff]
        %v791 = vld [vmem:[%s3 + $0xf8] sm:$0xff]
        %v792 = vld [vmem:[%s4] sm:$0x3]
        %v794 = vlaneseq
        %v795 = vshrl.u32 %v794, 7
        %v796 = vsub.s32 0, %v795
        %v797 = vrot.slane %v792, %v796
        %v798 = vlaneseq
        %v799 = vshrl.u32 %v798, 7
        %v800 = vsub.s32 1, %v799
        %v801 = vrot.slane %v792, %v800
        %v836 = vunpack.c.l.b16 %v760
        %v837 = vunpack.c.h.b16 %v760
        %v838 = vunpack.c.l.b16 %v761
        %v839 = vunpack.c.h.b16 %v761
        %v840 = vunpack.c.l.b16 %v762
        %v841 = vunpack.c.h.b16 %v762
        %v842 = vunpack.c.l.b16 %v763
        %v843 = vunpack.c.h.b16 %v763
        %v844 = vunpack.c.l.b16 %v764
        %v845 = vunpack.c.h.b16 %v764
        %v846 = vunpack.c.l.b16 %v765
        %v847 = vunpack.c.h.b16 %v765
        %v848 = vunpack.c.l.b16 %v766
        %v849 = vunpack.c.h.b16 %v766
        %v850 = vunpack.c.l.b16 %v767
        %v851 = vunpack.c.h.b16 %v767
        %v852 = vunpack.c.l.b16 %v768
        %v853 = vunpack.c.h.b16 %v768
        %v854 = vunpack.c.l.b16 %v769
        %v855 = vunpack.c.h.b16 %v769
        %v856 = vunpack.c.l.b16 %v770
        %v857 = vunpack.c.h.b16 %v770
        %v858 = vunpack.c.l.b16 %v771
        %v859 = vunpack.c.h.b16 %v771
        %v860 = vunpack.c.l.b16 %v772
        %v861 = vunpack.c.h.b16 %v772
        %v862 = vunpack.c.l.b16 %v773
        %v863 = vunpack.c.h.b16 %v773
        %v864 = vunpack.c.l.b16 %v774
        %v865 = vunpack.c.h.b16 %v774
        %v866 = vunpack.c.l.b16 %v775
        %v867 = vunpack.c.h.b16 %v775
        %v868 = vunpack.c.l.b16 %v776
        %v869 = vunpack.c.h.b16 %v776
        %v870 = vunpack.c.l.b16 %v777
        %v871 = vunpack.c.h.b16 %v777
        %v872 = vunpack.c.l.b16 %v778
        %v873 = vunpack.c.h.b16 %v778
        %v874 = vunpack.c.l.b16 %v779
        %v875 = vunpack.c.h.b16 %v779
        %v876 = vunpack.c.l.b16 %v780
        %v877 = vunpack.c.h.b16 %v780
        %v878 = vunpack.c.l.b16 %v781
        %v879 = vunpack.c.h.b16 %v781
        %v880 = vunpack.c.l.b16 %v782
        %v881 = vunpack.c.h.b16 %v782
        %v882 = vunpack.c.l.b16 %v783
        %v883 = vunpack.c.h.b16 %v783
        %v884 = vunpack.c.l.b16 %v784
        %v885 = vunpack.c.h.b16 %v784
        %v886 = vunpack.c.l.b16 %v785
        %v887 = vunpack.c.h.b16 %v785
        %v888 = vunpack.c.l.b16 %v786
        %v889 = vunpack.c.h.b16 %v786
        %v890 = vunpack.c.l.b16 %v787
        %v891 = vunpack.c.h.b16 %v787
        %v892 = vunpack.c.l.b16 %v788
        %v893 = vunpack.c.h.b16 %v788
        %v894 = vunpack.c.l.b16 %v789
        %v895 = vunpack.c.h.b16 %v789
        %v896 = vunpack.c.l.b16 %v790
        %v897 = vunpack.c.h.b16 %v790
        %v898 = vunpack.c.l.b16 %v791
        %v899 = vunpack.c.h.b16 %v791
        %v900 = vpack.c.b16 %v838, %v836
        %v901 = vpack.c.b16 %v839, %v837
        %v902 = vpack.c.b16 %v842, %v840
        %v903 = vpack.c.b16 %v843, %v841
        %v904 = vpack.c.b16 %v846, %v844
        %v905 = vpack.c.b16 %v847, %v845
        %v906 = vpack.c.b16 %v850, %v848
        %v907 = vpack.c.b16 %v851, %v849
        %v908 = vpack.c.b16 %v854, %v852
        %v909 = vpack.c.b16 %v855, %v853
        %v910 = vpack.c.b16 %v858, %v856
        %v911 = vpack.c.b16 %v859, %v857
        %v912 = vpack.c.b16 %v862, %v860
        %v913 = vpack.c.b16 %v863, %v861
        %v914 = vpack.c.b16 %v866, %v864
        %v915 = vpack.c.b16 %v867, %v865
        %v916 = vpack.c.b16 %v870, %v868
        %v917 = vpack.c.b16 %v871, %v869
        %v918 = vpack.c.b16 %v874, %v872
        %v919 = vpack.c.b16 %v875, %v873
        %v920 = vpack.c.b16 %v878, %v876
        %v921 = vpack.c.b16 %v879, %v877
        %v922 = vpack.c.b16 %v882, %v880
        %v923 = vpack.c.b16 %v883, %v881
        %v924 = vpack.c.b16 %v886, %v884
        %v925 = vpack.c.b16 %v887, %v885
        %v926 = vpack.c.b16 %v890, %v888
        %v927 = vpack.c.b16 %v891, %v889
        %v928 = vpack.c.b16 %v894, %v892
        %v929 = vpack.c.b16 %v895, %v893
        %v930 = vpack.c.b16 %v898, %v896
        %v931 = vpack.c.b16 %v899, %v897
        %964 = vmatprep.subr.bf16.mxu0 %v915
        %965 = vmatpush1.bf16.msra.mxu0 %v914
        %966 = vmatprep.subr.bf16.mxu0 %v913
        %967 = vmatpush1.bf16.msra.mxu0 %v912
        %968 = vmatprep.subr.bf16.mxu0 %v911
        %969 = vmatpush1.bf16.msra.mxu0 %v910
        %970 = vmatprep.subr.bf16.mxu0 %v909
        %971 = vmatpush1.bf16.msra.mxu0 %v908
        %972 = vmatprep.subr.bf16.mxu0 %v907
        %973 = vmatpush1.bf16.msra.mxu0 %v906
        %974 = vmatprep.subr.bf16.mxu0 %v905
        %975 = vmatpush1.bf16.msra.mxu0 %v904
        %976 = vmatprep.subr.bf16.mxu0 %v903
        %977 = vmatpush1.bf16.msra.mxu0 %v902
        %978 = vmatprep.subr.bf16.mxu0 %v901
        %979 = vmatpush1.bf16.msra.mxu0 %v900
        %980 = vmatprep.subr.bf16.mxu0 %v931
        %981 = vmatpush2.bf16.msra.mxu0 %v930
        %982 = vmatprep.subr.bf16.mxu0 %v929
        %983 = vmatpush2.bf16.msra.mxu0 %v928
        %984 = vmatprep.subr.bf16.mxu0 %v927
        %985 = vmatpush2.bf16.msra.mxu0 %v926
        %986 = vmatprep.subr.bf16.mxu0 %v925
        %987 = vmatpush2.bf16.msra.mxu0 %v924
        %988 = vmatprep.subr.bf16.mxu0 %v923
        %989 = vmatpush2.bf16.msra.mxu0 %v922
        %990 = vmatprep.subr.bf16.mxu0 %v921
        %991 = vmatpush2.bf16.msra.mxu0 %v920
        %992 = vmatprep.subr.bf16.mxu0 %v919
        %993 = vmatpush2.bf16.msra.mxu0 %v918
        %994 = vmatprep.subr.bf16.mxu0 %v917
        %995 = vmatpush2.bf16.msra.mxu0 %v916
        %996 = vmatprep.mubr.bf16.mxu0 %v729
        %997 = vmatmul.mubr.bf16.gmra.mxu0 %v728
        %v998 = vpop.f32.mrf.mxu0
        %v999 = vadd.f32 %v797, %v998
        %v1000 = vpop.f32.mrf.mxu0
        %v1001 = vadd.f32 %v801, %v1000
        %v1002 = vpop.f32.mrf.mxu0
        %v1003 = vadd.f32 %v797, %v1002
        %v1004 = vpop.f32.mrf.mxu0
        %v1005 = vadd.f32 %v801, %v1004
        %1006 = vmatprep.mubr.bf16.mxu0 %v731
        %1007 = vmatmul.mubr.bf16.gmra.mxu0 %v730
        %v1008 = vpop.f32.mrf.mxu0
        %v1009 = vadd.f32 %v797, %v1008
        %v1010 = vpop.f32.mrf.mxu0
        %v1011 = vadd.f32 %v801, %v1010
        %v1012 = vpop.f32.mrf.mxu0
        %v1013 = vadd.f32 %v797, %v1012
        %v1014 = vpop.f32.mrf.mxu0
        %v1015 = vadd.f32 %v801, %v1014
        %1016 = vmatprep.mubr.bf16.mxu0 %v733
        %1017 = vmatmul.mubr.bf16.gmra.mxu0 %v732
        %v1018 = vpop.f32.mrf.mxu0
        %v1019 = vadd.f32 %v797, %v1018
        %v1020 = vpop.f32.mrf.mxu0
        %v1021 = vadd.f32 %v801, %v1020
        %v1022 = vpop.f32.mrf.mxu0
        %v1023 = vadd.f32 %v797, %v1022
        %v1024 = vpop.f32.mrf.mxu0
        %v1025 = vadd.f32 %v801, %v1024
        %1026 = vmatprep.mubr.bf16.mxu0 %v735
        %1027 = vmatmul.mubr.bf16.gmra.mxu0 %v734
        %v1028 = vpop.f32.mrf.mxu0
        %v1029 = vadd.f32 %v797, %v1028
        %v1030 = vpop.f32.mrf.mxu0
        %v1031 = vadd.f32 %v801, %v1030
        %v1032 = vpop.f32.mrf.mxu0
        %v1033 = vadd.f32 %v797, %v1032
        %v1034 = vpop.f32.mrf.mxu0
        %v1035 = vadd.f32 %v801, %v1034
        %1036 = vmatprep.mubr.bf16.mxu0 %v737
        %1037 = vmatmul.mubr.bf16.gmra.mxu0 %v736
        %v1038 = vpop.f32.mrf.mxu0
        %v1039 = vadd.f32 %v797, %v1038
        %v1040 = vpop.f32.mrf.mxu0
        %v1041 = vadd.f32 %v801, %v1040
        %v1042 = vpop.f32.mrf.mxu0
        %v1043 = vadd.f32 %v797, %v1042
        %v1044 = vpop.f32.mrf.mxu0
        %v1045 = vadd.f32 %v801, %v1044
        %1046 = vmatprep.mubr.bf16.mxu0 %v739
        %1047 = vmatmul.mubr.bf16.gmra.mxu0 %v738
        %v1048 = vpop.f32.mrf.mxu0
        %v1049 = vadd.f32 %v797, %v1048
        %v1050 = vpop.f32.mrf.mxu0
        %v1051 = vadd.f32 %v801, %v1050
        %v1052 = vpop.f32.mrf.mxu0
        %v1053 = vadd.f32 %v797, %v1052
        %v1054 = vpop.f32.mrf.mxu0
        %v1055 = vadd.f32 %v801, %v1054
        %1056 = vmatprep.mubr.bf16.mxu0 %v741
        %1057 = vmatmul.mubr.bf16.gmra.mxu0 %v740
        %v1058 = vpop.f32.mrf.mxu0
        %v1059 = vadd.f32 %v797, %v1058
        %v1060 = vpop.f32.mrf.mxu0
        %v1061 = vadd.f32 %v801, %v1060
        %v1062 = vpop.f32.mrf.mxu0
        %v1063 = vadd.f32 %v797, %v1062
        %v1064 = vpop.f32.mrf.mxu0
        %v1065 = vadd.f32 %v801, %v1064
        %1066 = vmatprep.mubr.bf16.mxu0 %v743
        %1067 = vmatmul.mubr.bf16.gmra.mxu0 %v742
        %v1068 = vpop.f32.mrf.mxu0
        %v1069 = vadd.f32 %v797, %v1068
        %v1070 = vpop.f32.mrf.mxu0
        %v1071 = vadd.f32 %v801, %v1070
        %v1072 = vpop.f32.mrf.mxu0
        %v1073 = vadd.f32 %v797, %v1072
        %v1074 = vpop.f32.mrf.mxu0
        %v1075 = vadd.f32 %v801, %v1074
        %1076 = vmatprep.mubr.bf16.mxu0 %v745
        %1077 = vmatmul.mubr.bf16.gmra.mxu0 %v744
        %v1078 = vpop.f32.mrf.mxu0
        %v1079 = vadd.f32 %v797, %v1078
        %v1080 = vpop.f32.mrf.mxu0
        %v1081 = vadd.f32 %v801, %v1080
        %v1082 = vpop.f32.mrf.mxu0
        %v1083 = vadd.f32 %v797, %v1082
        %v1084 = vpop.f32.mrf.mxu0
        %v1085 = vadd.f32 %v801, %v1084
        %1086 = vmatprep.mubr.bf16.mxu0 %v747
        %1087 = vmatmul.mubr.bf16.gmra.mxu0 %v746
        %v1088 = vpop.f32.mrf.mxu0
        %v1089 = vadd.f32 %v797, %v1088
        %v1090 = vpop.f32.mrf.mxu0
        %v1091 = vadd.f32 %v801, %v1090
        %v1092 = vpop.f32.mrf.mxu0
        %v1093 = vadd.f32 %v797, %v1092
        %v1094 = vpop.f32.mrf.mxu0
        %v1095 = vadd.f32 %v801, %v1094
        %1096 = vmatprep.mubr.bf16.mxu0 %v749
        %1097 = vmatmul.mubr.bf16.gmra.mxu0 %v748
        %v1098 = vpop.f32.mrf.mxu0
        %v1099 = vadd.f32 %v797, %v1098
        %v1100 = vpop.f32.mrf.mxu0
        %v1101 = vadd.f32 %v801, %v1100
        %v1102 = vpop.f32.mrf.mxu0
        %v1103 = vadd.f32 %v797, %v1102
        %v1104 = vpop.f32.mrf.mxu0
        %v1105 = vadd.f32 %v801, %v1104
        %1106 = vmatprep.mubr.bf16.mxu0 %v751
        %1107 = vmatmul.mubr.bf16.gmra.mxu0 %v750
        %v1108 = vpop.f32.mrf.mxu0
        %v1109 = vadd.f32 %v797, %v1108
        %v1110 = vpop.f32.mrf.mxu0
        %v1111 = vadd.f32 %v801, %v1110
        %v1112 = vpop.f32.mrf.mxu0
        %v1113 = vadd.f32 %v797, %v1112
        %v1114 = vpop.f32.mrf.mxu0
        %v1115 = vadd.f32 %v801, %v1114
        %1116 = vmatprep.mubr.bf16.mxu0 %v753
        %1117 = vmatmul.mubr.bf16.gmra.mxu0 %v752
        %v1118 = vpop.f32.mrf.mxu0
        %v1119 = vadd.f32 %v797, %v1118
        %v1120 = vpop.f32.mrf.mxu0
        %v1121 = vadd.f32 %v801, %v1120
        %v1122 = vpop.f32.mrf.mxu0
        %v1123 = vadd.f32 %v797, %v1122
        %v1124 = vpop.f32.mrf.mxu0
        %v1125 = vadd.f32 %v801, %v1124
        %1126 = vmatprep.mubr.bf16.mxu0 %v755
        %1127 = vmatmul.mubr.bf16.gmra.mxu0 %v754
        %v1128 = vpop.f32.mrf.mxu0
        %v1129 = vadd.f32 %v797, %v1128
        %v1130 = vpop.f32.mrf.mxu0
        %v1131 = vadd.f32 %v801, %v1130
        %v1132 = vpop.f32.mrf.mxu0
        %v1133 = vadd.f32 %v797, %v1132
        %v1134 = vpop.f32.mrf.mxu0
        %v1135 = vadd.f32 %v801, %v1134
        %1136 = vmatprep.mubr.bf16.mxu0 %v757
        %1137 = vmatmul.mubr.bf16.gmra.mxu0 %v756
        %v1138 = vpop.f32.mrf.mxu0
        %v1139 = vadd.f32 %v797, %v1138
        %v1140 = vpop.f32.mrf.mxu0
        %v1141 = vadd.f32 %v801, %v1140
        %v1142 = vpop.f32.mrf.mxu0
        %v1143 = vadd.f32 %v797, %v1142
        %v1144 = vpop.f32.mrf.mxu0
        %v1145 = vadd.f32 %v801, %v1144
        %1146 = vmatprep.mubr.bf16.mxu0 %v759
        %1147 = vmatmul.mubr.bf16.gmra.mxu0 %v758
        %v1148 = vpop.f32.mrf.mxu0
        %v1149 = vadd.f32 %v797, %v1148
        %v1150 = vpop.f32.mrf.mxu0
        %v1151 = vadd.f32 %v801, %v1150
        %v1152 = vpop.f32.mrf.mxu0
        %v1153 = vadd.f32 %v797, %v1152
        %v1154 = vpop.f32.mrf.mxu0
        %v1155 = vadd.f32 %v801, %v1154
        %1156 = vdwg.mxu0
        %v1157 = vmax.f32 %v999, 0.0
        %v1158 = vmax.f32 %v1001, 0.0
        %v1159 = vmax.f32 %v1003, 0.0
        %v1160 = vmax.f32 %v1005, 0.0
        %v1161 = vmax.f32 %v1009, 0.0
        %v1162 = vmax.f32 %v1011, 0.0
        %v1163 = vmax.f32 %v1013, 0.0
        %v1164 = vmax.f32 %v1015, 0.0
        %v1165 = vmax.f32 %v1019, 0.0
        %v1166 = vmax.f32 %v1021, 0.0
        %v1167 = vmax.f32 %v1023, 0.0
        %v1168 = vmax.f32 %v1025, 0.0
        %v1169 = vmax.f32 %v1029, 0.0
        %v1170 = vmax.f32 %v1031, 0.0
        %v1171 = vmax.f32 %v1033, 0.0
        %v1172 = vmax.f32 %v1035, 0.0
        %v1173 = vmax.f32 %v1039, 0.0
        %v1174 = vmax.f32 %v1041, 0.0
        %v1175 = vmax.f32 %v1043, 0.0
        %v1176 = vmax.f32 %v1045, 0.0
        %v1177 = vmax.f32 %v1049, 0.0
        %v1178 = vmax.f32 %v1051, 0.0
        %v1179 = vmax.f32 %v1053, 0.0
        %v1180 = vmax.f32 %v1055, 0.0
        %v1181 = vmax.f32 %v1059, 0.0
        %v1182 = vmax.f32 %v1061, 0.0
        %v1183 = vmax.f32 %v1063, 0.0
        %v1184 = vmax.f32 %v1065, 0.0
        %v1185 = vmax.f32 %v1069, 0.0
        %v1186 = vmax.f32 %v1071, 0.0
        %v1187 = vmax.f32 %v1073, 0.0
        %v1188 = vmax.f32 %v1075, 0.0
        %v1189 = vmax.f32 %v1079, 0.0
        %v1190 = vmax.f32 %v1081, 0.0
        %v1191 = vmax.f32 %v1083, 0.0
        %v1192 = vmax.f32 %v1085, 0.0
        %v1193 = vmax.f32 %v1089, 0.0
        %v1194 = vmax.f32 %v1091, 0.0
        %v1195 = vmax.f32 %v1093, 0.0
        %v1196 = vmax.f32 %v1095, 0.0
        %v1197 = vmax.f32 %v1099, 0.0
        %v1198 = vmax.f32 %v1101, 0.0
        %v1199 = vmax.f32 %v1103, 0.0
        %v1200 = vmax.f32 %v1105, 0.0
        %v1201 = vmax.f32 %v1109, 0.0
        %v1202 = vmax.f32 %v1111, 0.0
        %v1203 = vmax.f32 %v1113, 0.0
        %v1204 = vmax.f32 %v1115, 0.0
        %v1205 = vmax.f32 %v1119, 0.0
        %v1206 = vmax.f32 %v1121, 0.0
        %v1207 = vmax.f32 %v1123, 0.0
        %v1208 = vmax.f32 %v1125, 0.0
        %v1209 = vmax.f32 %v1129, 0.0
        %v1210 = vmax.f32 %v1131, 0.0
        %v1211 = vmax.f32 %v1133, 0.0
        %v1212 = vmax.f32 %v1135, 0.0
        %v1213 = vmax.f32 %v1139, 0.0
        %v1214 = vmax.f32 %v1141, 0.0
        %v1215 = vmax.f32 %v1143, 0.0
        %v1216 = vmax.f32 %v1145, 0.0
        %v1217 = vmax.f32 %v1149, 0.0
        %v1218 = vmax.f32 %v1151, 0.0
        %v1219 = vmax.f32 %v1153, 0.0
        %v1220 = vmax.f32 %v1155, 0.0
        %v1221 = vpack.c.bf16 %v1159, %v1157
        %v1222 = vpack.c.bf16 %v1160, %v1158
        %v1223 = vpack.c.bf16 %v1163, %v1161
        %v1224 = vpack.c.bf16 %v1164, %v1162
        %v1225 = vpack.c.bf16 %v1167, %v1165
        %v1226 = vpack.c.bf16 %v1168, %v1166
        %v1227 = vpack.c.bf16 %v1171, %v1169
        %v1228 = vpack.c.bf16 %v1172, %v1170
        %v1229 = vpack.c.bf16 %v1175, %v1173
        %v1230 = vpack.c.bf16 %v1176, %v1174
        %v1231 = vpack.c.bf16 %v1179, %v1177
        %v1232 = vpack.c.bf16 %v1180, %v1178
        %v1233 = vpack.c.bf16 %v1183, %v1181
        %v1234 = vpack.c.bf16 %v1184, %v1182
        %v1235 = vpack.c.bf16 %v1187, %v1185
        %v1236 = vpack.c.bf16 %v1188, %v1186
        %v1237 = vpack.c.bf16 %v1191, %v1189
        %v1238 = vpack.c.bf16 %v1192, %v1190
        %v1239 = vpack.c.bf16 %v1195, %v1193
        %v1240 = vpack.c.bf16 %v1196, %v1194
        %v1241 = vpack.c.bf16 %v1199, %v1197
        %v1242 = vpack.c.bf16 %v1200, %v1198
        %v1243 = vpack.c.bf16 %v1203, %v1201
        %v1244 = vpack.c.bf16 %v1204, %v1202
        %v1245 = vpack.c.bf16 %v1207, %v1205
        %v1246 = vpack.c.bf16 %v1208, %v1206
        %v1247 = vpack.c.bf16 %v1211, %v1209
        %v1248 = vpack.c.bf16 %v1212, %v1210
        %v1249 = vpack.c.bf16 %v1215, %v1213
        %v1250 = vpack.c.bf16 %v1216, %v1214
        %v1251 = vpack.c.bf16 %v1219, %v1217
        %v1252 = vpack.c.bf16 %v1220, %v1218
        %v1253 = vld [vmem:[%s5] sm:$0xff]
        %v1254 = vld [vmem:[%s5 + $0x8] sm:$0xff]
        %v1255 = vld [vmem:[%s5 + $0x10] sm:$0xff]
        %v1256 = vld [vmem:[%s5 + $0x18] sm:$0xff]
        %v1257 = vld [vmem:[%s5 + $0x20] sm:$0xff]
        %v1258 = vld [vmem:[%s5 + $0x28] sm:$0xff]
        %v1259 = vld [vmem:[%s5 + $0x30] sm:$0xff]
        %v1260 = vld [vmem:[%s5 + $0x38] sm:$0xff]
        %v1261 = vld [vmem:[%s5 + $0x40] sm:$0xff]
        %v1262 = vld [vmem:[%s5 + $0x48] sm:$0xff]
        %v1263 = vld [vmem:[%s5 + $0x50] sm:$0xff]
        %v1264 = vld [vmem:[%s5 + $0x58] sm:$0xff]
        %v1265 = vld [vmem:[%s5 + $0x60] sm:$0xff]
        %v1266 = vld [vmem:[%s5 + $0x68] sm:$0xff]
        %v1267 = vld [vmem:[%s5 + $0x70] sm:$0xff]
        %v1268 = vld [vmem:[%s5 + $0x78] sm:$0xff]
        %v1269 = vld [vmem:[%s5 + $0x80] sm:$0xff]
        %v1270 = vld [vmem:[%s5 + $0x88] sm:$0xff]
        %v1271 = vld [vmem:[%s5 + $0x90] sm:$0xff]
        %v1272 = vld [vmem:[%s5 + $0x98] sm:$0xff]
        %v1273 = vld [vmem:[%s5 + $0xa0] sm:$0xff]
        %v1274 = vld [vmem:[%s5 + $0xa8] sm:$0xff]
        %v1275 = vld [vmem:[%s5 + $0xb0] sm:$0xff]
        %v1276 = vld [vmem:[%s5 + $0xb8] sm:$0xff]
        %v1277 = vld [vmem:[%s5 + $0xc0] sm:$0xff]
        %v1278 = vld [vmem:[%s5 + $0xc8] sm:$0xff]
        %v1279 = vld [vmem:[%s5 + $0xd0] sm:$0xff]
        %v1280 = vld [vmem:[%s5 + $0xd8] sm:$0xff]
        %v1281 = vld [vmem:[%s5 + $0xe0] sm:$0xff]
        %v1282 = vld [vmem:[%s5 + $0xe8] sm:$0xff]
        %v1283 = vld [vmem:[%s5 + $0xf0] sm:$0xff]
        %v1284 = vld [vmem:[%s5 + $0xf8] sm:$0xff]
        %v1285 = vld [vmem:[%s6] sm:$0x3]
        %v1287 = vlaneseq
        %v1288 = vshrl.u32 %v1287, 7
        %v1289 = vsub.s32 0, %v1288
        %v1290 = vrot.slane %v1285, %v1289
        %v1291 = vlaneseq
        %v1292 = vshrl.u32 %v1291, 7
        %v1293 = vsub.s32 1, %v1292
        %v1294 = vrot.slane %v1285, %v1293
        %v1329 = vunpack.c.l.b16 %v1253
        %v1330 = vunpack.c.h.b16 %v1253
        %v1331 = vunpack.c.l.b16 %v1254
        %v1332 = vunpack.c.h.b16 %v1254
        %v1333 = vunpack.c.l.b16 %v1255
        %v1334 = vunpack.c.h.b16 %v1255
        %v1335 = vunpack.c.l.b16 %v1256
        %v1336 = vunpack.c.h.b16 %v1256
        %v1337 = vunpack.c.l.b16 %v1257
        %v1338 = vunpack.c.h.b16 %v1257
        %v1339 = vunpack.c.l.b16 %v1258
        %v1340 = vunpack.c.h.b16 %v1258
        %v1341 = vunpack.c.l.b16 %v1259
        %v1342 = vunpack.c.h.b16 %v1259
        %v1343 = vunpack.c.l.b16 %v1260
        %v1344 = vunpack.c.h.b16 %v1260
        %v1345 = vunpack.c.l.b16 %v1261
        %v1346 = vunpack.c.h.b16 %v1261
        %v1347 = vunpack.c.l.b16 %v1262
        %v1348 = vunpack.c.h.b16 %v1262
        %v1349 = vunpack.c.l.b16 %v1263
        %v1350 = vunpack.c.h.b16 %v1263
        %v1351 = vunpack.c.l.b16 %v1264
        %v1352 = vunpack.c.h.b16 %v1264
        %v1353 = vunpack.c.l.b16 %v1265
        %v1354 = vunpack.c.h.b16 %v1265
        %v1355 = vunpack.c.l.b16 %v1266
        %v1356 = vunpack.c.h.b16 %v1266
        %v1357 = vunpack.c.l.b16 %v1267
        %v1358 = vunpack.c.h.b16 %v1267
        %v1359 = vunpack.c.l.b16 %v1268
        %v1360 = vunpack.c.h.b16 %v1268
        %v1361 = vunpack.c.l.b16 %v1269
        %v1362 = vunpack.c.h.b16 %v1269
        %v1363 = vunpack.c.l.b16 %v1270
        %v1364 = vunpack.c.h.b16 %v1270
        %v1365 = vunpack.c.l.b16 %v1271
        %v1366 = vunpack.c.h.b16 %v1271
        %v1367 = vunpack.c.l.b16 %v1272
        %v1368 = vunpack.c.h.b16 %v1272
        %v1369 = vunpack.c.l.b16 %v1273
        %v1370 = vunpack.c.h.b16 %v1273
        %v1371 = vunpack.c.l.b16 %v1274
        %v1372 = vunpack.c.h.b16 %v1274
        %v1373 = vunpack.c.l.b16 %v1275
        %v1374 = vunpack.c.h.b16 %v1275
        %v1375 = vunpack.c.l.b16 %v1276
        %v1376 = vunpack.c.h.b16 %v1276
        %v1377 = vunpack.c.l.b16 %v1277
        %v1378 = vunpack.c.h.b16 %v1277
        %v1379 = vunpack.c.l.b16 %v1278
        %v1380 = vunpack.c.h.b16 %v1278
        %v1381 = vunpack.c.l.b16 %v1279
        %v1382 = vunpack.c.h.b16 %v1279
        %v1383 = vunpack.c.l.b16 %v1280
        %v1384 = vunpack.c.h.b16 %v1280
        %v1385 = vunpack.c.l.b16 %v1281
        %v1386 = vunpack.c.h.b16 %v1281
        %v1387 = vunpack.c.l.b16 %v1282
        %v1388 = vunpack.c.h.b16 %v1282
        %v1389 = vunpack.c.l.b16 %v1283
        %v1390 = vunpack.c.h.b16 %v1283
        %v1391 = vunpack.c.l.b16 %v1284
        %v1392 = vunpack.c.h.b16 %v1284
        %v1393 = vpack.c.b16 %v1331, %v1329
        %v1394 = vpack.c.b16 %v1332, %v1330
        %v1395 = vpack.c.b16 %v1335, %v1333
        %v1396 = vpack.c.b16 %v1336, %v1334
        %v1397 = vpack.c.b16 %v1339, %v1337
        %v1398 = vpack.c.b16 %v1340, %v1338
        %v1399 = vpack.c.b16 %v1343, %v1341
        %v1400 = vpack.c.b16 %v1344, %v1342
        %v1401 = vpack.c.b16 %v1347, %v1345
        %v1402 = vpack.c.b16 %v1348, %v1346
        %v1403 = vpack.c.b16 %v1351, %v1349
        %v1404 = vpack.c.b16 %v1352, %v1350
        %v1405 = vpack.c.b16 %v1355, %v1353
        %v1406 = vpack.c.b16 %v1356, %v1354
        %v1407 = vpack.c.b16 %v1359, %v1357
        %v1408 = vpack.c.b16 %v1360, %v1358
        %v1409 = vpack.c.b16 %v1363, %v1361
        %v1410 = vpack.c.b16 %v1364, %v1362
        %v1411 = vpack.c.b16 %v1367, %v1365
        %v1412 = vpack.c.b16 %v1368, %v1366
        %v1413 = vpack.c.b16 %v1371, %v1369
        %v1414 = vpack.c.b16 %v1372, %v1370
        %v1415 = vpack.c.b16 %v1375, %v1373
        %v1416 = vpack.c.b16 %v1376, %v1374
        %v1417 = vpack.c.b16 %v1379, %v1377
        %v1418 = vpack.c.b16 %v1380, %v1378
        %v1419 = vpack.c.b16 %v1383, %v1381
        %v1420 = vpack.c.b16 %v1384, %v1382
        %v1421 = vpack.c.b16 %v1387, %v1385
        %v1422 = vpack.c.b16 %v1388, %v1386
        %v1423 = vpack.c.b16 %v1391, %v1389
        %v1424 = vpack.c.b16 %v1392, %v1390
        %1457 = vmatprep.subr.bf16.mxu0 %v1408
        %1458 = vmatpush1.bf16.msra.mxu0 %v1407
        %1459 = vmatprep.subr.bf16.mxu0 %v1406
        %1460 = vmatpush1.bf16.msra.mxu0 %v1405
        %1461 = vmatprep.subr.bf16.mxu0 %v1404
        %1462 = vmatpush1.bf16.msra.mxu0 %v1403
        %1463 = vmatprep.subr.bf16.mxu0 %v1402
        %1464 = vmatpush1.bf16.msra.mxu0 %v1401
        %1465 = vmatprep.subr.bf16.mxu0 %v1400
        %1466 = vmatpush1.bf16.msra.mxu0 %v1399
        %1467 = vmatprep.subr.bf16.mxu0 %v1398
        %1468 = vmatpush1.bf16.msra.mxu0 %v1397
        %1469 = vmatprep.subr.bf16.mxu0 %v1396
        %1470 = vmatpush1.bf16.msra.mxu0 %v1395
        %1471 = vmatprep.subr.bf16.mxu0 %v1394
        %1472 = vmatpush1.bf16.msra.mxu0 %v1393
        %1473 = vmatprep.subr.bf16.mxu0 %v1424
        %1474 = vmatpush2.bf16.msra.mxu0 %v1423
        %1475 = vmatprep.subr.bf16.mxu0 %v1422
        %1476 = vmatpush2.bf16.msra.mxu0 %v1421
        %1477 = vmatprep.subr.bf16.mxu0 %v1420
        %1478 = vmatpush2.bf16.msra.mxu0 %v1419
        %1479 = vmatprep.subr.bf16.mxu0 %v1418
        %1480 = vmatpush2.bf16.msra.mxu0 %v1417
        %1481 = vmatprep.subr.bf16.mxu0 %v1416
        %1482 = vmatpush2.bf16.msra.mxu0 %v1415
        %1483 = vmatprep.subr.bf16.mxu0 %v1414
        %1484 = vmatpush2.bf16.msra.mxu0 %v1413
        %1485 = vmatprep.subr.bf16.mxu0 %v1412
        %1486 = vmatpush2.bf16.msra.mxu0 %v1411
        %1487 = vmatprep.subr.bf16.mxu0 %v1410
        %1488 = vmatpush2.bf16.msra.mxu0 %v1409
        %1489 = vmatprep.mubr.bf16.mxu0 %v1222
        %1490 = vmatmul.mubr.bf16.gmra.mxu0 %v1221
        %v1491 = vpop.f32.mrf.mxu0
        %v1492 = vadd.f32 %v1290, %v1491
        %v1493 = vpop.f32.mrf.mxu0
        %v1494 = vadd.f32 %v1294, %v1493
        %v1495 = vpop.f32.mrf.mxu0
        %v1496 = vadd.f32 %v1290, %v1495
        %v1497 = vpop.f32.mrf.mxu0
        %v1498 = vadd.f32 %v1294, %v1497
        %1499 = vmatprep.mubr.bf16.mxu0 %v1224
        %1500 = vmatmul.mubr.bf16.gmra.mxu0 %v1223
        %v1501 = vpop.f32.mrf.mxu0
        %v1502 = vadd.f32 %v1290, %v1501
        %v1503 = vpop.f32.mrf.mxu0
        %v1504 = vadd.f32 %v1294, %v1503
        %v1505 = vpop.f32.mrf.mxu0
        %v1506 = vadd.f32 %v1290, %v1505
        %v1507 = vpop.f32.mrf.mxu0
        %v1508 = vadd.f32 %v1294, %v1507
        %1509 = vmatprep.mubr.bf16.mxu0 %v1226
        %1510 = vmatmul.mubr.bf16.gmra.mxu0 %v1225
        %v1511 = vpop.f32.mrf.mxu0
        %v1512 = vadd.f32 %v1290, %v1511
        %v1513 = vpop.f32.mrf.mxu0
        %v1514 = vadd.f32 %v1294, %v1513
        %v1515 = vpop.f32.mrf.mxu0
        %v1516 = vadd.f32 %v1290, %v1515
        %v1517 = vpop.f32.mrf.mxu0
        %v1518 = vadd.f32 %v1294, %v1517
        %1519 = vmatprep.mubr.bf16.mxu0 %v1228
        %1520 = vmatmul.mubr.bf16.gmra.mxu0 %v1227
        %v1521 = vpop.f32.mrf.mxu0
        %v1522 = vadd.f32 %v1290, %v1521
        %v1523 = vpop.f32.mrf.mxu0
        %v1524 = vadd.f32 %v1294, %v1523
        %v1525 = vpop.f32.mrf.mxu0
        %v1526 = vadd.f32 %v1290, %v1525
        %v1527 = vpop.f32.mrf.mxu0
        %v1528 = vadd.f32 %v1294, %v1527
        %1529 = vmatprep.mubr.bf16.mxu0 %v1230
        %1530 = vmatmul.mubr.bf16.gmra.mxu0 %v1229
        %v1531 = vpop.f32.mrf.mxu0
        %v1532 = vadd.f32 %v1290, %v1531
        %v1533 = vpop.f32.mrf.mxu0
        %v1534 = vadd.f32 %v1294, %v1533
        %v1535 = vpop.f32.mrf.mxu0
        %v1536 = vadd.f32 %v1290, %v1535
        %v1537 = vpop.f32.mrf.mxu0
        %v1538 = vadd.f32 %v1294, %v1537
        %1539 = vmatprep.mubr.bf16.mxu0 %v1232
        %1540 = vmatmul.mubr.bf16.gmra.mxu0 %v1231
        %v1541 = vpop.f32.mrf.mxu0
        %v1542 = vadd.f32 %v1290, %v1541
        %v1543 = vpop.f32.mrf.mxu0
        %v1544 = vadd.f32 %v1294, %v1543
        %v1545 = vpop.f32.mrf.mxu0
        %v1546 = vadd.f32 %v1290, %v1545
        %v1547 = vpop.f32.mrf.mxu0
        %v1548 = vadd.f32 %v1294, %v1547
        %1549 = vmatprep.mubr.bf16.mxu0 %v1234
        %1550 = vmatmul.mubr.bf16.gmra.mxu0 %v1233
        %v1551 = vpop.f32.mrf.mxu0
        %v1552 = vadd.f32 %v1290, %v1551
        %v1553 = vpop.f32.mrf.mxu0
        %v1554 = vadd.f32 %v1294, %v1553
        %v1555 = vpop.f32.mrf.mxu0
        %v1556 = vadd.f32 %v1290, %v1555
        %v1557 = vpop.f32.mrf.mxu0
        %v1558 = vadd.f32 %v1294, %v1557
        %1559 = vmatprep.mubr.bf16.mxu0 %v1236
        %1560 = vmatmul.mubr.bf16.gmra.mxu0 %v1235
        %v1561 = vpop.f32.mrf.mxu0
        %v1562 = vadd.f32 %v1290, %v1561
        %v1563 = vpop.f32.mrf.mxu0
        %v1564 = vadd.f32 %v1294, %v1563
        %v1565 = vpop.f32.mrf.mxu0
        %v1566 = vadd.f32 %v1290, %v1565
        %v1567 = vpop.f32.mrf.mxu0
        %v1568 = vadd.f32 %v1294, %v1567
        %1569 = vmatprep.mubr.bf16.mxu0 %v1238
        %1570 = vmatmul.mubr.bf16.gmra.mxu0 %v1237
        %v1571 = vpop.f32.mrf.mxu0
        %v1572 = vadd.f32 %v1290, %v1571
        %v1573 = vpop.f32.mrf.mxu0
        %v1574 = vadd.f32 %v1294, %v1573
        %v1575 = vpop.f32.mrf.mxu0
        %v1576 = vadd.f32 %v1290, %v1575
        %v1577 = vpop.f32.mrf.mxu0
        %v1578 = vadd.f32 %v1294, %v1577
        %1579 = vmatprep.mubr.bf16.mxu0 %v1240
        %1580 = vmatmul.mubr.bf16.gmra.mxu0 %v1239
        %v1581 = vpop.f32.mrf.mxu0
        %v1582 = vadd.f32 %v1290, %v1581
        %v1583 = vpop.f32.mrf.mxu0
        %v1584 = vadd.f32 %v1294, %v1583
        %v1585 = vpop.f32.mrf.mxu0
        %v1586 = vadd.f32 %v1290, %v1585
        %v1587 = vpop.f32.mrf.mxu0
        %v1588 = vadd.f32 %v1294, %v1587
        %1589 = vmatprep.mubr.bf16.mxu0 %v1242
        %1590 = vmatmul.mubr.bf16.gmra.mxu0 %v1241
        %v1591 = vpop.f32.mrf.mxu0
        %v1592 = vadd.f32 %v1290, %v1591
        %v1593 = vpop.f32.mrf.mxu0
        %v1594 = vadd.f32 %v1294, %v1593
        %v1595 = vpop.f32.mrf.mxu0
        %v1596 = vadd.f32 %v1290, %v1595
        %v1597 = vpop.f32.mrf.mxu0
        %v1598 = vadd.f32 %v1294, %v1597
        %1599 = vmatprep.mubr.bf16.mxu0 %v1244
        %1600 = vmatmul.mubr.bf16.gmra.mxu0 %v1243
        %v1601 = vpop.f32.mrf.mxu0
        %v1602 = vadd.f32 %v1290, %v1601
        %v1603 = vpop.f32.mrf.mxu0
        %v1604 = vadd.f32 %v1294, %v1603
        %v1605 = vpop.f32.mrf.mxu0
        %v1606 = vadd.f32 %v1290, %v1605
        %v1607 = vpop.f32.mrf.mxu0
        %v1608 = vadd.f32 %v1294, %v1607
        %1609 = vmatprep.mubr.bf16.mxu0 %v1246
        %1610 = vmatmul.mubr.bf16.gmra.mxu0 %v1245
        %v1611 = vpop.f32.mrf.mxu0
        %v1612 = vadd.f32 %v1290, %v1611
        %v1613 = vpop.f32.mrf.mxu0
        %v1614 = vadd.f32 %v1294, %v1613
        %v1615 = vpop.f32.mrf.mxu0
        %v1616 = vadd.f32 %v1290, %v1615
        %v1617 = vpop.f32.mrf.mxu0
        %v1618 = vadd.f32 %v1294, %v1617
        %1619 = vmatprep.mubr.bf16.mxu0 %v1248
        %1620 = vmatmul.mubr.bf16.gmra.mxu0 %v1247
        %v1621 = vpop.f32.mrf.mxu0
        %v1622 = vadd.f32 %v1290, %v1621
        %v1623 = vpop.f32.mrf.mxu0
        %v1624 = vadd.f32 %v1294, %v1623
        %v1625 = vpop.f32.mrf.mxu0
        %v1626 = vadd.f32 %v1290, %v1625
        %v1627 = vpop.f32.mrf.mxu0
        %v1628 = vadd.f32 %v1294, %v1627
        %1629 = vmatprep.mubr.bf16.mxu0 %v1250
        %1630 = vmatmul.mubr.bf16.gmra.mxu0 %v1249
        %v1631 = vpop.f32.mrf.mxu0
        %v1632 = vadd.f32 %v1290, %v1631
        %v1633 = vpop.f32.mrf.mxu0
        %v1634 = vadd.f32 %v1294, %v1633
        %v1635 = vpop.f32.mrf.mxu0
        %v1636 = vadd.f32 %v1290, %v1635
        %v1637 = vpop.f32.mrf.mxu0
        %v1638 = vadd.f32 %v1294, %v1637
        %1639 = vmatprep.mubr.bf16.mxu0 %v1252
        %1640 = vmatmul.mubr.bf16.gmra.mxu0 %v1251
        %v1641 = vpop.f32.mrf.mxu0
        %v1642 = vadd.f32 %v1290, %v1641
        %v1643 = vpop.f32.mrf.mxu0
        %v1644 = vadd.f32 %v1294, %v1643
        %v1645 = vpop.f32.mrf.mxu0
        %v1646 = vadd.f32 %v1290, %v1645
        %v1647 = vpop.f32.mrf.mxu0
        %v1648 = vadd.f32 %v1294, %v1647
        %1649 = vdwg.mxu0
        %v1650 = vmax.f32 %v1492, 0.0
        %v1651 = vmax.f32 %v1494, 0.0
        %v1652 = vmax.f32 %v1496, 0.0
        %v1653 = vmax.f32 %v1498, 0.0
        %v1654 = vmax.f32 %v1502, 0.0
        %v1655 = vmax.f32 %v1504, 0.0
        %v1656 = vmax.f32 %v1506, 0.0
        %v1657 = vmax.f32 %v1508, 0.0
        %v1658 = vmax.f32 %v1512, 0.0
        %v1659 = vmax.f32 %v1514, 0.0
        %v1660 = vmax.f32 %v1516, 0.0
        %v1661 = vmax.f32 %v1518, 0.0
        %v1662 = vmax.f32 %v1522, 0.0
        %v1663 = vmax.f32 %v1524, 0.0
        %v1664 = vmax.f32 %v1526, 0.0
        %v1665 = vmax.f32 %v1528, 0.0
        %v1666 = vmax.f32 %v1532, 0.0
        %v1667 = vmax.f32 %v1534, 0.0
        %v1668 = vmax.f32 %v1536, 0.0
        %v1669 = vmax.f32 %v1538, 0.0
        %v1670 = vmax.f32 %v1542, 0.0
        %v1671 = vmax.f32 %v1544, 0.0
        %v1672 = vmax.f32 %v1546, 0.0
        %v1673 = vmax.f32 %v1548, 0.0
        %v1674 = vmax.f32 %v1552, 0.0
        %v1675 = vmax.f32 %v1554, 0.0
        %v1676 = vmax.f32 %v1556, 0.0
        %v1677 = vmax.f32 %v1558, 0.0
        %v1678 = vmax.f32 %v1562, 0.0
        %v1679 = vmax.f32 %v1564, 0.0
        %v1680 = vmax.f32 %v1566, 0.0
        %v1681 = vmax.f32 %v1568, 0.0
        %v1682 = vmax.f32 %v1572, 0.0
        %v1683 = vmax.f32 %v1574, 0.0
        %v1684 = vmax.f32 %v1576, 0.0
        %v1685 = vmax.f32 %v1578, 0.0
        %v1686 = vmax.f32 %v1582, 0.0
        %v1687 = vmax.f32 %v1584, 0.0
        %v1688 = vmax.f32 %v1586, 0.0
        %v1689 = vmax.f32 %v1588, 0.0
        %v1690 = vmax.f32 %v1592, 0.0
        %v1691 = vmax.f32 %v1594, 0.0
        %v1692 = vmax.f32 %v1596, 0.0
        %v1693 = vmax.f32 %v1598, 0.0
        %v1694 = vmax.f32 %v1602, 0.0
        %v1695 = vmax.f32 %v1604, 0.0
        %v1696 = vmax.f32 %v1606, 0.0
        %v1697 = vmax.f32 %v1608, 0.0
        %v1698 = vmax.f32 %v1612, 0.0
        %v1699 = vmax.f32 %v1614, 0.0
        %v1700 = vmax.f32 %v1616, 0.0
        %v1701 = vmax.f32 %v1618, 0.0
        %v1702 = vmax.f32 %v1622, 0.0
        %v1703 = vmax.f32 %v1624, 0.0
        %v1704 = vmax.f32 %v1626, 0.0
        %v1705 = vmax.f32 %v1628, 0.0
        %v1706 = vmax.f32 %v1632, 0.0
        %v1707 = vmax.f32 %v1634, 0.0
        %v1708 = vmax.f32 %v1636, 0.0
        %v1709 = vmax.f32 %v1638, 0.0
        %v1710 = vmax.f32 %v1642, 0.0
        %v1711 = vmax.f32 %v1644, 0.0
        %v1712 = vmax.f32 %v1646, 0.0
        %v1713 = vmax.f32 %v1648, 0.0
        %v1714 = vpack.c.bf16 %v1652, %v1650
        %v1715 = vpack.c.bf16 %v1653, %v1651
        %v1716 = vpack.c.bf16 %v1656, %v1654
        %v1717 = vpack.c.bf16 %v1657, %v1655
        %v1718 = vpack.c.bf16 %v1660, %v1658
        %v1719 = vpack.c.bf16 %v1661, %v1659
        %v1720 = vpack.c.bf16 %v1664, %v1662
        %v1721 = vpack.c.bf16 %v1665, %v1663
        %v1722 = vpack.c.bf16 %v1668, %v1666
        %v1723 = vpack.c.bf16 %v1669, %v1667
        %v1724 = vpack.c.bf16 %v1672, %v1670
        %v1725 = vpack.c.bf16 %v1673, %v1671
        %v1726 = vpack.c.bf16 %v1676, %v1674
        %v1727 = vpack.c.bf16 %v1677, %v1675
        %v1728 = vpack.c.bf16 %v1680, %v1678
        %v1729 = vpack.c.bf16 %v1681, %v1679
        %v1730 = vpack.c.bf16 %v1684, %v1682
        %v1731 = vpack.c.bf16 %v1685, %v1683
        %v1732 = vpack.c.bf16 %v1688, %v1686
        %v1733 = vpack.c.bf16 %v1689, %v1687
        %v1734 = vpack.c.bf16 %v1692, %v1690
        %v1735 = vpack.c.bf16 %v1693, %v1691
        %v1736 = vpack.c.bf16 %v1696, %v1694
        %v1737 = vpack.c.bf16 %v1697, %v1695
        %v1738 = vpack.c.bf16 %v1700, %v1698
        %v1739 = vpack.c.bf16 %v1701, %v1699
        %v1740 = vpack.c.bf16 %v1704, %v1702
        %v1741 = vpack.c.bf16 %v1705, %v1703
        %v1742 = vpack.c.bf16 %v1708, %v1706
        %v1743 = vpack.c.bf16 %v1709, %v1707
        %v1744 = vpack.c.bf16 %v1712, %v1710
        %v1745 = vpack.c.bf16 %v1713, %v1711
        %v1746 = vld [vmem:[#allocation2] sm:$0xf]
        %v1747 = vld [vmem:[#allocation2 + $0x4] sm:$0xf]
        %v1748 = vld [vmem:[#allocation2 + $0x8] sm:$0xf]
        %v1749 = vld [vmem:[#allocation2 + $0xc] sm:$0xf]
        %v1750 = vld [vmem:[#allocation2 + $0x10] sm:$0xf]
        %v1751 = vld [vmem:[#allocation2 + $0x14] sm:$0xf]
        %v1752 = vld [vmem:[#allocation2 + $0x18] sm:$0xf]
        %v1753 = vld [vmem:[#allocation2 + $0x1c] sm:$0xf]
        %v1754 = vld [vmem:[#allocation2 + $0x20] sm:$0xf]
        %v1755 = vld [vmem:[#allocation2 + $0x24] sm:$0xf]
        %v1756 = vld [vmem:[#allocation2 + $0x28] sm:$0xf]
        %v1757 = vld [vmem:[#allocation2 + $0x2c] sm:$0xf]
        %v1758 = vld [vmem:[#allocation2 + $0x30] sm:$0xf]
        %v1759 = vld [vmem:[#allocation2 + $0x34] sm:$0xf]
        %v1760 = vld [vmem:[#allocation2 + $0x38] sm:$0xf]
        %v1761 = vld [vmem:[#allocation2 + $0x3c] sm:$0xf]
        %v1762 = vld [vmem:[#allocation2 + $0x40] sm:$0xf]
        %v1763 = vld [vmem:[#allocation2 + $0x44] sm:$0xf]
        %v1764 = vld [vmem:[#allocation2 + $0x48] sm:$0xf]
        %v1765 = vld [vmem:[#allocation2 + $0x4c] sm:$0xf]
        %v1766 = vld [vmem:[#allocation2 + $0x50] sm:$0xf]
        %v1767 = vld [vmem:[#allocation2 + $0x54] sm:$0xf]
        %v1768 = vld [vmem:[#allocation2 + $0x58] sm:$0xf]
        %v1769 = vld [vmem:[#allocation2 + $0x5c] sm:$0xf]
        %v1770 = vld [vmem:[#allocation2 + $0x60] sm:$0xf]
        %v1771 = vld [vmem:[#allocation2 + $0x64] sm:$0xf]
        %v1772 = vld [vmem:[#allocation2 + $0x68] sm:$0xf]
        %v1773 = vld [vmem:[#allocation2 + $0x6c] sm:$0xf]
        %v1774 = vld [vmem:[#allocation2 + $0x70] sm:$0xf]
        %v1775 = vld [vmem:[#allocation2 + $0x74] sm:$0xf]
        %v1776 = vld [vmem:[#allocation2 + $0x78] sm:$0xf]
        %v1777 = vld [vmem:[#allocation2 + $0x7c] sm:$0xf]
        %v1778 = vld [vmem:[%s8] sm:$0x1]
        %v1780 = vlaneseq
        %v1781 = vshrl.u32 %v1780, 7
        %v1782 = vsub.s32 0, %v1781
        %v1783 = vrot.slane %v1778, %v1782
        %v1817 = vunpack.c.l.b16 %v1746
        %v1818 = vunpack.c.l.b16 %v1747
        %v1819 = vunpack.c.l.b16 %v1748
        %v1820 = vunpack.c.l.b16 %v1749
        %v1821 = vunpack.c.l.b16 %v1750
        %v1822 = vunpack.c.l.b16 %v1751
        %v1823 = vunpack.c.l.b16 %v1752
        %v1824 = vunpack.c.l.b16 %v1753
        %v1825 = vunpack.c.l.b16 %v1754
        %v1826 = vunpack.c.l.b16 %v1755
        %v1827 = vunpack.c.l.b16 %v1756
        %v1828 = vunpack.c.l.b16 %v1757
        %v1829 = vunpack.c.l.b16 %v1758
        %v1830 = vunpack.c.l.b16 %v1759
        %v1831 = vunpack.c.l.b16 %v1760
        %v1832 = vunpack.c.l.b16 %v1761
        %v1833 = vunpack.c.l.b16 %v1762
        %v1834 = vunpack.c.l.b16 %v1763
        %v1835 = vunpack.c.l.b16 %v1764
        %v1836 = vunpack.c.l.b16 %v1765
        %v1837 = vunpack.c.l.b16 %v1766
        %v1838 = vunpack.c.l.b16 %v1767
        %v1839 = vunpack.c.l.b16 %v1768
        %v1840 = vunpack.c.l.b16 %v1769
        %v1841 = vunpack.c.l.b16 %v1770
        %v1842 = vunpack.c.l.b16 %v1771
        %v1843 = vunpack.c.l.b16 %v1772
        %v1844 = vunpack.c.l.b16 %v1773
        %v1845 = vunpack.c.l.b16 %v1774
        %v1846 = vunpack.c.l.b16 %v1775
        %v1847 = vunpack.c.l.b16 %v1776
        %v1848 = vunpack.c.l.b16 %v1777
        %v1849 = vpack.c.b16 %v1818, %v1817
        %v1850 = vpack.c.b16 %v1820, %v1819
        %v1851 = vpack.c.b16 %v1822, %v1821
        %v1852 = vpack.c.b16 %v1824, %v1823
        %v1853 = vpack.c.b16 %v1826, %v1825
        %v1854 = vpack.c.b16 %v1828, %v1827
        %v1855 = vpack.c.b16 %v1830, %v1829
        %v1856 = vpack.c.b16 %v1832, %v1831
        %v1857 = vpack.c.b16 %v1834, %v1833
        %v1858 = vpack.c.b16 %v1836, %v1835
        %v1859 = vpack.c.b16 %v1838, %v1837
        %v1860 = vpack.c.b16 %v1840, %v1839
        %v1861 = vpack.c.b16 %v1842, %v1841
        %v1862 = vpack.c.b16 %v1844, %v1843
        %v1863 = vpack.c.b16 %v1846, %v1845
        %v1864 = vpack.c.b16 %v1848, %v1847
        %1881 = vmatprep.subr.bf16.mxu0 0
        %1882 = vmatpush1.bf16.msra.mxu0 %v1856
        %1883 = vmatprep.subr.bf16.mxu0 0
        %1884 = vmatpush1.bf16.msra.mxu0 %v1855
        %1885 = vmatprep.subr.bf16.mxu0 0
        %1886 = vmatpush1.bf16.msra.mxu0 %v1854
        %1887 = vmatprep.subr.bf16.mxu0 0
        %1888 = vmatpush1.bf16.msra.mxu0 %v1853
        %1889 = vmatprep.subr.bf16.mxu0 0
        %1890 = vmatpush1.bf16.msra.mxu0 %v1852
        %1891 = vmatprep.subr.bf16.mxu0 0
        %1892 = vmatpush1.bf16.msra.mxu0 %v1851
        %1893 = vmatprep.subr.bf16.mxu0 0
        %1894 = vmatpush1.bf16.msra.mxu0 %v1850
        %1895 = vmatprep.subr.bf16.mxu0 0
        %1896 = vmatpush1.bf16.msra.mxu0 %v1849
        %1897 = vmatprep.subr.bf16.mxu0 0
        %1898 = vmatpush2.bf16.msra.mxu0 %v1864
        %1899 = vmatprep.subr.bf16.mxu0 0
        %1900 = vmatpush2.bf16.msra.mxu0 %v1863
        %1901 = vmatprep.subr.bf16.mxu0 0
        %1902 = vmatpush2.bf16.msra.mxu0 %v1862
        %1903 = vmatprep.subr.bf16.mxu0 0
        %1904 = vmatpush2.bf16.msra.mxu0 %v1861
        %1905 = vmatprep.subr.bf16.mxu0 0
        %1906 = vmatpush2.bf16.msra.mxu0 %v1860
        %1907 = vmatprep.subr.bf16.mxu0 0
        %1908 = vmatpush2.bf16.msra.mxu0 %v1859
        %1909 = vmatprep.subr.bf16.mxu0 0
        %1910 = vmatpush2.bf16.msra.mxu0 %v1858
        %1911 = vmatprep.subr.bf16.mxu0 0
        %1912 = vmatpush2.bf16.msra.mxu0 %v1857
        %1913 = vmatprep.mubr.bf16.mxu0 %v1715
        %1914 = vmatmul.mubr.bf16.gmra.mxu0 %v1714
        %v1915 = vpop.f32.mrf.mxu0
        %v1916 = vadd.f32 %v1783, %v1915
        %v1917 = vpop.f32.mrf.mxu0
        %v1918 = vpop.f32.mrf.mxu0
        %v1919 = vadd.f32 %v1783, %v1918
        %v1920 = vpop.f32.mrf.mxu0
        %1921 = vmatprep.mubr.bf16.mxu0 %v1717
        %1922 = vmatmul.mubr.bf16.gmra.mxu0 %v1716
        %v1923 = vpop.f32.mrf.mxu0
        %v1924 = vadd.f32 %v1783, %v1923
        %v1925 = vpop.f32.mrf.mxu0
        %v1926 = vpop.f32.mrf.mxu0
        %v1927 = vadd.f32 %v1783, %v1926
        %v1928 = vpop.f32.mrf.mxu0
        %1929 = vmatprep.mubr.bf16.mxu0 %v1719
        %1930 = vmatmul.mubr.bf16.gmra.mxu0 %v1718
        %v1931 = vpop.f32.mrf.mxu0
        %v1932 = vadd.f32 %v1783, %v1931
        %v1933 = vpop.f32.mrf.mxu0
        %v1934 = vpop.f32.mrf.mxu0
        %v1935 = vadd.f32 %v1783, %v1934
        %v1936 = vpop.f32.mrf.mxu0
        %1937 = vmatprep.mubr.bf16.mxu0 %v1721
        %1938 = vmatmul.mubr.bf16.gmra.mxu0 %v1720
        %v1939 = vpop.f32.mrf.mxu0
        %v1940 = vadd.f32 %v1783, %v1939
        %v1941 = vpop.f32.mrf.mxu0
        %v1942 = vpop.f32.mrf.mxu0
        %v1943 = vadd.f32 %v1783, %v1942
        %v1944 = vpop.f32.mrf.mxu0
        %1945 = vmatprep.mubr.bf16.mxu0 %v1723
        %1946 = vmatmul.mubr.bf16.gmra.mxu0 %v1722
        %v1947 = vpop.f32.mrf.mxu0
        %v1948 = vadd.f32 %v1783, %v1947
        %v1949 = vpop.f32.mrf.mxu0
        %v1950 = vpop.f32.mrf.mxu0
        %v1951 = vadd.f32 %v1783, %v1950
        %v1952 = vpop.f32.mrf.mxu0
        %1953 = vmatprep.mubr.bf16.mxu0 %v1725
        %1954 = vmatmul.mubr.bf16.gmra.mxu0 %v1724
        %v1955 = vpop.f32.mrf.mxu0
        %v1956 = vadd.f32 %v1783, %v1955
        %v1957 = vpop.f32.mrf.mxu0
        %v1958 = vpop.f32.mrf.mxu0
        %v1959 = vadd.f32 %v1783, %v1958
        %v1960 = vpop.f32.mrf.mxu0
        %1961 = vmatprep.mubr.bf16.mxu0 %v1727
        %1962 = vmatmul.mubr.bf16.gmra.mxu0 %v1726
        %v1963 = vpop.f32.mrf.mxu0
        %v1964 = vadd.f32 %v1783, %v1963
        %v1965 = vpop.f32.mrf.mxu0
        %v1966 = vpop.f32.mrf.mxu0
        %v1967 = vadd.f32 %v1783, %v1966
        %v1968 = vpop.f32.mrf.mxu0
        %1969 = vmatprep.mubr.bf16.mxu0 %v1729
        %1970 = vmatmul.mubr.bf16.gmra.mxu0 %v1728
        %v1971 = vpop.f32.mrf.mxu0
        %v1972 = vadd.f32 %v1783, %v1971
        %v1973 = vpop.f32.mrf.mxu0
        %v1974 = vpop.f32.mrf.mxu0
        %v1975 = vadd.f32 %v1783, %v1974
        %v1976 = vpop.f32.mrf.mxu0
        %1977 = vmatprep.mubr.bf16.mxu0 %v1731
        %1978 = vmatmul.mubr.bf16.gmra.mxu0 %v1730
        %v1979 = vpop.f32.mrf.mxu0
        %v1980 = vadd.f32 %v1783, %v1979
        %v1981 = vpop.f32.mrf.mxu0
        %v1982 = vpop.f32.mrf.mxu0
        %v1983 = vadd.f32 %v1783, %v1982
        %v1984 = vpop.f32.mrf.mxu0
        %1985 = vmatprep.mubr.bf16.mxu0 %v1733
        %1986 = vmatmul.mubr.bf16.gmra.mxu0 %v1732
        %v1987 = vpop.f32.mrf.mxu0
        %v1988 = vadd.f32 %v1783, %v1987
        %v1989 = vpop.f32.mrf.mxu0
        %v1990 = vpop.f32.mrf.mxu0
        %v1991 = vadd.f32 %v1783, %v1990
        %v1992 = vpop.f32.mrf.mxu0
        %1993 = vmatprep.mubr.bf16.mxu0 %v1735
        %1994 = vmatmul.mubr.bf16.gmra.mxu0 %v1734
        %v1995 = vpop.f32.mrf.mxu0
        %v1996 = vadd.f32 %v1783, %v1995
        %v1997 = vpop.f32.mrf.mxu0
        %v1998 = vpop.f32.mrf.mxu0
        %v1999 = vadd.f32 %v1783, %v1998
        %v2000 = vpop.f32.mrf.mxu0
        %2001 = vmatprep.mubr.bf16.mxu0 %v1737
        %2002 = vmatmul.mubr.bf16.gmra.mxu0 %v1736
        %v2003 = vpop.f32.mrf.mxu0
        %v2004 = vadd.f32 %v1783, %v2003
        %v2005 = vpop.f32.mrf.mxu0
        %v2006 = vpop.f32.mrf.mxu0
        %v2007 = vadd.f32 %v1783, %v2006
        %v2008 = vpop.f32.mrf.mxu0
        %2009 = vmatprep.mubr.bf16.mxu0 %v1739
        %2010 = vmatmul.mubr.bf16.gmra.mxu0 %v1738
        %v2011 = vpop.f32.mrf.mxu0
        %v2012 = vadd.f32 %v1783, %v2011
        %v2013 = vpop.f32.mrf.mxu0
        %v2014 = vpop.f32.mrf.mxu0
        %v2015 = vadd.f32 %v1783, %v2014
        %v2016 = vpop.f32.mrf.mxu0
        %2017 = vmatprep.mubr.bf16.mxu0 %v1741
        %2018 = vmatmul.mubr.bf16.gmra.mxu0 %v1740
        %v2019 = vpop.f32.mrf.mxu0
        %v2020 = vadd.f32 %v1783, %v2019
        %v2021 = vpop.f32.mrf.mxu0
        %v2022 = vpop.f32.mrf.mxu0
        %v2023 = vadd.f32 %v1783, %v2022
        %v2024 = vpop.f32.mrf.mxu0
        %2025 = vmatprep.mubr.bf16.mxu0 %v1743
        %2026 = vmatmul.mubr.bf16.gmra.mxu0 %v1742
        %v2027 = vpop.f32.mrf.mxu0
        %v2028 = vadd.f32 %v1783, %v2027
        %v2029 = vpop.f32.mrf.mxu0
        %v2030 = vpop.f32.mrf.mxu0
        %v2031 = vadd.f32 %v1783, %v2030
        %v2032 = vpop.f32.mrf.mxu0
        %2033 = vmatprep.mubr.bf16.mxu0 %v1745
        %2034 = vmatmul.mubr.bf16.gmra.mxu0 %v1744
        %v2035 = vpop.f32.mrf.mxu0
        %v2036 = vadd.f32 %v1783, %v2035
        %v2037 = vpop.f32.mrf.mxu0
        %v2038 = vpop.f32.mrf.mxu0
        %v2039 = vadd.f32 %v1783, %v2038
        %v2040 = vpop.f32.mrf.mxu0
        %2041 = vdwg.mxu0
        %2042 = vst [vmem:[%s341] sm:$0xff] %v1916
        %2043 = vst [vmem:[%s341 + $0x8] sm:$0xff] %v1919
        %2044 = vst [vmem:[%s341 + $0x10] sm:$0xff] %v1924
        %2045 = vst [vmem:[%s341 + $0x18] sm:$0xff] %v1927
        %2046 = vst [vmem:[%s341 + $0x20] sm:$0xff] %v1932
        %2047 = vst [vmem:[%s341 + $0x28] sm:$0xff] %v1935
        %2048 = vst [vmem:[%s341 + $0x30] sm:$0xff] %v1940
        %2049 = vst [vmem:[%s341 + $0x38] sm:$0xff] %v1943
        %2050 = vst [vmem:[%s341 + $0x40] sm:$0xff] %v1948
        %2051 = vst [vmem:[%s341 + $0x48] sm:$0xff] %v1951
        %2052 = vst [vmem:[%s341 + $0x50] sm:$0xff] %v1956
        %2053 = vst [vmem:[%s341 + $0x58] sm:$0xff] %v1959
        %2054 = vst [vmem:[%s341 + $0x60] sm:$0xff] %v1964
        %2055 = vst [vmem:[%s341 + $0x68] sm:$0xff] %v1967
        %2056 = vst [vmem:[%s341 + $0x70] sm:$0xff] %v1972
        %2057 = vst [vmem:[%s341 + $0x78] sm:$0xff] %v1975
        %2058 = vst [vmem:[%s341 + $0x80] sm:$0xff] %v1980
        %2059 = vst [vmem:[%s341 + $0x88] sm:$0xff] %v1983
        %2060 = vst [vmem:[%s341 + $0x90] sm:$0xff] %v1988
        %2061 = vst [vmem:[%s341 + $0x98] sm:$0xff] %v1991
        %2062 = vst [vmem:[%s341 + $0xa0] sm:$0xff] %v1996
        %2063 = vst [vmem:[%s341 + $0xa8] sm:$0xff] %v1999
        %2064 = vst [vmem:[%s341 + $0xb0] sm:$0xff] %v2004
        %2065 = vst [vmem:[%s341 + $0xb8] sm:$0xff] %v2007
        %2066 = vst [vmem:[%s341 + $0xc0] sm:$0xff] %v2012
        %2067 = vst [vmem:[%s341 + $0xc8] sm:$0xff] %v2015
        %2068 = vst [vmem:[%s341 + $0xd0] sm:$0xff] %v2020
        %2069 = vst [vmem:[%s341 + $0xd8] sm:$0xff] %v2023
        %2070 = vst [vmem:[%s341 + $0xe0] sm:$0xff] %v2028
        %2071 = vst [vmem:[%s341 + $0xe8] sm:$0xff] %v2031
        %2072 = vst [vmem:[%s341 + $0xf0] sm:$0xff] %v2036
        %2073 = vst [vmem:[%s341 + $0xf8] sm:$0xff] %v2039
        %s2074 = sand.u32 %s226, 1
        %s2075 = scalar_lea.sflag [#allocation4], %s2074
        %s2076 = sand.u32 %s226, 1
        %s2077 = smul.addr %s2076, 256
        %s2078 = scalar_lea.vmem [#allocation5], %s2077
        // Predicated region
        $region61: #{tpu_custom_call.1} parent=55 // pred_check
          %p2079 = pneg %p236
        $region62: #{tpu_custom_call.1} parent=55 // pred_check_branch
          %2081 = sbr.rel (%p2079) target = $region64
        $region63: #{tpu_custom_call.1} parent=55 // pred_region
          %s2082 = smul.u32 32, %s24
          %s2084 = ssub.s32 4096, 4096
          %2085 = vsyncadd %s2075, %s2084
          %s2086 = smul.addr %s2082, 128
          %s2087 = scalar_lea.hbm %s9, %s2086
          %s2088 = sshll.u32 %s2078, 4
          %s2089 = int_to_ptr.vmem [resolvable:$true] %s2088
          %2094 = dma.vmem_to_hbm [thread:$0]  %s2089, 4096, %s2087, %s2075, 128, 128, 8
        $region64: #{tpu_custom_call.1} parent=55 // pred_fallthru
          _
      $region56: #{tpu_custom_call.1} parent=5 // pred_fallthru
        _
      %p2095 = scmp.le.s32.totalorder 2, %s19
      // Predicated region
      $region65: #{tpu_custom_call.1} parent=5 // pred_check
        %p2096 = pneg %p2095
      $region66: #{tpu_custom_call.1} parent=5 // pred_check_branch
        %2098 = sbr.rel (%p2096) target = $region68
      $region67: #{tpu_custom_call.1} parent=5 // pred_region
        %s2099 = ssub.s32 %s19, 2
        // Predicated region
        $region69: #{tpu_custom_call.1} parent=67 // pred_check
          %p2100 = pneg %p242
        $region70: #{tpu_custom_call.1} parent=67 // pred_check_branch
          %2102 = sbr.rel (%p2100) target = $region72
        $region71: #{tpu_custom_call.1} parent=67 // pred_region
          %s2103 = sand.u32 %s227, 1
          %s2104 = scalar_lea.sflag [#allocation4], %s2103
          %s2105 = sand.u32 %s227, 1
          %s2106 = smul.addr %s2105, 256
          %s2107 = scalar_lea.vmem [#allocation5], %s2106
          %2108 = dma.done %s2104, 4096
        $region72: #{tpu_custom_call.1} parent=67 // pred_fallthru
          _
      $region68: #{tpu_custom_call.1} parent=5 // pred_fallthru
        _
    $region6: #{tpu_custom_call.1} parent=1 // loop_footer
      %s23 = sadd.s32 1, %s19
    $region7: #{tpu_custom_call.1} parent=1 // loop_footer_branch
      %18 = sbr.rel target = $region3
    $region8: #{tpu_custom_call.1} parent=1 // loop_exit
      _
    %2109 = vsyncpa [#allocation3], 1
    %s2110 = scalar_lea.sflag [#allocation3], 1
    %2111 = vsyncpa %s2110, 1
    %2112 = vsyncpa [#allocation4], 1
    %s2113 = scalar_lea.sflag [#allocation4], 1
    %2114 = vsyncpa %s2113, 1

// kernel: tpu_custom_call.1
$region0: #{tpu_custom_call.1}
  #allocation0 [shape = 'u32[]', space=smem, size = 0x4, offset = 0x4, fixed_abs, tag = 'smem constant byte address 0x4 - core index']
  #allocation1 [shape = 'u32[144,128]{1,0:T(1,128)}', space=vmem, size = 0x12000, scoped, tag = 'internal scratch']
  %s0 = inlined_call_operand.vmem [shape: f32[512,16], index: 0, kind: input, shape index: {}]
  %s1 = inlined_call_operand.vmem [shape: bf16[16,256], index: 1, kind: input, shape index: {}]
  %s2 = inlined_call_operand.vmem [shape: f32[1,256], index: 2, kind: input, shape index: {}]
  %s3 = inlined_call_operand.vmem [shape: bf16[256,256], index: 3, kind: input, shape index: {}]
  %s4 = inlined_call_operand.vmem [shape: f32[1,256], index: 4, kind: input, shape index: {}]
  %s5 = inlined_call_operand.vmem [shape: bf16[256,256], index: 5, kind: input, shape index: {}]
  %s6 = inlined_call_operand.vmem [shape: f32[1,256], index: 6, kind: input, shape index: {}]
  %s7 = inlined_call_operand.hbm [shape: bf16[256,128], index: 7, kind: input, shape index: {}]
  %s8 = inlined_call_operand.vmem [shape: f32[1,128], index: 8, kind: input, shape index: {}]
  %s9 = inlined_call_operand.hbm [shape: f32[512,128], index: 9, kind: output, shape index: {}]
  %s10 = sld [smem:[#allocation0]]
  $region73: #{tpu_custom_call.1} parent=0
    _
  %s12 = ssub.s32 1, %s10
  %s13 = scalar_select 0, %s12, %s10
  $region1: #{tpu_custom_call.1} parent=0
    #allocation2 [shape = 'u8[65536]{0}', space=vmem, size = 0x10000, scoped, tag = 'input window, operand 7, single buffered']
    #allocation3 [shape = 's32[2]{0}', space=sflag, size = 0x8, scoped, tag = 'scoped memory for tpu_custom_call.1']
    #allocation4 [shape = 's32[2]{0}', space=sflag, size = 0x8, scoped, tag = 'scoped memory for tpu_custom_call.1']
    #allocation5 [shape = 'u8[262144]{0}', space=vmem, size = 0x40000, scoped, tag = 'output window, operand 0']
    %14 = vsyncpa [#allocation3], 0
    %15 = vsyncpa [#allocation4], 0
    %s16 = scalar_lea.sflag [#allocation4], 1
    %17 = vsyncpa %s16, 0
    loop: start=0, step=1, limit=4
    $region2: #{tpu_custom_call.1} parent=1 // loop_pre_header
      _
    $region3: #{tpu_custom_call.1} parent=1 // loop_header
      %s19 = sphi 0, %s23
      %p20 = scmp.ge.s32.totalorder %s19, 4
      %s29 = sphi 0, %s31
      %s32 = sphi 0, %s29
      %s33 = sphi 0, %s32
      %s49 = sphi 0, %s33
      %s53 = sphi 0, %s53
      %s55 = sphi 0, %s53
      %s56 = sphi 0, %s55
      %s70 = sphi 0, %s56
      %s74 = sphi 0, %s74
      %s76 = sphi 0, %s74
      %s77 = sphi 0, %s76
      %s91 = sphi 0, %s77
      %s95 = sphi 0, %s95
      %s97 = sphi 0, %s95
      %s98 = sphi 0, %s97
      %s112 = sphi 0, %s98
      %s116 = sphi 0, %s116
      %s118 = sphi 0, %s116
      %s119 = sphi 0, %s118
      %s133 = sphi 0, %s119
      %s137 = sphi 0, %s137
      %s139 = sphi 0, %s137
      %s140 = sphi 0, %s139
      %s154 = sphi 0, %s140
      %s158 = sphi 0, %s158
      %s160 = sphi 0, %s158
      %s161 = sphi 0, %s160
      %s175 = sphi 0, %s161
      %s179 = sphi 0, %s179
      %s181 = sphi 0, %s179
      %s182 = sphi 0, %s181
      %s196 = sphi 0, %s182
      %s200 = sphi 0, %s200
      %s202 = sphi 0, %s200
      %s203 = sphi 0, %s202
      %s217 = sphi 0, %s203
      %s223 = sphi 0, %s225
      %s226 = sphi 0, %s223
      %s227 = sphi 0, %s226
      %s243 = sphi 0, %s227
    $region4: #{tpu_custom_call.1} parent=1 // loop_header_branch
      %22 = sbr.rel (%p20) target = $region8
    $region5: #{tpu_custom_call.1} parent=1 // loop_body
      %s24 = ssub.s32 %s19, 1
      %s25 = ssub.s32 %s19, 2
      %s26 = sadd.s32 %s19, 1
      %s27 = ssub.s32 %s19, %s26
      %p28 = scmp.eq.s32.totalorder %s27, 0
      %s30 = sadd.s32 %s29, 1
      %s31 = scalar_select %p28, %s29, %s30
      %p34 = pneg %p28
      %p35 = scmp.eq.s32.totalorder %s19, 1
      %p36 = por %p34, %p35
      %p37 = scmp.ne.s32.totalorder %s29, %s32
      %p38 = scmp.eq.s32.totalorder %s19, 0
      %p39 = por %p37, %p38
      %p40 = scmp.ne.s32.totalorder %s29, %s32
      %p41 = scmp.eq.s32.totalorder %s24, 1
      %p42 = por %p40, %p41
      %p43 = scmp.ne.s32.totalorder %s32, %s33
      %p44 = scmp.eq.s32.totalorder %s24, 0
      %p45 = por %p43, %p44
      %p46 = scmp.ne.s32.totalorder %s32, %s33
      %p47 = scmp.eq.s32.totalorder %s25, 1
      %p48 = por %p46, %p47
      %p50 = scmp.ne.s32.totalorder %s33, %s49
      %p51 = scmp.eq.s32.totalorder %s25, 0
      %p52 = por %p50, %p51
      %s54 = sadd.s32 %s53, 1
      %p57 = scmp.eq.s32.totalorder %s19, 1
      %p58 = scmp.ne.s32.totalorder %s53, %s55
      %p59 = scmp.eq.s32.totalorder %s19, 0
      %p60 = por %p58, %p59
      %p61 = scmp.ne.s32.totalorder %s53, %s55
      %p62 = scmp.eq.s32.totalorder %s24, 1
      %p63 = por %p61, %p62
      %p64 = scmp.ne.s32.totalorder %s55, %s56
      %p65 = scmp.eq.s32.totalorder %s24, 0
      %p66 = por %p64, %p65
      %p67 = scmp.ne.s32.totalorder %s55, %s56
      %p68 = scmp.eq.s32.totalorder %s25, 1
      %p69 = por %p67, %p68
      %p71 = scmp.ne.s32.totalorder %s56, %s70
      %p72 = scmp.eq.s32.totalorder %s25, 0
      %p73 = por %p71, %p72
      %s75 = sadd.s32 %s74, 1
      %p78 = scmp.eq.s32.totalorder %s19, 1
      %p79 = scmp.ne.s32.totalorder %s74, %s76
      %p80 = scmp.eq.s32.totalorder %s19, 0
      %p81 = por %p79, %p80
      %p82 = scmp.ne.s32.totalorder %s74, %s76
      %p83 = scmp.eq.s32.totalorder %s24, 1
      %p84 = por %p82, %p83
      %p85 = scmp.ne.s32.totalorder %s76, %s77
      %p86 = scmp.eq.s32.totalorder %s24, 0
      %p87 = por %p85, %p86
      %p88 = scmp.ne.s32.totalorder %s76, %s77
      %p89 = scmp.eq.s32.totalorder %s25, 1
      %p90 = por %p88, %p89
      %p92 = scmp.ne.s32.totalorder %s77, %s91
      %p93 = scmp.eq.s32.totalorder %s25, 0
      %p94 = por %p92, %p93
      %s96 = sadd.s32 %s95, 1
      %p99 = scmp.eq.s32.totalorder %s19, 1
      %p100 = scmp.ne.s32.totalorder %s95, %s97
      %p101 = scmp.eq.s32.totalorder %s19, 0
      %p102 = por %p100, %p101
      %p103 = scmp.ne.s32.totalorder %s95, %s97
      %p104 = scmp.eq.s32.totalorder %s24, 1
      %p105 = por %p103, %p104
      %p106 = scmp.ne.s32.totalorder %s97, %s98
      %p107 = scmp.eq.s32.totalorder %s24, 0
      %p108 = por %p106, %p107
      %p109 = scmp.ne.s32.totalorder %s97, %s98
      %p110 = scmp.eq.s32.totalorder %s25, 1
      %p111 = por %p109, %p110
      %p113 = scmp.ne.s32.totalorder %s98, %s112
      %p114 = scmp.eq.s32.totalorder %s25, 0
      %p115 = por %p113, %p114
      %s117 = sadd.s32 %s116, 1
      %p120 = scmp.eq.s32.totalorder %s19, 1
      %p121 = scmp.ne.s32.totalorder %s116, %s118
      %p122 = scmp.eq.s32.totalorder %s19, 0
      %p123 = por %p121, %p122
      %p124 = scmp.ne.s32.totalorder %s116, %s118
      %p125 = scmp.eq.s32.totalorder %s24, 1
      %p126 = por %p124, %p125
      %p127 = scmp.ne.s32.totalorder %s118, %s119
      %p128 = scmp.eq.s32.totalorder %s24, 0
      %p129 = por %p127, %p128
      %p130 = scmp.ne.s32.totalorder %s118, %s119
      %p131 = scmp.eq.s32.totalorder %s25, 1
      %p132 = por %p130, %p131
      %p134 = scmp.ne.s32.totalorder %s119, %s133
      %p135 = scmp.eq.s32.totalorder %s25, 0
      %p136 = por %p134, %p135
      %s138 = sadd.s32 %s137, 1
      %p141 = scmp.eq.s32.totalorder %s19, 1
      %p142 = scmp.ne.s32.totalorder %s137, %s139
      %p143 = scmp.eq.s32.totalorder %s19, 0
      %p144 = por %p142, %p143
      %p145 = scmp.ne.s32.totalorder %s137, %s139
      %p146 = scmp.eq.s32.totalorder %s24, 1
      %p147 = por %p145, %p146
      %p148 = scmp.ne.s32.totalorder %s139, %s140
      %p149 = scmp.eq.s32.totalorder %s24, 0
      %p150 = por %p148, %p149
      %p151 = scmp.ne.s32.totalorder %s139, %s140
      %p152 = scmp.eq.s32.totalorder %s25, 1
      %p153 = por %p151, %p152
      %p155 = scmp.ne.s32.totalorder %s140, %s154
      %p156 = scmp.eq.s32.totalorder %s25, 0
      %p157 = por %p155, %p156
      %s159 = sadd.s32 %s158, 1
      %p162 = scmp.eq.s32.totalorder %s19, 1
      %p163 = scmp.ne.s32.totalorder %s158, %s160
      %p164 = scmp.eq.s32.totalorder %s19, 0
      %p165 = por %p163, %p164
      %p166 = scmp.ne.s32.totalorder %s158, %s160
      %p167 = scmp.eq.s32.totalorder %s24, 1
      %p168 = por %p166, %p167
      %p169 = scmp.ne.s32.totalorder %s160, %s161
      %p170 = scmp.eq.s32.totalorder %s24, 0
      %p171 = por %p169, %p170
      %p172 = scmp.ne.s32.totalorder %s160, %s161
      %p173 = scmp.eq.s32.totalorder %s25, 1
      %p174 = por %p172, %p173
      %p176 = scmp.ne.s32.totalorder %s161, %s175
      %p177 = scmp.eq.s32.totalorder %s25, 0
      %p178 = por %p176, %p177
      %s180 = sadd.s32 %s179, 1
      %p183 = scmp.eq.s32.totalorder %s19, 1
      %p184 = scmp.ne.s32.totalorder %s179, %s181
      %p185 = scmp.eq.s32.totalorder %s19, 0
      %p186 = por %p184, %p185
      %p187 = scmp.ne.s32.totalorder %s179, %s181
      %p188 = scmp.eq.s32.totalorder %s24, 1
      %p189 = por %p187, %p188
      %p190 = scmp.ne.s32.totalorder %s181, %s182
      %p191 = scmp.eq.s32.totalorder %s24, 0
      %p192 = por %p190, %p191
      %p193 = scmp.ne.s32.totalorder %s181, %s182
      %p194 = scmp.eq.s32.totalorder %s25, 1
      %p195 = por %p193, %p194
      %p197 = scmp.ne.s32.totalorder %s182, %s196
      %p198 = scmp.eq.s32.totalorder %s25, 0
      %p199 = por %p197, %p198
      %s201 = sadd.s32 %s200, 1
      %p204 = scmp.eq.s32.totalorder %s19, 1
      %p205 = scmp.ne.s32.totalorder %s200, %s202
      %p206 = scmp.eq.s32.totalorder %s19, 0
      %p207 = por %p205, %p206
      %p208 = scmp.ne.s32.totalorder %s200, %s202
      %p209 = scmp.eq.s32.totalorder %s24, 1
      %p210 = por %p208, %p209
      %p211 = scmp.ne.s32.totalorder %s202, %s203
      %p212 = scmp.eq.s32.totalorder %s24, 0
      %p213 = por %p211, %p212
      %p214 = scmp.ne.s32.totalorder %s202, %s203
      %p215 = scmp.eq.s32.totalorder %s25, 1
      %p216 = por %p214, %p215
      %p218 = scmp.ne.s32.totalorder %s203, %s217
      %p219 = scmp.eq.s32.totalorder %s25, 0
      %p220 = por %p218, %p219
      %s221 = ssub.s32 %s19, %s26
      %p222 = scmp.eq.s32.totalorder %s221, 0
      %s224 = sadd.s32 %s223, 1
      %s225 = scalar_select %p222, %s223, %s224
      %p228 = pneg %p222
      %p229 = scmp.eq.s32.totalorder %s19, 1
      %p230 = por %p228, %p229
      %p231 = scmp.ne.s32.totalorder %s223, %s226
      %p232 = scmp.eq.s32.totalorder %s19, 0
      %p233 = por %p231, %p232
      %p234 = scmp.ne.s32.totalorder %s223, %s226
      %p235 = scmp.eq.s32.totalorder %s24, 1
      %p236 = por %p234, %p235
      %p237 = scmp.ne.s32.totalorder %s226, %s227
      %p238 = scmp.eq.s32.totalorder %s24, 0
      %p239 = por %p237, %p238
      %p240 = scmp.ne.s32.totalorder %s226, %s227
      %p241 = scmp.eq.s32.totalorder %s25, 1
      %p242 = por %p240, %p241
      %p244 = scmp.ne.s32.totalorder %s227, %s243
      %p245 = scmp.eq.s32.totalorder %s25, 0
      %p246 = por %p244, %p245
      %p247 = scmp.le.s32.totalorder 1, %s19
      %p248 = scmp.lt.s32.totalorder %s19, 3
      %p249 = pnand %p247, %p248
      %p250 = pneg %p249
      // Predicated region
      $region9: #{tpu_custom_call.1} parent=5 // pred_check
        _
      $region10: #{tpu_custom_call.1} parent=5 // pred_check_branch
        %252 = sbr.rel (%p249) target = $region12
      $region11: #{tpu_custom_call.1} parent=5 // pred_region
        %s253 = ssub.s32 %s19, 1
        // Predicated region
        $region13: #{tpu_custom_call.1} parent=11 // pred_check
          %p254 = pneg %p66
        $region14: #{tpu_custom_call.1} parent=11 // pred_check_branch
          %256 = sbr.rel (%p254) target = $region16
        $region15: #{tpu_custom_call.1} parent=11 // pred_region
          _
        $region16: #{tpu_custom_call.1} parent=11 // pred_fallthru
          _
        // Predicated region
        $region17: #{tpu_custom_call.1} parent=11 // pred_check
          %p257 = pneg %p87
        $region18: #{tpu_custom_call.1} parent=11 // pred_check_branch
          %259 = sbr.rel (%p257) target = $region20
        $region19: #{tpu_custom_call.1} parent=11 // pred_region
          _
        $region20: #{tpu_custom_call.1} parent=11 // pred_fallthru
          _
        // Predicated region
        $region21: #{tpu_custom_call.1} parent=11 // pred_check
          %p260 = pneg %p108
        $region22: #{tpu_custom_call.1} parent=11 // pred_check_branch
          %262 = sbr.rel (%p260) target = $region24
        $region23: #{tpu_custom_call.1} parent=11 // pred_region
          _
        $region24: #{tpu_custom_call.1} parent=11 // pred_fallthru
          _
        // Predicated region
        $region25: #{tpu_custom_call.1} parent=11 // pred_check
          %p263 = pneg %p129
        $region26: #{tpu_custom_call.1} parent=11 // pred_check_branch
          %265 = sbr.rel (%p263) target = $region28
        $region27: #{tpu_custom_call.1} parent=11 // pred_region
          _
        $region28: #{tpu_custom_call.1} parent=11 // pred_fallthru
          _
        // Predicated region
        $region29: #{tpu_custom_call.1} parent=11 // pred_check
          %p266 = pneg %p150
        $region30: #{tpu_custom_call.1} parent=11 // pred_check_branch
          %268 = sbr.rel (%p266) target = $region32
        $region31: #{tpu_custom_call.1} parent=11 // pred_region
          _
        $region32: #{tpu_custom_call.1} parent=11 // pred_fallthru
          _
        // Predicated region
        $region33: #{tpu_custom_call.1} parent=11 // pred_check
          %p269 = pneg %p171
        $region34: #{tpu_custom_call.1} parent=11 // pred_check_branch
          %271 = sbr.rel (%p269) target = $region36
        $region35: #{tpu_custom_call.1} parent=11 // pred_region
          _
        $region36: #{tpu_custom_call.1} parent=11 // pred_fallthru
          _
        // Predicated region
        $region37: #{tpu_custom_call.1} parent=11 // pred_check
          %p272 = pneg %p192
        $region38: #{tpu_custom_call.1} parent=11 // pred_check_branch
          %274 = sbr.rel (%p272) target = $region40
        $region39: #{tpu_custom_call.1} parent=11 // pred_region
          %s276 = ssub.s32 2048, 2048
          %277 = vsyncadd [#allocation3], %s276
          %s278 = sshll.u32 [#allocation2], 4
          %s279 = int_to_ptr.vmem [resolvable:$true] %s278
          %284 = dma.hbm_to_vmem [thread:$0]  %s7, 2048, %s279, [#allocation3], 64, 64, 4
        $region40: #{tpu_custom_call.1} parent=11 // pred_fallthru
          _
        // Predicated region
        $region41: #{tpu_custom_call.1} parent=11 // pred_check
          %p285 = pneg %p213
        $region42: #{tpu_custom_call.1} parent=11 // pred_check_branch
          %287 = sbr.rel (%p285) target = $region44
        $region43: #{tpu_custom_call.1} parent=11 // pred_region
          _
        $region44: #{tpu_custom_call.1} parent=11 // pred_fallthru
          _
      $region12: #{tpu_custom_call.1} parent=5 // pred_fallthru
        _
      %p288 = scmp.lt.s32.totalorder %s19, 2
      // Predicated region
      $region45: #{tpu_custom_call.1} parent=5 // pred_check
        %p289 = pneg %p288
      $region46: #{tpu_custom_call.1} parent=5 // pred_check_branch
        %291 = sbr.rel (%p289) target = $region48
      $region47: #{tpu_custom_call.1} parent=5 // pred_region
        // Predicated region
        $region49: #{tpu_custom_call.1} parent=47 // pred_check
          %p292 = pneg %p39
        $region50: #{tpu_custom_call.1} parent=47 // pred_check_branch
          %294 = sbr.rel (%p292) target = $region52
        $region51: #{tpu_custom_call.1} parent=47 // pred_region
          %s295 = smul.u32 32, %s19
          %p296 = scmp.lt.s32.totalorder %s295, 63
          %s297 = scalar_select %p296, %s295, 63
          %s298 = smul.addr %s297, 8
          %s299 = scalar_lea.vmem %s0, %s298
          %s300 = smul.u32 32, %s19
        $region52: #{tpu_custom_call.1} parent=47 // pred_fallthru
          _
      $region48: #{tpu_custom_call.1} parent=5 // pred_fallthru
        _
      %p301 = scmp.le.s32.totalorder 1, %s19
      %p302 = scmp.lt.s32.totalorder %s19, 3
      %p303 = pnand %p301, %p302
      %p304 = pneg %p303
      // Predicated region
      $region53: #{tpu_custom_call.1} parent=5 // pred_check
        _
      $region54: #{tpu_custom_call.1} parent=5 // pred_check_branch
        %306 = sbr.rel (%p303) target = $region56
      $region55: #{tpu_custom_call.1} parent=5 // pred_region
        %s307 = ssub.s32 %s19, 1
        // Predicated region
        $region57: #{tpu_custom_call.1} parent=55 // pred_check
          %p308 = pneg %p192
        $region58: #{tpu_custom_call.1} parent=55 // pred_check_branch
          %310 = sbr.rel (%p308) target = $region60
        $region59: #{tpu_custom_call.1} parent=55 // pred_region
          %311 = dma.done [#allocation3], 2048
        $region60: #{tpu_custom_call.1} parent=55 // pred_fallthru
          _
        %s312 = smul.u32 32, %s24
        %p313 = scmp.lt.s32.totalorder %s312, 63
        %s314 = scalar_select %p313, %s312, 63
        %s315 = smul.addr %s314, 8
        %s316 = scalar_lea.vmem %s0, %s315
        %p317 = pneg %p45
        %p318 = pneg %p42
        %p319 = pneg %p66
        %p320 = pneg %p63
        %p321 = pneg %p87
        %p322 = pneg %p84
        %p323 = pneg %p108
        %p324 = pneg %p105
        %p325 = pneg %p129
        %p326 = pneg %p126
        %p327 = pneg %p150
        %p328 = pneg %p147
        %p329 = pneg %p171
        %p330 = pneg %p168
        %p331 = pneg %p192
        %p332 = pneg %p189
        %p333 = pneg %p213
        %p334 = pneg %p210
        %p335 = pneg %p239
        %p336 = pneg %p236
        %s337 = sand.u32 %s226, 1
        %s338 = scalar_lea.sflag [#allocation4], %s337
        %s339 = sand.u32 %s226, 1
        %s340 = smul.addr %s339, 256
        %s341 = scalar_lea.vmem [#allocation5], %s340
        %s342 = smul.u32 32, %s24
        %p343 = scmp.lt.s32.totalorder %s342, 63
        %s344 = scalar_select %p343, %s342, 63
        %s345 = smul.addr %s344, 8
        %s346 = scalar_lea.vmem %s0, %s345
        %s347 = smul.u32 32, %s24
        %s348 = smul.u32 32, %s24
        %v350 = vld [vmem:[%s346] sm:$0xff]
        %v351 = vld [vmem:[%s346 + $0x8] sm:$0xff]
        %v352 = vld [vmem:[%s346 + $0x10] sm:$0xff]
        %v353 = vld [vmem:[%s346 + $0x18] sm:$0xff]
        %v354 = vld [vmem:[%s346 + $0x20] sm:$0xff]
        %v355 = vld [vmem:[%s346 + $0x28] sm:$0xff]
        %v356 = vld [vmem:[%s346 + $0x30] sm:$0xff]
        %v357 = vld [vmem:[%s346 + $0x38] sm:$0xff]
        %v358 = vld [vmem:[%s346 + $0x40] sm:$0xff]
        %v359 = vld [vmem:[%s346 + $0x48] sm:$0xff]
        %v360 = vld [vmem:[%s346 + $0x50] sm:$0xff]
        %v361 = vld [vmem:[%s346 + $0x58] sm:$0xff]
        %v362 = vld [vmem:[%s346 + $0x60] sm:$0xff]
        %v363 = vld [vmem:[%s346 + $0x68] sm:$0xff]
        %v364 = vld [vmem:[%s346 + $0x70] sm:$0xff]
        %v365 = vld [vmem:[%s346 + $0x78] sm:$0xff]
        %v366 = vld [vmem:[%s346 + $0x80] sm:$0xff]
        %v367 = vld [vmem:[%s346 + $0x88] sm:$0xff]
        %v368 = vld [vmem:[%s346 + $0x90] sm:$0xff]
        %v369 = vld [vmem:[%s346 + $0x98] sm:$0xff]
        %v370 = vld [vmem:[%s346 + $0xa0] sm:$0xff]
        %v371 = vld [vmem:[%s346 + $0xa8] sm:$0xff]
        %v372 = vld [vmem:[%s346 + $0xb0] sm:$0xff]
        %v373 = vld [vmem:[%s346 + $0xb8] sm:$0xff]
        %v374 = vld [vmem:[%s346 + $0xc0] sm:$0xff]
        %v375 = vld [vmem:[%s346 + $0xc8] sm:$0xff]
        %v376 = vld [vmem:[%s346 + $0xd0] sm:$0xff]
        %v377 = vld [vmem:[%s346 + $0xd8] sm:$0xff]
        %v378 = vld [vmem:[%s346 + $0xe0] sm:$0xff]
        %v379 = vld [vmem:[%s346 + $0xe8] sm:$0xff]
        %v380 = vld [vmem:[%s346 + $0xf0] sm:$0xff]
        %v381 = vld [vmem:[%s346 + $0xf8] sm:$0xff]
        %v382 = vpack.c.bf16 %v351, %v350
        %v383 = vpack.c.bf16 %v353, %v352
        %v384 = vpack.c.bf16 %v355, %v354
        %v385 = vpack.c.bf16 %v357, %v356
        %v386 = vpack.c.bf16 %v359, %v358
        %v387 = vpack.c.bf16 %v361, %v360
        %v388 = vpack.c.bf16 %v363, %v362
        %v389 = vpack.c.bf16 %v365, %v364
        %v390 = vpack.c.bf16 %v367, %v366
        %v391 = vpack.c.bf16 %v369, %v368
        %v392 = vpack.c.bf16 %v371, %v370
        %v393 = vpack.c.bf16 %v373, %v372
        %v394 = vpack.c.bf16 %v375, %v374
        %v395 = vpack.c.bf16 %v377, %v376
        %v396 = vpack.c.bf16 %v379, %v378
        %v397 = vpack.c.bf16 %v381, %v380
        %v398 = vld [vmem:[%s1] sm:$0xff]
        %v399 = vld [vmem:[%s1 + $0x8] sm:$0xff]
        %v400 = vld [vmem:[%s2] sm:$0x3]
        %v402 = vlaneseq
        %v403 = vshrl.u32 %v402, 7
        %v404 = vsub.s32 0, %v403
        %v405 = vrot.slane %v400, %v404
        %v406 = vlaneseq
        %v407 = vshrl.u32 %v406, 7
        %v408 = vsub.s32 1, %v407
        %v409 = vrot.slane %v400, %v408
        %v414 = vunpack.c.l.b16 %v398
        %v415 = vunpack.c.h.b16 %v398
        %v416 = vunpack.c.l.b16 %v399
        %v417 = vunpack.c.h.b16 %v399
        %v418 = vpack.c.b16 %v416, %v414
        %v419 = vpack.c.b16 %v417, %v415
        %vm422 = vcmask 130048
        %v424 = vsel %vm422, %v382, 0
        %v427 = vsel %vm422, %v383, 0
        %v430 = vsel %vm422, %v384, 0
        %v433 = vsel %vm422, %v385, 0
        %v436 = vsel %vm422, %v386, 0
        %v439 = vsel %vm422, %v387, 0
        %v442 = vsel %vm422, %v388, 0
        %v445 = vsel %vm422, %v389, 0
        %v448 = vsel %vm422, %v390, 0
        %v451 = vsel %vm422, %v391, 0
        %v454 = vsel %vm422, %v392, 0
        %v457 = vsel %vm422, %v393, 0
        %v460 = vsel %vm422, %v394, 0
        %v463 = vsel %vm422, %v395, 0
        %v466 = vsel %vm422, %v396, 0
        %v469 = vsel %vm422, %v397, 0
        %471 = vmatprep.subr.bf16.mxu0 0
        %472 = vmatpush1.bf16.msra.mxu0 0
        %473 = vmatprep.subr.bf16.mxu0 0
        %474 = vmatpush1.bf16.msra.mxu0 0
        %475 = vmatprep.subr.bf16.mxu0 0
        %476 = vmatpush1.bf16.msra.mxu0 0
        %477 = vmatprep.subr.bf16.mxu0 0
        %478 = vmatpush1.bf16.msra.mxu0 0
        %479 = vmatprep.subr.bf16.mxu0 0
        %480 = vmatpush1.bf16.msra.mxu0 0
        %481 = vmatprep.subr.bf16.mxu0 0
        %482 = vmatpush1.bf16.msra.mxu0 0
        %483 = vmatprep.subr.bf16.mxu0 0
        %484 = vmatpush1.bf16.msra.mxu0 0
        %485 = vmatprep.subr.bf16.mxu0 %v419
        %486 = vmatpush1.bf16.msra.mxu0 %v418
        %487 = vmatprep.subr.bf16.mxu0 0
        %488 = vmatpush2.bf16.msra.mxu0 0
        %489 = vmatprep.subr.bf16.mxu0 0
        %490 = vmatpush2.bf16.msra.mxu0 0
        %491 = vmatprep.subr.bf16.mxu0 0
        %492 = vmatpush2.bf16.msra.mxu0 0
        %493 = vmatprep.subr.bf16.mxu0 0
        %494 = vmatpush2.bf16.msra.mxu0 0
        %495 = vmatprep.subr.bf16.mxu0 0
        %496 = vmatpush2.bf16.msra.mxu0 0
        %497 = vmatprep.subr.bf16.mxu0 0
        %498 = vmatpush2.bf16.msra.mxu0 0
        %499 = vmatprep.subr.bf16.mxu0 0
        %500 = vmatpush2.bf16.msra.mxu0 0
        %501 = vmatprep.subr.bf16.mxu0 0
        %502 = vmatpush2.bf16.msra.mxu0 0
        %503 = vmatprep.mubr.bf16.mxu0 0
        %504 = vmatmul.mubr.bf16.gmra.mxu0 %v424
        %v505 = vpop.f32.mrf.mxu0
        %v506 = vadd.f32 %v405, %v505
        %v507 = vpop.f32.mrf.mxu0
        %v508 = vadd.f32 %v409, %v507
        %v509 = vpop.f32.mrf.mxu0
        %v510 = vadd.f32 %v405, %v509
        %v511 = vpop.f32.mrf.mxu0
        %v512 = vadd.f32 %v409, %v511
        %513 = vmatprep.mubr.bf16.mxu0 0
        %514 = vmatmul.mubr.bf16.gmra.mxu0 %v427
        %v515 = vpop.f32.mrf.mxu0
        %v516 = vadd.f32 %v405, %v515
        %v517 = vpop.f32.mrf.mxu0
        %v518 = vadd.f32 %v409, %v517
        %v519 = vpop.f32.mrf.mxu0
        %v520 = vadd.f32 %v405, %v519
        %v521 = vpop.f32.mrf.mxu0
        %v522 = vadd.f32 %v409, %v521
        %523 = vmatprep.mubr.bf16.mxu0 0
        %524 = vmatmul.mubr.bf16.gmra.mxu0 %v430
        %v525 = vpop.f32.mrf.mxu0
        %v526 = vadd.f32 %v405, %v525
        %v527 = vpop.f32.mrf.mxu0
        %v528 = vadd.f32 %v409, %v527
        %v529 = vpop.f32.mrf.mxu0
        %v530 = vadd.f32 %v405, %v529
        %v531 = vpop.f32.mrf.mxu0
        %v532 = vadd.f32 %v409, %v531
        %533 = vmatprep.mubr.bf16.mxu0 0
        %534 = vmatmul.mubr.bf16.gmra.mxu0 %v433
        %v535 = vpop.f32.mrf.mxu0
        %v536 = vadd.f32 %v405, %v535
        %v537 = vpop.f32.mrf.mxu0
        %v538 = vadd.f32 %v409, %v537
        %v539 = vpop.f32.mrf.mxu0
        %v540 = vadd.f32 %v405, %v539
        %v541 = vpop.f32.mrf.mxu0
        %v542 = vadd.f32 %v409, %v541
        %543 = vmatprep.mubr.bf16.mxu0 0
        %544 = vmatmul.mubr.bf16.gmra.mxu0 %v436
        %v545 = vpop.f32.mrf.mxu0
        %v546 = vadd.f32 %v405, %v545
        %v547 = vpop.f32.mrf.mxu0
        %v548 = vadd.f32 %v409, %v547
        %v549 = vpop.f32.mrf.mxu0
        %v550 = vadd.f32 %v405, %v549
        %v551 = vpop.f32.mrf.mxu0
        %v552 = vadd.f32 %v409, %v551
        %553 = vmatprep.mubr.bf16.mxu0 0
        %554 = vmatmul.mubr.bf16.gmra.mxu0 %v439
        %v555 = vpop.f32.mrf.mxu0
        %v556 = vadd.f32 %v405, %v555
        %v557 = vpop.f32.mrf.mxu0
        %v558 = vadd.f32 %v409, %v557
        %v559 = vpop.f32.mrf.mxu0
        %v560 = vadd.f32 %v405, %v559
        %v561 = vpop.f32.mrf.mxu0
        %v562 = vadd.f32 %v409, %v561
        %563 = vmatprep.mubr.bf16.mxu0 0
        %564 = vmatmul.mubr.bf16.gmra.mxu0 %v442
        %v565 = vpop.f32.mrf.mxu0
        %v566 = vadd.f32 %v405, %v565
        %v567 = vpop.f32.mrf.mxu0
        %v568 = vadd.f32 %v409, %v567
        %v569 = vpop.f32.mrf.mxu0
        %v570 = vadd.f32 %v405, %v569
        %v571 = vpop.f32.mrf.mxu0
        %v572 = vadd.f32 %v409, %v571
        %573 = vmatprep.mubr.bf16.mxu0 0
        %574 = vmatmul.mubr.bf16.gmra.mxu0 %v445
        %v575 = vpop.f32.mrf.mxu0
        %v576 = vadd.f32 %v405, %v575
        %v577 = vpop.f32.mrf.mxu0
        %v578 = vadd.f32 %v409, %v577
        %v579 = vpop.f32.mrf.mxu0
        %v580 = vadd.f32 %v405, %v579
        %v581 = vpop.f32.mrf.mxu0
        %v582 = vadd.f32 %v409, %v581
        %583 = vmatprep.mubr.bf16.mxu0 0
        %584 = vmatmul.mubr.bf16.gmra.mxu0 %v448
        %v585 = vpop.f32.mrf.mxu0
        %v586 = vadd.f32 %v405, %v585
        %v587 = vpop.f32.mrf.mxu0
        %v588 = vadd.f32 %v409, %v587
        %v589 = vpop.f32.mrf.mxu0
        %v590 = vadd.f32 %v405, %v589
        %v591 = vpop.f32.mrf.mxu0
        %v592 = vadd.f32 %v409, %v591
        %593 = vmatprep.mubr.bf16.mxu0 0
        %594 = vmatmul.mubr.bf16.gmra.mxu0 %v451
        %v595 = vpop.f32.mrf.mxu0
        %v596 = vadd.f32 %v405, %v595
        %v597 = vpop.f32.mrf.mxu0
        %v598 = vadd.f32 %v409, %v597
        %v599 = vpop.f32.mrf.mxu0
        %v600 = vadd.f32 %v405, %v599
        %v601 = vpop.f32.mrf.mxu0
        %v602 = vadd.f32 %v409, %v601
        %603 = vmatprep.mubr.bf16.mxu0 0
        %604 = vmatmul.mubr.bf16.gmra.mxu0 %v454
        %v605 = vpop.f32.mrf.mxu0
        %v606 = vadd.f32 %v405, %v605
        %v607 = vpop.f32.mrf.mxu0
        %v608 = vadd.f32 %v409, %v607
        %v609 = vpop.f32.mrf.mxu0
        %v610 = vadd.f32 %v405, %v609
        %v611 = vpop.f32.mrf.mxu0
        %v612 = vadd.f32 %v409, %v611
        %613 = vmatprep.mubr.bf16.mxu0 0
        %614 = vmatmul.mubr.bf16.gmra.mxu0 %v457
        %v615 = vpop.f32.mrf.mxu0
        %v616 = vadd.f32 %v405, %v615
        %v617 = vpop.f32.mrf.mxu0
        %v618 = vadd.f32 %v409, %v617
        %v619 = vpop.f32.mrf.mxu0
        %v620 = vadd.f32 %v405, %v619
        %v621 = vpop.f32.mrf.mxu0
        %v622 = vadd.f32 %v409, %v621
        %623 = vmatprep.mubr.bf16.mxu0 0
        %624 = vmatmul.mubr.bf16.gmra.mxu0 %v460
        %v625 = vpop.f32.mrf.mxu0
        %v626 = vadd.f32 %v405, %v625
        %v627 = vpop.f32.mrf.mxu0
        %v628 = vadd.f32 %v409, %v627
        %v629 = vpop.f32.mrf.mxu0
        %v630 = vadd.f32 %v405, %v629
        %v631 = vpop.f32.mrf.mxu0
        %v632 = vadd.f32 %v409, %v631
        %633 = vmatprep.mubr.bf16.mxu0 0
        %634 = vmatmul.mubr.bf16.gmra.mxu0 %v463
        %v635 = vpop.f32.mrf.mxu0
        %v636 = vadd.f32 %v405, %v635
        %v637 = vpop.f32.mrf.mxu0
        %v638 = vadd.f32 %v409, %v637
        %v639 = vpop.f32.mrf.mxu0
        %v640 = vadd.f32 %v405, %v639
        %v641 = vpop.f32.mrf.mxu0
        %v642 = vadd.f32 %v409, %v641
        %643 = vmatprep.mubr.bf16.mxu0 0
        %644 = vmatmul.mubr.bf16.gmra.mxu0 %v466
        %v645 = vpop.f32.mrf.mxu0
        %v646 = vadd.f32 %v405, %v645
        %v647 = vpop.f32.mrf.mxu0
        %v648 = vadd.f32 %v409, %v647
        %v649 = vpop.f32.mrf.mxu0
        %v650 = vadd.f32 %v405, %v649
        %v651 = vpop.f32.mrf.mxu0
        %v652 = vadd.f32 %v409, %v651
        %653 = vmatprep.mubr.bf16.mxu0 0
        %654 = vmatmul.mubr.bf16.gmra.mxu0 %v469
        %v655 = vpop.f32.mrf.mxu0
        %v656 = vadd.f32 %v405, %v655
        %v657 = vpop.f32.mrf.mxu0
        %v658 = vadd.f32 %v409, %v657
        %v659 = vpop.f32.mrf.mxu0
        %v660 = vadd.f32 %v405, %v659
        %v661 = vpop.f32.mrf.mxu0
        %v662 = vadd.f32 %v409, %v661
        %663 = vdwg.mxu0
        %v664 = vmax.f32 %v506, 0.0
        %v665 = vmax.f32 %v508, 0.0
        %v666 = vmax.f32 %v510, 0.0
        %v667 = vmax.f32 %v512, 0.0
        %v668 = vmax.f32 %v516, 0.0
        %v669 = vmax.f32 %v518, 0.0
        %v670 = vmax.f32 %v520, 0.0
        %v671 = vmax.f32 %v522, 0.0
        %v672 = vmax.f32 %v526, 0.0
        %v673 = vmax.f32 %v528, 0.0
        %v674 = vmax.f32 %v530, 0.0
        %v675 = vmax.f32 %v532, 0.0
        %v676 = vmax.f32 %v536, 0.0
        %v677 = vmax.f32 %v538, 0.0
        %v678 = vmax.f32 %v540, 0.0
        %v679 = vmax.f32 %v542, 0.0
        %v680 = vmax.f32 %v546, 0.0
        %v681 = vmax.f32 %v548, 0.0
        %v682 = vmax.f32 %v550, 0.0
        %v683 = vmax.f32 %v552, 0.0
        %v684 = vmax.f32 %v556, 0.0
        %v685 = vmax.f32 %v558, 0.0
        %v686 = vmax.f32 %v560, 0.0
        %v687 = vmax.f32 %v562, 0.0
        %v688 = vmax.f32 %v566, 0.0
        %v689 = vmax.f32 %v568, 0.0
        %v690 = vmax.f32 %v570, 0.0
        %v691 = vmax.f32 %v572, 0.0
        %v692 = vmax.f32 %v576, 0.0
        %v693 = vmax.f32 %v578, 0.0
        %v694 = vmax.f32 %v580, 0.0
        %v695 = vmax.f32 %v582, 0.0
        %v696 = vmax.f32 %v586, 0.0
        %v697 = vmax.f32 %v588, 0.0
        %v698 = vmax.f32 %v590, 0.0
        %v699 = vmax.f32 %v592, 0.0
        %v700 = vmax.f32 %v596, 0.0
        %v701 = vmax.f32 %v598, 0.0
        %v702 = vmax.f32 %v600, 0.0
        %v703 = vmax.f32 %v602, 0.0
        %v704 = vmax.f32 %v606, 0.0
        %v705 = vmax.f32 %v608, 0.0
        %v706 = vmax.f32 %v610, 0.0
        %v707 = vmax.f32 %v612, 0.0
        %v708 = vmax.f32 %v616, 0.0
        %v709 = vmax.f32 %v618, 0.0
        %v710 = vmax.f32 %v620, 0.0
        %v711 = vmax.f32 %v622, 0.0
        %v712 = vmax.f32 %v626, 0.0
        %v713 = vmax.f32 %v628, 0.0
        %v714 = vmax.f32 %v630, 0.0
        %v715 = vmax.f32 %v632, 0.0
        %v716 = vmax.f32 %v636, 0.0
        %v717 = vmax.f32 %v638, 0.0
        %v718 = vmax.f32 %v640, 0.0
        %v719 = vmax.f32 %v642, 0.0
        %v720 = vmax.f32 %v646, 0.0
        %v721 = vmax.f32 %v648, 0.0
        %v722 = vmax.f32 %v650, 0.0
        %v723 = vmax.f32 %v652, 0.0
        %v724 = vmax.f32 %v656, 0.0
        %v725 = vmax.f32 %v658, 0.0
        %v726 = vmax.f32 %v660, 0.0
        %v727 = vmax.f32 %v662, 0.0
        %v728 = vpack.c.bf16 %v666, %v664
        %v729 = vpack.c.bf16 %v667, %v665
        %v730 = vpack.c.bf16 %v670, %v668
        %v731 = vpack.c.bf16 %v671, %v669
        %v732 = vpack.c.bf16 %v674, %v672
        %v733 = vpack.c.bf16 %v675, %v673
        %v734 = vpack.c.bf16 %v678, %v676
        %v735 = vpack.c.bf16 %v679, %v677
        %v736 = vpack.c.bf16 %v682, %v680
        %v737 = vpack.c.bf16 %v683, %v681
        %v738 = vpack.c.bf16 %v686, %v684
        %v739 = vpack.c.bf16 %v687, %v685
        %v740 = vpack.c.bf16 %v690, %v688
        %v741 = vpack.c.bf16 %v691, %v689
        %v742 = vpack.c.bf16 %v694, %v692
        %v743 = vpack.c.bf16 %v695, %v693
        %v744 = vpack.c.bf16 %v698, %v696
        %v745 = vpack.c.bf16 %v699, %v697
        %v746 = vpack.c.bf16 %v702, %v700
        %v747 = vpack.c.bf16 %v703, %v701
        %v748 = vpack.c.bf16 %v706, %v704
        %v749 = vpack.c.bf16 %v707, %v705
        %v750 = vpack.c.bf16 %v710, %v708
        %v751 = vpack.c.bf16 %v711, %v709
        %v752 = vpack.c.bf16 %v714, %v712
        %v753 = vpack.c.bf16 %v715, %v713
        %v754 = vpack.c.bf16 %v718, %v716
        %v755 = vpack.c.bf16 %v719, %v717
        %v756 = vpack.c.bf16 %v722, %v720
        %v757 = vpack.c.bf16 %v723, %v721
        %v758 = vpack.c.bf16 %v726, %v724
        %v759 = vpack.c.bf16 %v727, %v725
        %v760 = vld [vmem:[%s3] sm:$0xff]
        %v761 = vld [vmem:[%s3 + $0x8] sm:$0xff]
        %v762 = vld [vmem:[%s3 + $0x10] sm:$0xff]
        %v763 = vld [vmem:[%s3 + $0x18] sm:$0xff]
        %v764 = vld [vmem:[%s3 + $0x20] sm:$0xff]
        %v765 = vld [vmem:[%s3 + $0x28] sm:$0xff]
        %v766 = vld [vmem:[%s3 + $0x30] sm:$0xff]
        %v767 = vld [vmem:[%s3 + $0x38] sm:$0xff]
        %v768 = vld [vmem:[%s3 + $0x40] sm:$0xff]
        %v769 = vld [vmem:[%s3 + $0x48] sm:$0xff]
        %v770 = vld [vmem:[%s3 + $0x50] sm:$0xff]
        %v771 = vld [vmem:[%s3 + $0x58] sm:$0xff]
        %v772 = vld [vmem:[%s3 + $0x60] sm:$0xff]
        %v773 = vld [vmem:[%s3 + $0x68] sm:$0xff]
        %v774 = vld [vmem:[%s3 + $0x70] sm:$0xff]
        %v775 = vld [vmem:[%s3 + $0x78] sm:$0xff]
        %v776 = vld [vmem:[%s3 + $0x80] sm:$0xff]
        %v777 = vld [vmem:[%s3 + $0x88] sm:$0xff]
        %v778 = vld [vmem:[%s3 + $0x90] sm:$0xff]
        %v779 = vld [vmem:[%s3 + $0x98] sm:$0xff]
        %v780 = vld [vmem:[%s3 + $0xa0] sm:$0xff]
        %v781 = vld [vmem:[%s3 + $0xa8] sm:$0xff]
        %v782 = vld [vmem:[%s3 + $0xb0] sm:$0xff]
        %v783 = vld [vmem:[%s3 + $0xb8] sm:$0xff]
        %v784 = vld [vmem:[%s3 + $0xc0] sm:$0xff]
        %v785 = vld [vmem:[%s3 + $0xc8] sm:$0xff]
        %v786 = vld [vmem:[%s3 + $0xd0] sm:$0xff]
        %v787 = vld [vmem:[%s3 + $0xd8] sm:$0xff]
        %v788 = vld [vmem:[%s3 + $0xe0] sm:$0xff]
        %v789 = vld [vmem:[%s3 + $0xe8] sm:$0xff]
        %v790 = vld [vmem:[%s3 + $0xf0] sm:$0xff]
        %v791 = vld [vmem:[%s3 + $0xf8] sm:$0xff]
        %v792 = vld [vmem:[%s4] sm:$0x3]
        %v794 = vlaneseq
        %v795 = vshrl.u32 %v794, 7
        %v796 = vsub.s32 0, %v795
        %v797 = vrot.slane %v792, %v796
        %v798 = vlaneseq
        %v799 = vshrl.u32 %v798, 7
        %v800 = vsub.s32 1, %v799
        %v801 = vrot.slane %v792, %v800
        %v836 = vunpack.c.l.b16 %v760
        %v837 = vunpack.c.h.b16 %v760
        %v838 = vunpack.c.l.b16 %v761
        %v839 = vunpack.c.h.b16 %v761
        %v840 = vunpack.c.l.b16 %v762
        %v841 = vunpack.c.h.b16 %v762
        %v842 = vunpack.c.l.b16 %v763
        %v843 = vunpack.c.h.b16 %v763
        %v844 = vunpack.c.l.b16 %v764
        %v845 = vunpack.c.h.b16 %v764
        %v846 = vunpack.c.l.b16 %v765
        %v847 = vunpack.c.h.b16 %v765
        %v848 = vunpack.c.l.b16 %v766
        %v849 = vunpack.c.h.b16 %v766
        %v850 = vunpack.c.l.b16 %v767
        %v851 = vunpack.c.h.b16 %v767
        %v852 = vunpack.c.l.b16 %v768
        %v853 = vunpack.c.h.b16 %v768
        %v854 = vunpack.c.l.b16 %v769
        %v855 = vunpack.c.h.b16 %v769
        %v856 = vunpack.c.l.b16 %v770
        %v857 = vunpack.c.h.b16 %v770
        %v858 = vunpack.c.l.b16 %v771
        %v859 = vunpack.c.h.b16 %v771
        %v860 = vunpack.c.l.b16 %v772
        %v861 = vunpack.c.h.b16 %v772
        %v862 = vunpack.c.l.b16 %v773
        %v863 = vunpack.c.h.b16 %v773
        %v864 = vunpack.c.l.b16 %v774
        %v865 = vunpack.c.h.b16 %v774
        %v866 = vunpack.c.l.b16 %v775
        %v867 = vunpack.c.h.b16 %v775
        %v868 = vunpack.c.l.b16 %v776
        %v869 = vunpack.c.h.b16 %v776
        %v870 = vunpack.c.l.b16 %v777
        %v871 = vunpack.c.h.b16 %v777
        %v872 = vunpack.c.l.b16 %v778
        %v873 = vunpack.c.h.b16 %v778
        %v874 = vunpack.c.l.b16 %v779
        %v875 = vunpack.c.h.b16 %v779
        %v876 = vunpack.c.l.b16 %v780
        %v877 = vunpack.c.h.b16 %v780
        %v878 = vunpack.c.l.b16 %v781
        %v879 = vunpack.c.h.b16 %v781
        %v880 = vunpack.c.l.b16 %v782
        %v881 = vunpack.c.h.b16 %v782
        %v882 = vunpack.c.l.b16 %v783
        %v883 = vunpack.c.h.b16 %v783
        %v884 = vunpack.c.l.b16 %v784
        %v885 = vunpack.c.h.b16 %v784
        %v886 = vunpack.c.l.b16 %v785
        %v887 = vunpack.c.h.b16 %v785
        %v888 = vunpack.c.l.b16 %v786
        %v889 = vunpack.c.h.b16 %v786
        %v890 = vunpack.c.l.b16 %v787
        %v891 = vunpack.c.h.b16 %v787
        %v892 = vunpack.c.l.b16 %v788
        %v893 = vunpack.c.h.b16 %v788
        %v894 = vunpack.c.l.b16 %v789
        %v895 = vunpack.c.h.b16 %v789
        %v896 = vunpack.c.l.b16 %v790
        %v897 = vunpack.c.h.b16 %v790
        %v898 = vunpack.c.l.b16 %v791
        %v899 = vunpack.c.h.b16 %v791
        %v900 = vpack.c.b16 %v838, %v836
        %v901 = vpack.c.b16 %v839, %v837
        %v902 = vpack.c.b16 %v842, %v840
        %v903 = vpack.c.b16 %v843, %v841
        %v904 = vpack.c.b16 %v846, %v844
        %v905 = vpack.c.b16 %v847, %v845
        %v906 = vpack.c.b16 %v850, %v848
        %v907 = vpack.c.b16 %v851, %v849
        %v908 = vpack.c.b16 %v854, %v852
        %v909 = vpack.c.b16 %v855, %v853
        %v910 = vpack.c.b16 %v858, %v856
        %v911 = vpack.c.b16 %v859, %v857
        %v912 = vpack.c.b16 %v862, %v860
        %v913 = vpack.c.b16 %v863, %v861
        %v914 = vpack.c.b16 %v866, %v864
        %v915 = vpack.c.b16 %v867, %v865
        %v916 = vpack.c.b16 %v870, %v868
        %v917 = vpack.c.b16 %v871, %v869
        %v918 = vpack.c.b16 %v874, %v872
        %v919 = vpack.c.b16 %v875, %v873
        %v920 = vpack.c.b16 %v878, %v876
        %v921 = vpack.c.b16 %v879, %v877
        %v922 = vpack.c.b16 %v882, %v880
        %v923 = vpack.c.b16 %v883, %v881
        %v924 = vpack.c.b16 %v886, %v884
        %v925 = vpack.c.b16 %v887, %v885
        %v926 = vpack.c.b16 %v890, %v888
        %v927 = vpack.c.b16 %v891, %v889
        %v928 = vpack.c.b16 %v894, %v892
        %v929 = vpack.c.b16 %v895, %v893
        %v930 = vpack.c.b16 %v898, %v896
        %v931 = vpack.c.b16 %v899, %v897
        %964 = vmatprep.subr.bf16.mxu0 %v915
        %965 = vmatpush1.bf16.msra.mxu0 %v914
        %966 = vmatprep.subr.bf16.mxu0 %v913
        %967 = vmatpush1.bf16.msra.mxu0 %v912
        %968 = vmatprep.subr.bf16.mxu0 %v911
        %969 = vmatpush1.bf16.msra.mxu0 %v910
        %970 = vmatprep.subr.bf16.mxu0 %v909
        %971 = vmatpush1.bf16.msra.mxu0 %v908
        %972 = vmatprep.subr.bf16.mxu0 %v907
        %973 = vmatpush1.bf16.msra.mxu0 %v906
        %974 = vmatprep.subr.bf16.mxu0 %v905
        %975 = vmatpush1.bf16.msra.mxu0 %v904
        %976 = vmatprep.subr.bf16.mxu0 %v903
        %977 = vmatpush1.bf16.msra.mxu0 %v902
        %978 = vmatprep.subr.bf16.mxu0 %v901
        %979 = vmatpush1.bf16.msra.mxu0 %v900
        %980 = vmatprep.subr.bf16.mxu0 %v931
        %981 = vmatpush2.bf16.msra.mxu0 %v930
        %982 = vmatprep.subr.bf16.mxu0 %v929
        %983 = vmatpush2.bf16.msra.mxu0 %v928
        %984 = vmatprep.subr.bf16.mxu0 %v927
        %985 = vmatpush2.bf16.msra.mxu0 %v926
        %986 = vmatprep.subr.bf16.mxu0 %v925
        %987 = vmatpush2.bf16.msra.mxu0 %v924
        %988 = vmatprep.subr.bf16.mxu0 %v923
        %989 = vmatpush2.bf16.msra.mxu0 %v922
        %990 = vmatprep.subr.bf16.mxu0 %v921
        %991 = vmatpush2.bf16.msra.mxu0 %v920
        %992 = vmatprep.subr.bf16.mxu0 %v919
        %993 = vmatpush2.bf16.msra.mxu0 %v918
        %994 = vmatprep.subr.bf16.mxu0 %v917
        %995 = vmatpush2.bf16.msra.mxu0 %v916
        %996 = vmatprep.mubr.bf16.mxu0 %v729
        %997 = vmatmul.mubr.bf16.gmra.mxu0 %v728
        %v998 = vpop.f32.mrf.mxu0
        %v999 = vadd.f32 %v797, %v998
        %v1000 = vpop.f32.mrf.mxu0
        %v1001 = vadd.f32 %v801, %v1000
        %v1002 = vpop.f32.mrf.mxu0
        %v1003 = vadd.f32 %v797, %v1002
        %v1004 = vpop.f32.mrf.mxu0
        %v1005 = vadd.f32 %v801, %v1004
        %1006 = vmatprep.mubr.bf16.mxu0 %v731
        %1007 = vmatmul.mubr.bf16.gmra.mxu0 %v730
        %v1008 = vpop.f32.mrf.mxu0
        %v1009 = vadd.f32 %v797, %v1008
        %v1010 = vpop.f32.mrf.mxu0
        %v1011 = vadd.f32 %v801, %v1010
        %v1012 = vpop.f32.mrf.mxu0
        %v1013 = vadd.f32 %v797, %v1012
        %v1014 = vpop.f32.mrf.mxu0
        %v1015 = vadd.f32 %v801, %v1014
        %1016 = vmatprep.mubr.bf16.mxu0 %v733
        %1017 = vmatmul.mubr.bf16.gmra.mxu0 %v732
        %v1018 = vpop.f32.mrf.mxu0
        %v1019 = vadd.f32 %v797, %v1018
        %v1020 = vpop.f32.mrf.mxu0
        %v1021 = vadd.f32 %v801, %v1020
        %v1022 = vpop.f32.mrf.mxu0
        %v1023 = vadd.f32 %v797, %v1022
        %v1024 = vpop.f32.mrf.mxu0
        %v1025 = vadd.f32 %v801, %v1024
        %1026 = vmatprep.mubr.bf16.mxu0 %v735
        %1027 = vmatmul.mubr.bf16.gmra.mxu0 %v734
        %v1028 = vpop.f32.mrf.mxu0
        %v1029 = vadd.f32 %v797, %v1028
        %v1030 = vpop.f32.mrf.mxu0
        %v1031 = vadd.f32 %v801, %v1030
        %v1032 = vpop.f32.mrf.mxu0
        %v1033 = vadd.f32 %v797, %v1032
        %v1034 = vpop.f32.mrf.mxu0
        %v1035 = vadd.f32 %v801, %v1034
        %1036 = vmatprep.mubr.bf16.mxu0 %v737
        %1037 = vmatmul.mubr.bf16.gmra.mxu0 %v736
        %v1038 = vpop.f32.mrf.mxu0
        %v1039 = vadd.f32 %v797, %v1038
        %v1040 = vpop.f32.mrf.mxu0
        %v1041 = vadd.f32 %v801, %v1040
        %v1042 = vpop.f32.mrf.mxu0
        %v1043 = vadd.f32 %v797, %v1042
        %v1044 = vpop.f32.mrf.mxu0
        %v1045 = vadd.f32 %v801, %v1044
        %1046 = vmatprep.mubr.bf16.mxu0 %v739
        %1047 = vmatmul.mubr.bf16.gmra.mxu0 %v738
        %v1048 = vpop.f32.mrf.mxu0
        %v1049 = vadd.f32 %v797, %v1048
        %v1050 = vpop.f32.mrf.mxu0
        %v1051 = vadd.f32 %v801, %v1050
        %v1052 = vpop.f32.mrf.mxu0
        %v1053 = vadd.f32 %v797, %v1052
        %v1054 = vpop.f32.mrf.mxu0
        %v1055 = vadd.f32 %v801, %v1054
        %1056 = vmatprep.mubr.bf16.mxu0 %v741
        %1057 = vmatmul.mubr.bf16.gmra.mxu0 %v740
        %v1058 = vpop.f32.mrf.mxu0
        %v1059 = vadd.f32 %v797, %v1058
        %v1060 = vpop.f32.mrf.mxu0
        %v1061 = vadd.f32 %v801, %v1060
        %v1062 = vpop.f32.mrf.mxu0
        %v1063 = vadd.f32 %v797, %v1062
        %v1064 = vpop.f32.mrf.mxu0
        %v1065 = vadd.f32 %v801, %v1064
        %1066 = vmatprep.mubr.bf16.mxu0 %v743
        %1067 = vmatmul.mubr.bf16.gmra.mxu0 %v742
        %v1068 = vpop.f32.mrf.mxu0
        %v1069 = vadd.f32 %v797, %v1068
        %v1070 = vpop.f32.mrf.mxu0
        %v1071 = vadd.f32 %v801, %v1070
        %v1072 = vpop.f32.mrf.mxu0
        %v1073 = vadd.f32 %v797, %v1072
        %v1074 = vpop.f32.mrf.mxu0
        %v1075 = vadd.f32 %v801, %v1074
        %1076 = vmatprep.mubr.bf16.mxu0 %v745
        %1077 = vmatmul.mubr.bf16.gmra.mxu0 %v744
        %v1078 = vpop.f32.mrf.mxu0
        %v1079 = vadd.f32 %v797, %v1078
        %v1080 = vpop.f32.mrf.mxu0
        %v1081 = vadd.f32 %v801, %v1080
        %v1082 = vpop.f32.mrf.mxu0
        %v1083 = vadd.f32 %v797, %v1082
        %v1084 = vpop.f32.mrf.mxu0
        %v1085 = vadd.f32 %v801, %v1084
        %1086 = vmatprep.mubr.bf16.mxu0 %v747
        %1087 = vmatmul.mubr.bf16.gmra.mxu0 %v746
        %v1088 = vpop.f32.mrf.mxu0
        %v1089 = vadd.f32 %v797, %v1088
        %v1090 = vpop.f32.mrf.mxu0
        %v1091 = vadd.f32 %v801, %v1090
        %v1092 = vpop.f32.mrf.mxu0
        %v1093 = vadd.f32 %v797, %v1092
        %v1094 = vpop.f32.mrf.mxu0
        %v1095 = vadd.f32 %v801, %v1094
        %1096 = vmatprep.mubr.bf16.mxu0 %v749
        %1097 = vmatmul.mubr.bf16.gmra.mxu0 %v748
        %v1098 = vpop.f32.mrf.mxu0
        %v1099 = vadd.f32 %v797, %v1098
        %v1100 = vpop.f32.mrf.mxu0
        %v1101 = vadd.f32 %v801, %v1100
        %v1102 = vpop.f32.mrf.mxu0
        %v1103 = vadd.f32 %v797, %v1102
        %v1104 = vpop.f32.mrf.mxu0
        %v1105 = vadd.f32 %v801, %v1104
        %1106 = vmatprep.mubr.bf16.mxu0 %v751
        %1107 = vmatmul.mubr.bf16.gmra.mxu0 %v750
        %v1108 = vpop.f32.mrf.mxu0
        %v1109 = vadd.f32 %v797, %v1108
        %v1110 = vpop.f32.mrf.mxu0
        %v1111 = vadd.f32 %v801, %v1110
        %v1112 = vpop.f32.mrf.mxu0
        %v1113 = vadd.f32 %v797, %v1112
        %v1114 = vpop.f32.mrf.mxu0
        %v1115 = vadd.f32 %v801, %v1114
        %1116 = vmatprep.mubr.bf16.mxu0 %v753
        %1117 = vmatmul.mubr.bf16.gmra.mxu0 %v752
        %v1118 = vpop.f32.mrf.mxu0
        %v1119 = vadd.f32 %v797, %v1118
        %v1120 = vpop.f32.mrf.mxu0
        %v1121 = vadd.f32 %v801, %v1120
        %v1122 = vpop.f32.mrf.mxu0
        %v1123 = vadd.f32 %v797, %v1122
        %v1124 = vpop.f32.mrf.mxu0
        %v1125 = vadd.f32 %v801, %v1124
        %1126 = vmatprep.mubr.bf16.mxu0 %v755
        %1127 = vmatmul.mubr.bf16.gmra.mxu0 %v754
        %v1128 = vpop.f32.mrf.mxu0
        %v1129 = vadd.f32 %v797, %v1128
        %v1130 = vpop.f32.mrf.mxu0
        %v1131 = vadd.f32 %v801, %v1130
        %v1132 = vpop.f32.mrf.mxu0
        %v1133 = vadd.f32 %v797, %v1132
        %v1134 = vpop.f32.mrf.mxu0
        %v1135 = vadd.f32 %v801, %v1134
        %1136 = vmatprep.mubr.bf16.mxu0 %v757
        %1137 = vmatmul.mubr.bf16.gmra.mxu0 %v756
        %v1138 = vpop.f32.mrf.mxu0
        %v1139 = vadd.f32 %v797, %v1138
        %v1140 = vpop.f32.mrf.mxu0
        %v1141 = vadd.f32 %v801, %v1140
        %v1142 = vpop.f32.mrf.mxu0
        %v1143 = vadd.f32 %v797, %v1142
        %v1144 = vpop.f32.mrf.mxu0
        %v1145 = vadd.f32 %v801, %v1144
        %1146 = vmatprep.mubr.bf16.mxu0 %v759
        %1147 = vmatmul.mubr.bf16.gmra.mxu0 %v758
        %v1148 = vpop.f32.mrf.mxu0
        %v1149 = vadd.f32 %v797, %v1148
        %v1150 = vpop.f32.mrf.mxu0
        %v1151 = vadd.f32 %v801, %v1150
        %v1152 = vpop.f32.mrf.mxu0
        %v1153 = vadd.f32 %v797, %v1152
        %v1154 = vpop.f32.mrf.mxu0
        %v1155 = vadd.f32 %v801, %v1154
        %1156 = vdwg.mxu0
        %v1157 = vmax.f32 %v999, 0.0
        %v1158 = vmax.f32 %v1001, 0.0
        %v1159 = vmax.f32 %v1003, 0.0
        %v1160 = vmax.f32 %v1005, 0.0
        %v1161 = vmax.f32 %v1009, 0.0
        %v1162 = vmax.f32 %v1011, 0.0
        %v1163 = vmax.f32 %v1013, 0.0
        %v1164 = vmax.f32 %v1015, 0.0
        %v1165 = vmax.f32 %v1019, 0.0
        %v1166 = vmax.f32 %v1021, 0.0
        %v1167 = vmax.f32 %v1023, 0.0
        %v1168 = vmax.f32 %v1025, 0.0
        %v1169 = vmax.f32 %v1029, 0.0
        %v1170 = vmax.f32 %v1031, 0.0
        %v1171 = vmax.f32 %v1033, 0.0
        %v1172 = vmax.f32 %v1035, 0.0
        %v1173 = vmax.f32 %v1039, 0.0
        %v1174 = vmax.f32 %v1041, 0.0
        %v1175 = vmax.f32 %v1043, 0.0
        %v1176 = vmax.f32 %v1045, 0.0
        %v1177 = vmax.f32 %v1049, 0.0
        %v1178 = vmax.f32 %v1051, 0.0
        %v1179 = vmax.f32 %v1053, 0.0
        %v1180 = vmax.f32 %v1055, 0.0
        %v1181 = vmax.f32 %v1059, 0.0
        %v1182 = vmax.f32 %v1061, 0.0
        %v1183 = vmax.f32 %v1063, 0.0
        %v1184 = vmax.f32 %v1065, 0.0
        %v1185 = vmax.f32 %v1069, 0.0
        %v1186 = vmax.f32 %v1071, 0.0
        %v1187 = vmax.f32 %v1073, 0.0
        %v1188 = vmax.f32 %v1075, 0.0
        %v1189 = vmax.f32 %v1079, 0.0
        %v1190 = vmax.f32 %v1081, 0.0
        %v1191 = vmax.f32 %v1083, 0.0
        %v1192 = vmax.f32 %v1085, 0.0
        %v1193 = vmax.f32 %v1089, 0.0
        %v1194 = vmax.f32 %v1091, 0.0
        %v1195 = vmax.f32 %v1093, 0.0
        %v1196 = vmax.f32 %v1095, 0.0
        %v1197 = vmax.f32 %v1099, 0.0
        %v1198 = vmax.f32 %v1101, 0.0
        %v1199 = vmax.f32 %v1103, 0.0
        %v1200 = vmax.f32 %v1105, 0.0
        %v1201 = vmax.f32 %v1109, 0.0
        %v1202 = vmax.f32 %v1111, 0.0
        %v1203 = vmax.f32 %v1113, 0.0
        %v1204 = vmax.f32 %v1115, 0.0
        %v1205 = vmax.f32 %v1119, 0.0
        %v1206 = vmax.f32 %v1121, 0.0
        %v1207 = vmax.f32 %v1123, 0.0
        %v1208 = vmax.f32 %v1125, 0.0
        %v1209 = vmax.f32 %v1129, 0.0
        %v1210 = vmax.f32 %v1131, 0.0
        %v1211 = vmax.f32 %v1133, 0.0
        %v1212 = vmax.f32 %v1135, 0.0
        %v1213 = vmax.f32 %v1139, 0.0
        %v1214 = vmax.f32 %v1141, 0.0
        %v1215 = vmax.f32 %v1143, 0.0
        %v1216 = vmax.f32 %v1145, 0.0
        %v1217 = vmax.f32 %v1149, 0.0
        %v1218 = vmax.f32 %v1151, 0.0
        %v1219 = vmax.f32 %v1153, 0.0
        %v1220 = vmax.f32 %v1155, 0.0
        %v1221 = vpack.c.bf16 %v1159, %v1157
        %v1222 = vpack.c.bf16 %v1160, %v1158
        %v1223 = vpack.c.bf16 %v1163, %v1161
        %v1224 = vpack.c.bf16 %v1164, %v1162
        %v1225 = vpack.c.bf16 %v1167, %v1165
        %v1226 = vpack.c.bf16 %v1168, %v1166
        %v1227 = vpack.c.bf16 %v1171, %v1169
        %v1228 = vpack.c.bf16 %v1172, %v1170
        %v1229 = vpack.c.bf16 %v1175, %v1173
        %v1230 = vpack.c.bf16 %v1176, %v1174
        %v1231 = vpack.c.bf16 %v1179, %v1177
        %v1232 = vpack.c.bf16 %v1180, %v1178
        %v1233 = vpack.c.bf16 %v1183, %v1181
        %v1234 = vpack.c.bf16 %v1184, %v1182
        %v1235 = vpack.c.bf16 %v1187, %v1185
        %v1236 = vpack.c.bf16 %v1188, %v1186
        %v1237 = vpack.c.bf16 %v1191, %v1189
        %v1238 = vpack.c.bf16 %v1192, %v1190
        %v1239 = vpack.c.bf16 %v1195, %v1193
        %v1240 = vpack.c.bf16 %v1196, %v1194
        %v1241 = vpack.c.bf16 %v1199, %v1197
        %v1242 = vpack.c.bf16 %v1200, %v1198
        %v1243 = vpack.c.bf16 %v1203, %v1201
        %v1244 = vpack.c.bf16 %v1204, %v1202
        %v1245 = vpack.c.bf16 %v1207, %v1205
        %v1246 = vpack.c.bf16 %v1208, %v1206
        %v1247 = vpack.c.bf16 %v1211, %v1209
        %v1248 = vpack.c.bf16 %v1212, %v1210
        %v1249 = vpack.c.bf16 %v1215, %v1213
        %v1250 = vpack.c.bf16 %v1216, %v1214
        %v1251 = vpack.c.bf16 %v1219, %v1217
        %v1252 = vpack.c.bf16 %v1220, %v1218
        %v1253 = vld [vmem:[%s5] sm:$0xff]
        %v1254 = vld [vmem:[%s5 + $0x8] sm:$0xff]
        %v1255 = vld [vmem:[%s5 + $0x10] sm:$0xff]
        %v1256 = vld [vmem:[%s5 + $0x18] sm:$0xff]
        %v1257 = vld [vmem:[%s5 + $0x20] sm:$0xff]
        %v1258 = vld [vmem:[%s5 + $0x28] sm:$0xff]
        %v1259 = vld [vmem:[%s5 + $0x30] sm:$0xff]
        %v1260 = vld [vmem:[%s5 + $0x38] sm:$0xff]
        %v1261 = vld [vmem:[%s5 + $0x40] sm:$0xff]
        %v1262 = vld [vmem:[%s5 + $0x48] sm:$0xff]
        %v1263 = vld [vmem:[%s5 + $0x50] sm:$0xff]
        %v1264 = vld [vmem:[%s5 + $0x58] sm:$0xff]
        %v1265 = vld [vmem:[%s5 + $0x60] sm:$0xff]
        %v1266 = vld [vmem:[%s5 + $0x68] sm:$0xff]
        %v1267 = vld [vmem:[%s5 + $0x70] sm:$0xff]
        %v1268 = vld [vmem:[%s5 + $0x78] sm:$0xff]
        %v1269 = vld [vmem:[%s5 + $0x80] sm:$0xff]
        %v1270 = vld [vmem:[%s5 + $0x88] sm:$0xff]
        %v1271 = vld [vmem:[%s5 + $0x90] sm:$0xff]
        %v1272 = vld [vmem:[%s5 + $0x98] sm:$0xff]
        %v1273 = vld [vmem:[%s5 + $0xa0] sm:$0xff]
        %v1274 = vld [vmem:[%s5 + $0xa8] sm:$0xff]
        %v1275 = vld [vmem:[%s5 + $0xb0] sm:$0xff]
        %v1276 = vld [vmem:[%s5 + $0xb8] sm:$0xff]
        %v1277 = vld [vmem:[%s5 + $0xc0] sm:$0xff]
        %v1278 = vld [vmem:[%s5 + $0xc8] sm:$0xff]
        %v1279 = vld [vmem:[%s5 + $0xd0] sm:$0xff]
        %v1280 = vld [vmem:[%s5 + $0xd8] sm:$0xff]
        %v1281 = vld [vmem:[%s5 + $0xe0] sm:$0xff]
        %v1282 = vld [vmem:[%s5 + $0xe8] sm:$0xff]
        %v1283 = vld [vmem:[%s5 + $0xf0] sm:$0xff]
        %v1284 = vld [vmem:[%s5 + $0xf8] sm:$0xff]
        %v1285 = vld [vmem:[%s6] sm:$0x3]
        %v1287 = vlaneseq
        %v1288 = vshrl.u32 %v1287, 7
        %v1289 = vsub.s32 0, %v1288
        %v1290 = vrot.slane %v1285, %v1289
        %v1291 = vlaneseq
        %v1292 = vshrl.u32 %v1291, 7
        %v1293 = vsub.s32 1, %v1292
        %v1294 = vrot.slane %v1285, %v1293
        %v1329 = vunpack.c.l.b16 %v1253
        %v1330 = vunpack.c.h.b16 %v1253
        %v1331 = vunpack.c.l.b16 %v1254
        %v1332 = vunpack.c.h.b16 %v1254
        %v1333 = vunpack.c.l.b16 %v1255
        %v1334 = vunpack.c.h.b16 %v1255
        %v1335 = vunpack.c.l.b16 %v1256
        %v1336 = vunpack.c.h.b16 %v1256
        %v1337 = vunpack.c.l.b16 %v1257
        %v1338 = vunpack.c.h.b16 %v1257
        %v1339 = vunpack.c.l.b16 %v1258
        %v1340 = vunpack.c.h.b16 %v1258
        %v1341 = vunpack.c.l.b16 %v1259
        %v1342 = vunpack.c.h.b16 %v1259
        %v1343 = vunpack.c.l.b16 %v1260
        %v1344 = vunpack.c.h.b16 %v1260
        %v1345 = vunpack.c.l.b16 %v1261
        %v1346 = vunpack.c.h.b16 %v1261
        %v1347 = vunpack.c.l.b16 %v1262
        %v1348 = vunpack.c.h.b16 %v1262
        %v1349 = vunpack.c.l.b16 %v1263
        %v1350 = vunpack.c.h.b16 %v1263
        %v1351 = vunpack.c.l.b16 %v1264
        %v1352 = vunpack.c.h.b16 %v1264
        %v1353 = vunpack.c.l.b16 %v1265
        %v1354 = vunpack.c.h.b16 %v1265
        %v1355 = vunpack.c.l.b16 %v1266
        %v1356 = vunpack.c.h.b16 %v1266
        %v1357 = vunpack.c.l.b16 %v1267
        %v1358 = vunpack.c.h.b16 %v1267
        %v1359 = vunpack.c.l.b16 %v1268
        %v1360 = vunpack.c.h.b16 %v1268
        %v1361 = vunpack.c.l.b16 %v1269
        %v1362 = vunpack.c.h.b16 %v1269
        %v1363 = vunpack.c.l.b16 %v1270
        %v1364 = vunpack.c.h.b16 %v1270
        %v1365 = vunpack.c.l.b16 %v1271
        %v1366 = vunpack.c.h.b16 %v1271
        %v1367 = vunpack.c.l.b16 %v1272
        %v1368 = vunpack.c.h.b16 %v1272
        %v1369 = vunpack.c.l.b16 %v1273
        %v1370 = vunpack.c.h.b16 %v1273
        %v1371 = vunpack.c.l.b16 %v1274
        %v1372 = vunpack.c.h.b16 %v1274
        %v1373 = vunpack.c.l.b16 %v1275
        %v1374 = vunpack.c.h.b16 %v1275
        %v1375 = vunpack.c.l.b16 %v1276
        %v1376 = vunpack.c.h.b16 %v1276
        %v1377 = vunpack.c.l.b16 %v1277
        %v1378 = vunpack.c.h.b16 %v1277
        %v1379 = vunpack.c.l.b16 %v1278
        %v1380 = vunpack.c.h.b16 %v1278
        %v1381 = vunpack.c.l.b16 %v1279
        %v1382 = vunpack.c.h.b16 %v1279
        %v1383 = vunpack.c.l.b16 %v1280
        %v1384 = vunpack.c.h.b16 %v1280
        %v1385 = vunpack.c.l.b16 %v1281
        %v1386 = vunpack.c.h.b16 %v1281
        %v1387 = vunpack.c.l.b16 %v1282
        %v1388 = vunpack.c.h.b16 %v1282
        %v1389 = vunpack.c.l.b16 %v1283
        %v1390 = vunpack.c.h.b16 %v1283
        %v1391 = vunpack.c.l.b16 %v1284
        %v1392 = vunpack.c.h.b16 %v1284
        %v1393 = vpack.c.b16 %v1331, %v1329
        %v1394 = vpack.c.b16 %v1332, %v1330
        %v1395 = vpack.c.b16 %v1335, %v1333
        %v1396 = vpack.c.b16 %v1336, %v1334
        %v1397 = vpack.c.b16 %v1339, %v1337
        %v1398 = vpack.c.b16 %v1340, %v1338
        %v1399 = vpack.c.b16 %v1343, %v1341
        %v1400 = vpack.c.b16 %v1344, %v1342
        %v1401 = vpack.c.b16 %v1347, %v1345
        %v1402 = vpack.c.b16 %v1348, %v1346
        %v1403 = vpack.c.b16 %v1351, %v1349
        %v1404 = vpack.c.b16 %v1352, %v1350
        %v1405 = vpack.c.b16 %v1355, %v1353
        %v1406 = vpack.c.b16 %v1356, %v1354
        %v1407 = vpack.c.b16 %v1359, %v1357
        %v1408 = vpack.c.b16 %v1360, %v1358
        %v1409 = vpack.c.b16 %v1363, %v1361
        %v1410 = vpack.c.b16 %v1364, %v1362
        %v1411 = vpack.c.b16 %v1367, %v1365
        %v1412 = vpack.c.b16 %v1368, %v1366
        %v1413 = vpack.c.b16 %v1371, %v1369
        %v1414 = vpack.c.b16 %v1372, %v1370
        %v1415 = vpack.c.b16 %v1375, %v1373
        %v1416 = vpack.c.b16 %v1376, %v1374
        %v1417 = vpack.c.b16 %v1379, %v1377
        %v1418 = vpack.c.b16 %v1380, %v1378
        %v1419 = vpack.c.b16 %v1383, %v1381
        %v1420 = vpack.c.b16 %v1384, %v1382
        %v1421 = vpack.c.b16 %v1387, %v1385
        %v1422 = vpack.c.b16 %v1388, %v1386
        %v1423 = vpack.c.b16 %v1391, %v1389
        %v1424 = vpack.c.b16 %v1392, %v1390
        %1457 = vmatprep.subr.bf16.mxu0 %v1408
        %1458 = vmatpush1.bf16.msra.mxu0 %v1407
        %1459 = vmatprep.subr.bf16.mxu0 %v1406
        %1460 = vmatpush1.bf16.msra.mxu0 %v1405
        %1461 = vmatprep.subr.bf16.mxu0 %v1404
        %1462 = vmatpush1.bf16.msra.mxu0 %v1403
        %1463 = vmatprep.subr.bf16.mxu0 %v1402
        %1464 = vmatpush1.bf16.msra.mxu0 %v1401
        %1465 = vmatprep.subr.bf16.mxu0 %v1400
        %1466 = vmatpush1.bf16.msra.mxu0 %v1399
        %1467 = vmatprep.subr.bf16.mxu0 %v1398
        %1468 = vmatpush1.bf16.msra.mxu0 %v1397
        %1469 = vmatprep.subr.bf16.mxu0 %v1396
        %1470 = vmatpush1.bf16.msra.mxu0 %v1395
        %1471 = vmatprep.subr.bf16.mxu0 %v1394
        %1472 = vmatpush1.bf16.msra.mxu0 %v1393
        %1473 = vmatprep.subr.bf16.mxu0 %v1424
        %1474 = vmatpush2.bf16.msra.mxu0 %v1423
        %1475 = vmatprep.subr.bf16.mxu0 %v1422
        %1476 = vmatpush2.bf16.msra.mxu0 %v1421
        %1477 = vmatprep.subr.bf16.mxu0 %v1420
        %1478 = vmatpush2.bf16.msra.mxu0 %v1419
        %1479 = vmatprep.subr.bf16.mxu0 %v1418
        %1480 = vmatpush2.bf16.msra.mxu0 %v1417
        %1481 = vmatprep.subr.bf16.mxu0 %v1416
        %1482 = vmatpush2.bf16.msra.mxu0 %v1415
        %1483 = vmatprep.subr.bf16.mxu0 %v1414
        %1484 = vmatpush2.bf16.msra.mxu0 %v1413
        %1485 = vmatprep.subr.bf16.mxu0 %v1412
        %1486 = vmatpush2.bf16.msra.mxu0 %v1411
        %1487 = vmatprep.subr.bf16.mxu0 %v1410
        %1488 = vmatpush2.bf16.msra.mxu0 %v1409
        %1489 = vmatprep.mubr.bf16.mxu0 %v1222
        %1490 = vmatmul.mubr.bf16.gmra.mxu0 %v1221
        %v1491 = vpop.f32.mrf.mxu0
        %v1492 = vadd.f32 %v1290, %v1491
        %v1493 = vpop.f32.mrf.mxu0
        %v1494 = vadd.f32 %v1294, %v1493
        %v1495 = vpop.f32.mrf.mxu0
        %v1496 = vadd.f32 %v1290, %v1495
        %v1497 = vpop.f32.mrf.mxu0
        %v1498 = vadd.f32 %v1294, %v1497
        %1499 = vmatprep.mubr.bf16.mxu0 %v1224
        %1500 = vmatmul.mubr.bf16.gmra.mxu0 %v1223
        %v1501 = vpop.f32.mrf.mxu0
        %v1502 = vadd.f32 %v1290, %v1501
        %v1503 = vpop.f32.mrf.mxu0
        %v1504 = vadd.f32 %v1294, %v1503
        %v1505 = vpop.f32.mrf.mxu0
        %v1506 = vadd.f32 %v1290, %v1505
        %v1507 = vpop.f32.mrf.mxu0
        %v1508 = vadd.f32 %v1294, %v1507
        %1509 = vmatprep.mubr.bf16.mxu0 %v1226
        %1510 = vmatmul.mubr.bf16.gmra.mxu0 %v1225
        %v1511 = vpop.f32.mrf.mxu0
        %v1512 = vadd.f32 %v1290, %v1511
        %v1513 = vpop.f32.mrf.mxu0
        %v1514 = vadd.f32 %v1294, %v1513
        %v1515 = vpop.f32.mrf.mxu0
        %v1516 = vadd.f32 %v1290, %v1515
        %v1517 = vpop.f32.mrf.mxu0
        %v1518 = vadd.f32 %v1294, %v1517
        %1519 = vmatprep.mubr.bf16.mxu0 %v1228
        %1520 = vmatmul.mubr.bf16.gmra.mxu0 %v1227
        %v1521 = vpop.f32.mrf.mxu0
        %v1522 = vadd.f32 %v1290, %v1521
        %v1523 = vpop.f32.mrf.mxu0
        %v1524 = vadd.f32 %v1294, %v1523
        %v1525 = vpop.f32.mrf.mxu0
        %v1526 = vadd.f32 %v1290, %v1525
        %v1527 = vpop.f32.mrf.mxu0
        %v1528 = vadd.f32 %v1294, %v1527
        %1529 = vmatprep.mubr.bf16.mxu0 %v1230
        %1530 = vmatmul.mubr.bf16.gmra.mxu0 %v1229
        %v1531 = vpop.f32.mrf.mxu0
        %v1532 = vadd.f32 %v1290, %v1531
        %v1533 = vpop.f32.mrf.mxu0
        %v1534 = vadd.f32 %v1294, %v1533
        %v1535 = vpop.f32.mrf.mxu0
        %v1536 = vadd.f32 %v1290, %v1535
        %v1537 = vpop.f32.mrf.mxu0
        %v1538 = vadd.f32 %v1294, %v1537
        %1539 = vmatprep.mubr.bf16.mxu0 %v1232
        %1540 = vmatmul.mubr.bf16.gmra.mxu0 %v1231
        %v1541 = vpop.f32.mrf.mxu0
        %v1542 = vadd.f32 %v1290, %v1541
        %v1543 = vpop.f32.mrf.mxu0
        %v1544 = vadd.f32 %v1294, %v1543
        %v1545 = vpop.f32.mrf.mxu0
        %v1546 = vadd.f32 %v1290, %v1545
        %v1547 = vpop.f32.mrf.mxu0
        %v1548 = vadd.f32 %v1294, %v1547
        %1549 = vmatprep.mubr.bf16.mxu0 %v1234
        %1550 = vmatmul.mubr.bf16.gmra.mxu0 %v1233
        %v1551 = vpop.f32.mrf.mxu0
        %v1552 = vadd.f32 %v1290, %v1551
        %v1553 = vpop.f32.mrf.mxu0
        %v1554 = vadd.f32 %v1294, %v1553
        %v1555 = vpop.f32.mrf.mxu0
        %v1556 = vadd.f32 %v1290, %v1555
        %v1557 = vpop.f32.mrf.mxu0
        %v1558 = vadd.f32 %v1294, %v1557
        %1559 = vmatprep.mubr.bf16.mxu0 %v1236
        %1560 = vmatmul.mubr.bf16.gmra.mxu0 %v1235
        %v1561 = vpop.f32.mrf.mxu0
        %v1562 = vadd.f32 %v1290, %v1561
        %v1563 = vpop.f32.mrf.mxu0
        %v1564 = vadd.f32 %v1294, %v1563
        %v1565 = vpop.f32.mrf.mxu0
        %v1566 = vadd.f32 %v1290, %v1565
        %v1567 = vpop.f32.mrf.mxu0
        %v1568 = vadd.f32 %v1294, %v1567
        %1569 = vmatprep.mubr.bf16.mxu0 %v1238
        %1570 = vmatmul.mubr.bf16.gmra.mxu0 %v1237
        %v1571 = vpop.f32.mrf.mxu0
        %v1572 = vadd.f32 %v1290, %v1571
        %v1573 = vpop.f32.mrf.mxu0
        %v1574 = vadd.f32 %v1294, %v1573
        %v1575 = vpop.f32.mrf.mxu0
        %v1576 = vadd.f32 %v1290, %v1575
        %v1577 = vpop.f32.mrf.mxu0
        %v1578 = vadd.f32 %v1294, %v1577
        %1579 = vmatprep.mubr.bf16.mxu0 %v1240
        %1580 = vmatmul.mubr.bf16.gmra.mxu0 %v1239
        %v1581 = vpop.f32.mrf.mxu0
        %v1582 = vadd.f32 %v1290, %v1581
        %v1583 = vpop.f32.mrf.mxu0
        %v1584 = vadd.f32 %v1294, %v1583
        %v1585 = vpop.f32.mrf.mxu0
        %v1586 = vadd.f32 %v1290, %v1585
        %v1587 = vpop.f32.mrf.mxu0
        %v1588 = vadd.f32 %v1294, %v1587
        %1589 = vmatprep.mubr.bf16.mxu0 %v1242
        %1590 = vmatmul.mubr.bf16.gmra.mxu0 %v1241
        %v1591 = vpop.f32.mrf.mxu0
        %v1592 = vadd.f32 %v1290, %v1591
        %v1593 = vpop.f32.mrf.mxu0
        %v1594 = vadd.f32 %v1294, %v1593
        %v1595 = vpop.f32.mrf.mxu0
        %v1596 = vadd.f32 %v1290, %v1595
        %v1597 = vpop.f32.mrf.mxu0
        %v1598 = vadd.f32 %v1294, %v1597
        %1599 = vmatprep.mubr.bf16.mxu0 %v1244
        %1600 = vmatmul.mubr.bf16.gmra.mxu0 %v1243
        %v1601 = vpop.f32.mrf.mxu0
        %v1602 = vadd.f32 %v1290, %v1601
        %v1603 = vpop.f32.mrf.mxu0
        %v1604 = vadd.f32 %v1294, %v1603
        %v1605 = vpop.f32.mrf.mxu0
        %v1606 = vadd.f32 %v1290, %v1605
        %v1607 = vpop.f32.mrf.mxu0
        %v1608 = vadd.f32 %v1294, %v1607
        %1609 = vmatprep.mubr.bf16.mxu0 %v1246
        %1610 = vmatmul.mubr.bf16.gmra.mxu0 %v1245
        %v1611 = vpop.f32.mrf.mxu0
        %v1612 = vadd.f32 %v1290, %v1611
        %v1613 = vpop.f32.mrf.mxu0
        %v1614 = vadd.f32 %v1294, %v1613
        %v1615 = vpop.f32.mrf.mxu0
        %v1616 = vadd.f32 %v1290, %v1615
        %v1617 = vpop.f32.mrf.mxu0
        %v1618 = vadd.f32 %v1294, %v1617
        %1619 = vmatprep.mubr.bf16.mxu0 %v1248
        %1620 = vmatmul.mubr.bf16.gmra.mxu0 %v1247
        %v1621 = vpop.f32.mrf.mxu0
        %v1622 = vadd.f32 %v1290, %v1621
        %v1623 = vpop.f32.mrf.mxu0
        %v1624 = vadd.f32 %v1294, %v1623
        %v1625 = vpop.f32.mrf.mxu0
        %v1626 = vadd.f32 %v1290, %v1625
        %v1627 = vpop.f32.mrf.mxu0
        %v1628 = vadd.f32 %v1294, %v1627
        %1629 = vmatprep.mubr.bf16.mxu0 %v1250
        %1630 = vmatmul.mubr.bf16.gmra.mxu0 %v1249
        %v1631 = vpop.f32.mrf.mxu0
        %v1632 = vadd.f32 %v1290, %v1631
        %v1633 = vpop.f32.mrf.mxu0
        %v1634 = vadd.f32 %v1294, %v1633
        %v1635 = vpop.f32.mrf.mxu0
        %v1636 = vadd.f32 %v1290, %v1635
        %v1637 = vpop.f32.mrf.mxu0
        %v1638 = vadd.f32 %v1294, %v1637
        %1639 = vmatprep.mubr.bf16.mxu0 %v1252
        %1640 = vmatmul.mubr.bf16.gmra.mxu0 %v1251
        %v1641 = vpop.f32.mrf.mxu0
        %v1642 = vadd.f32 %v1290, %v1641
        %v1643 = vpop.f32.mrf.mxu0
        %v1644 = vadd.f32 %v1294, %v1643
        %v1645 = vpop.f32.mrf.mxu0
        %v1646 = vadd.f32 %v1290, %v1645
        %v1647 = vpop.f32.mrf.mxu0
        %v1648 = vadd.f32 %v1294, %v1647
        %1649 = vdwg.mxu0
        %v1650 = vmax.f32 %v1492, 0.0
        %v1651 = vmax.f32 %v1494, 0.0
        %v1652 = vmax.f32 %v1496, 0.0
        %v1653 = vmax.f32 %v1498, 0.0
        %v1654 = vmax.f32 %v1502, 0.0
        %v1655 = vmax.f32 %v1504, 0.0
        %v1656 = vmax.f32 %v1506, 0.0
        %v1657 = vmax.f32 %v1508, 0.0
        %v1658 = vmax.f32 %v1512, 0.0
        %v1659 = vmax.f32 %v1514, 0.0
        %v1660 = vmax.f32 %v1516, 0.0
        %v1661 = vmax.f32 %v1518, 0.0
        %v1662 = vmax.f32 %v1522, 0.0
        %v1663 = vmax.f32 %v1524, 0.0
        %v1664 = vmax.f32 %v1526, 0.0
        %v1665 = vmax.f32 %v1528, 0.0
        %v1666 = vmax.f32 %v1532, 0.0
        %v1667 = vmax.f32 %v1534, 0.0
        %v1668 = vmax.f32 %v1536, 0.0
        %v1669 = vmax.f32 %v1538, 0.0
        %v1670 = vmax.f32 %v1542, 0.0
        %v1671 = vmax.f32 %v1544, 0.0
        %v1672 = vmax.f32 %v1546, 0.0
        %v1673 = vmax.f32 %v1548, 0.0
        %v1674 = vmax.f32 %v1552, 0.0
        %v1675 = vmax.f32 %v1554, 0.0
        %v1676 = vmax.f32 %v1556, 0.0
        %v1677 = vmax.f32 %v1558, 0.0
        %v1678 = vmax.f32 %v1562, 0.0
        %v1679 = vmax.f32 %v1564, 0.0
        %v1680 = vmax.f32 %v1566, 0.0
        %v1681 = vmax.f32 %v1568, 0.0
        %v1682 = vmax.f32 %v1572, 0.0
        %v1683 = vmax.f32 %v1574, 0.0
        %v1684 = vmax.f32 %v1576, 0.0
        %v1685 = vmax.f32 %v1578, 0.0
        %v1686 = vmax.f32 %v1582, 0.0
        %v1687 = vmax.f32 %v1584, 0.0
        %v1688 = vmax.f32 %v1586, 0.0
        %v1689 = vmax.f32 %v1588, 0.0
        %v1690 = vmax.f32 %v1592, 0.0
        %v1691 = vmax.f32 %v1594, 0.0
        %v1692 = vmax.f32 %v1596, 0.0
        %v1693 = vmax.f32 %v1598, 0.0
        %v1694 = vmax.f32 %v1602, 0.0
        %v1695 = vmax.f32 %v1604, 0.0
        %v1696 = vmax.f32 %v1606, 0.0
        %v1697 = vmax.f32 %v1608, 0.0
        %v1698 = vmax.f32 %v1612, 0.0
        %v1699 = vmax.f32 %v1614, 0.0
        %v1700 = vmax.f32 %v1616, 0.0
        %v1701 = vmax.f32 %v1618, 0.0
        %v1702 = vmax.f32 %v1622, 0.0
        %v1703 = vmax.f32 %v1624, 0.0
        %v1704 = vmax.f32 %v1626, 0.0
        %v1705 = vmax.f32 %v1628, 0.0
        %v1706 = vmax.f32 %v1632, 0.0
        %v1707 = vmax.f32 %v1634, 0.0
        %v1708 = vmax.f32 %v1636, 0.0
        %v1709 = vmax.f32 %v1638, 0.0
        %v1710 = vmax.f32 %v1642, 0.0
        %v1711 = vmax.f32 %v1644, 0.0
        %v1712 = vmax.f32 %v1646, 0.0
        %v1713 = vmax.f32 %v1648, 0.0
        %v1714 = vpack.c.bf16 %v1652, %v1650
        %v1715 = vpack.c.bf16 %v1653, %v1651
        %v1716 = vpack.c.bf16 %v1656, %v1654
        %v1717 = vpack.c.bf16 %v1657, %v1655
        %v1718 = vpack.c.bf16 %v1660, %v1658
        %v1719 = vpack.c.bf16 %v1661, %v1659
        %v1720 = vpack.c.bf16 %v1664, %v1662
        %v1721 = vpack.c.bf16 %v1665, %v1663
        %v1722 = vpack.c.bf16 %v1668, %v1666
        %v1723 = vpack.c.bf16 %v1669, %v1667
        %v1724 = vpack.c.bf16 %v1672, %v1670
        %v1725 = vpack.c.bf16 %v1673, %v1671
        %v1726 = vpack.c.bf16 %v1676, %v1674
        %v1727 = vpack.c.bf16 %v1677, %v1675
        %v1728 = vpack.c.bf16 %v1680, %v1678
        %v1729 = vpack.c.bf16 %v1681, %v1679
        %v1730 = vpack.c.bf16 %v1684, %v1682
        %v1731 = vpack.c.bf16 %v1685, %v1683
        %v1732 = vpack.c.bf16 %v1688, %v1686
        %v1733 = vpack.c.bf16 %v1689, %v1687
        %v1734 = vpack.c.bf16 %v1692, %v1690
        %v1735 = vpack.c.bf16 %v1693, %v1691
        %v1736 = vpack.c.bf16 %v1696, %v1694
        %v1737 = vpack.c.bf16 %v1697, %v1695
        %v1738 = vpack.c.bf16 %v1700, %v1698
        %v1739 = vpack.c.bf16 %v1701, %v1699
        %v1740 = vpack.c.bf16 %v1704, %v1702
        %v1741 = vpack.c.bf16 %v1705, %v1703
        %v1742 = vpack.c.bf16 %v1708, %v1706
        %v1743 = vpack.c.bf16 %v1709, %v1707
        %v1744 = vpack.c.bf16 %v1712, %v1710
        %v1745 = vpack.c.bf16 %v1713, %v1711
        %v1746 = vld [vmem:[#allocation2] sm:$0xf]
        %v1747 = vld [vmem:[#allocation2 + $0x4] sm:$0xf]
        %v1748 = vld [vmem:[#allocation2 + $0x8] sm:$0xf]
        %v1749 = vld [vmem:[#allocation2 + $0xc] sm:$0xf]
        %v1750 = vld [vmem:[#allocation2 + $0x10] sm:$0xf]
        %v1751 = vld [vmem:[#allocation2 + $0x14] sm:$0xf]
        %v1752 = vld [vmem:[#allocation2 + $0x18] sm:$0xf]
        %v1753 = vld [vmem:[#allocation2 + $0x1c] sm:$0xf]
        %v1754 = vld [vmem:[#allocation2 + $0x20] sm:$0xf]
        %v1755 = vld [vmem:[#allocation2 + $0x24] sm:$0xf]
        %v1756 = vld [vmem:[#allocation2 + $0x28] sm:$0xf]
        %v1757 = vld [vmem:[#allocation2 + $0x2c] sm:$0xf]
        %v1758 = vld [vmem:[#allocation2 + $0x30] sm:$0xf]
        %v1759 = vld [vmem:[#allocation2 + $0x34] sm:$0xf]
        %v1760 = vld [vmem:[#allocation2 + $0x38] sm:$0xf]
        %v1761 = vld [vmem:[#allocation2 + $0x3c] sm:$0xf]
        %v1762 = vld [vmem:[#allocation2 + $0x40] sm:$0xf]
        %v1763 = vld [vmem:[#allocation2 + $0x44] sm:$0xf]
        %v1764 = vld [vmem:[#allocation2 + $0x48] sm:$0xf]
        %v1765 = vld [vmem:[#allocation2 + $0x4c] sm:$0xf]
        %v1766 = vld [vmem:[#allocation2 + $0x50] sm:$0xf]
        %v1767 = vld [vmem:[#allocation2 + $0x54] sm:$0xf]
        %v1768 = vld [vmem:[#allocation2 + $0x58] sm:$0xf]
        %v1769 = vld [vmem:[#allocation2 + $0x5c] sm:$0xf]
        %v1770 = vld [vmem:[#allocation2 + $0x60] sm:$0xf]
        %v1771 = vld [vmem:[#allocation2 + $0x64] sm:$0xf]
        %v1772 = vld [vmem:[#allocation2 + $0x68] sm:$0xf]
        %v1773 = vld [vmem:[#allocation2 + $0x6c] sm:$0xf]
        %v1774 = vld [vmem:[#allocation2 + $0x70] sm:$0xf]
        %v1775 = vld [vmem:[#allocation2 + $0x74] sm:$0xf]
        %v1776 = vld [vmem:[#allocation2 + $0x78] sm:$0xf]
        %v1777 = vld [vmem:[#allocation2 + $0x7c] sm:$0xf]
        %v1778 = vld [vmem:[%s8] sm:$0x1]
        %v1780 = vlaneseq
        %v1781 = vshrl.u32 %v1780, 7
        %v1782 = vsub.s32 0, %v1781
        %v1783 = vrot.slane %v1778, %v1782
        %v1817 = vunpack.c.l.b16 %v1746
        %v1818 = vunpack.c.l.b16 %v1747
        %v1819 = vunpack.c.l.b16 %v1748
        %v1820 = vunpack.c.l.b16 %v1749
        %v1821 = vunpack.c.l.b16 %v1750
        %v1822 = vunpack.c.l.b16 %v1751
        %v1823 = vunpack.c.l.b16 %v1752
        %v1824 = vunpack.c.l.b16 %v1753
        %v1825 = vunpack.c.l.b16 %v1754
        %v1826 = vunpack.c.l.b16 %v1755
        %v1827 = vunpack.c.l.b16 %v1756
        %v1828 = vunpack.c.l.b16 %v1757
        %v1829 = vunpack.c.l.b16 %v1758
        %v1830 = vunpack.c.l.b16 %v1759
        %v1831 = vunpack.c.l.b16 %v1760
        %v1832 = vunpack.c.l.b16 %v1761
        %v1833 = vunpack.c.l.b16 %v1762
        %v1834 = vunpack.c.l.b16 %v1763
        %v1835 = vunpack.c.l.b16 %v1764
        %v1836 = vunpack.c.l.b16 %v1765
        %v1837 = vunpack.c.l.b16 %v1766
        %v1838 = vunpack.c.l.b16 %v1767
        %v1839 = vunpack.c.l.b16 %v1768
        %v1840 = vunpack.c.l.b16 %v1769
        %v1841 = vunpack.c.l.b16 %v1770
        %v1842 = vunpack.c.l.b16 %v1771
        %v1843 = vunpack.c.l.b16 %v1772
        %v1844 = vunpack.c.l.b16 %v1773
        %v1845 = vunpack.c.l.b16 %v1774
        %v1846 = vunpack.c.l.b16 %v1775
        %v1847 = vunpack.c.l.b16 %v1776
        %v1848 = vunpack.c.l.b16 %v1777
        %v1849 = vpack.c.b16 %v1818, %v1817
        %v1850 = vpack.c.b16 %v1820, %v1819
        %v1851 = vpack.c.b16 %v1822, %v1821
        %v1852 = vpack.c.b16 %v1824, %v1823
        %v1853 = vpack.c.b16 %v1826, %v1825
        %v1854 = vpack.c.b16 %v1828, %v1827
        %v1855 = vpack.c.b16 %v1830, %v1829
        %v1856 = vpack.c.b16 %v1832, %v1831
        %v1857 = vpack.c.b16 %v1834, %v1833
        %v1858 = vpack.c.b16 %v1836, %v1835
        %v1859 = vpack.c.b16 %v1838, %v1837
        %v1860 = vpack.c.b16 %v1840, %v1839
        %v1861 = vpack.c.b16 %v1842, %v1841
        %v1862 = vpack.c.b16 %v1844, %v1843
        %v1863 = vpack.c.b16 %v1846, %v1845
        %v1864 = vpack.c.b16 %v1848, %v1847
        %1881 = vmatprep.subr.bf16.mxu0 0
        %1882 = vmatpush1.bf16.msra.mxu0 %v1856
        %1883 = vmatprep.subr.bf16.mxu0 0
        %1884 = vmatpush1.bf16.msra.mxu0 %v1855
        %1885 = vmatprep.subr.bf16.mxu0 0
        %1886 = vmatpush1.bf16.msra.mxu0 %v1854
        %1887 = vmatprep.subr.bf16.mxu0 0
        %1888 = vmatpush1.bf16.msra.mxu0 %v1853
        %1889 = vmatprep.subr.bf16.mxu0 0
        %1890 = vmatpush1.bf16.msra.mxu0 %v1852
        %1891 = vmatprep.subr.bf16.mxu0 0
        %1892 = vmatpush1.bf16.msra.mxu0 %v1851
        %1893 = vmatprep.subr.bf16.mxu0 0
        %1894 = vmatpush1.bf16.msra.mxu0 %v1850
        %1895 = vmatprep.subr.bf16.mxu0 0
        %1896 = vmatpush1.bf16.msra.mxu0 %v1849
        %1897 = vmatprep.subr.bf16.mxu0 0
        %1898 = vmatpush2.bf16.msra.mxu0 %v1864
        %1899 = vmatprep.subr.bf16.mxu0 0
        %1900 = vmatpush2.bf16.msra.mxu0 %v1863
        %1901 = vmatprep.subr.bf16.mxu0 0
        %1902 = vmatpush2.bf16.msra.mxu0 %v1862
        %1903 = vmatprep.subr.bf16.mxu0 0
        %1904 = vmatpush2.bf16.msra.mxu0 %v1861
        %1905 = vmatprep.subr.bf16.mxu0 0
        %1906 = vmatpush2.bf16.msra.mxu0 %v1860
        %1907 = vmatprep.subr.bf16.mxu0 0
        %1908 = vmatpush2.bf16.msra.mxu0 %v1859
        %1909 = vmatprep.subr.bf16.mxu0 0
        %1910 = vmatpush2.bf16.msra.mxu0 %v1858
        %1911 = vmatprep.subr.bf16.mxu0 0
        %1912 = vmatpush2.bf16.msra.mxu0 %v1857
        %1913 = vmatprep.mubr.bf16.mxu0 %v1715
        %1914 = vmatmul.mubr.bf16.gmra.mxu0 %v1714
        %v1915 = vpop.f32.mrf.mxu0
        %v1916 = vadd.f32 %v1783, %v1915
        %v1917 = vpop.f32.mrf.mxu0
        %v1918 = vpop.f32.mrf.mxu0
        %v1919 = vadd.f32 %v1783, %v1918
        %v1920 = vpop.f32.mrf.mxu0
        %1921 = vmatprep.mubr.bf16.mxu0 %v1717
        %1922 = vmatmul.mubr.bf16.gmra.mxu0 %v1716
        %v1923 = vpop.f32.mrf.mxu0
        %v1924 = vadd.f32 %v1783, %v1923
        %v1925 = vpop.f32.mrf.mxu0
        %v1926 = vpop.f32.mrf.mxu0
        %v1927 = vadd.f32 %v1783, %v1926
        %v1928 = vpop.f32.mrf.mxu0
        %1929 = vmatprep.mubr.bf16.mxu0 %v1719
        %1930 = vmatmul.mubr.bf16.gmra.mxu0 %v1718
        %v1931 = vpop.f32.mrf.mxu0
        %v1932 = vadd.f32 %v1783, %v1931
        %v1933 = vpop.f32.mrf.mxu0
        %v1934 = vpop.f32.mrf.mxu0
        %v1935 = vadd.f32 %v1783, %v1934
        %v1936 = vpop.f32.mrf.mxu0
        %1937 = vmatprep.mubr.bf16.mxu0 %v1721
        %1938 = vmatmul.mubr.bf16.gmra.mxu0 %v1720
        %v1939 = vpop.f32.mrf.mxu0
        %v1940 = vadd.f32 %v1783, %v1939
        %v1941 = vpop.f32.mrf.mxu0
        %v1942 = vpop.f32.mrf.mxu0
        %v1943 = vadd.f32 %v1783, %v1942
        %v1944 = vpop.f32.mrf.mxu0
        %1945 = vmatprep.mubr.bf16.mxu0 %v1723
        %1946 = vmatmul.mubr.bf16.gmra.mxu0 %v1722
        %v1947 = vpop.f32.mrf.mxu0
        %v1948 = vadd.f32 %v1783, %v1947
        %v1949 = vpop.f32.mrf.mxu0
        %v1950 = vpop.f32.mrf.mxu0
        %v1951 = vadd.f32 %v1783, %v1950
        %v1952 = vpop.f32.mrf.mxu0
        %1953 = vmatprep.mubr.bf16.mxu0 %v1725
        %1954 = vmatmul.mubr.bf16.gmra.mxu0 %v1724
        %v1955 = vpop.f32.mrf.mxu0
        %v1956 = vadd.f32 %v1783, %v1955
        %v1957 = vpop.f32.mrf.mxu0
        %v1958 = vpop.f32.mrf.mxu0
        %v1959 = vadd.f32 %v1783, %v1958
        %v1960 = vpop.f32.mrf.mxu0
        %1961 = vmatprep.mubr.bf16.mxu0 %v1727
        %1962 = vmatmul.mubr.bf16.gmra.mxu0 %v1726
        %v1963 = vpop.f32.mrf.mxu0
        %v1964 = vadd.f32 %v1783, %v1963
        %v1965 = vpop.f32.mrf.mxu0
        %v1966 = vpop.f32.mrf.mxu0
        %v1967 = vadd.f32 %v1783, %v1966
        %v1968 = vpop.f32.mrf.mxu0
        %1969 = vmatprep.mubr.bf16.mxu0 %v1729
        %1970 = vmatmul.mubr.bf16.gmra.mxu0 %v1728
        %v1971 = vpop.f32.mrf.mxu0
        %v1972 = vadd.f32 %v1783, %v1971
        %v1973 = vpop.f32.mrf.mxu0
        %v1974 = vpop.f32.mrf.mxu0
        %v1975 = vadd.f32 %v1783, %v1974
        %v1976 = vpop.f32.mrf.mxu0
        %1977 = vmatprep.mubr.bf16.mxu0 %v1731
        %1978 = vmatmul.mubr.bf16.gmra.mxu0 %v1730
        %v1979 = vpop.f32.mrf.mxu0
        %v1980 = vadd.f32 %v1783, %v1979
        %v1981 = vpop.f32.mrf.mxu0
        %v1982 = vpop.f32.mrf.mxu0
        %v1983 = vadd.f32 %v1783, %v1982
        %v1984 = vpop.f32.mrf.mxu0
        %1985 = vmatprep.mubr.bf16.mxu0 %v1733
        %1986 = vmatmul.mubr.bf16.gmra.mxu0 %v1732
        %v1987 = vpop.f32.mrf.mxu0
        %v1988 = vadd.f32 %v1783, %v1987
        %v1989 = vpop.f32.mrf.mxu0
        %v1990 = vpop.f32.mrf.mxu0
        %v1991 = vadd.f32 %v1783, %v1990
        %v1992 = vpop.f32.mrf.mxu0
        %1993 = vmatprep.mubr.bf16.mxu0 %v1735
        %1994 = vmatmul.mubr.bf16.gmra.mxu0 %v1734
        %v1995 = vpop.f32.mrf.mxu0
        %v1996 = vadd.f32 %v1783, %v1995
        %v1997 = vpop.f32.mrf.mxu0
        %v1998 = vpop.f32.mrf.mxu0
        %v1999 = vadd.f32 %v1783, %v1998
        %v2000 = vpop.f32.mrf.mxu0
        %2001 = vmatprep.mubr.bf16.mxu0 %v1737
        %2002 = vmatmul.mubr.bf16.gmra.mxu0 %v1736
        %v2003 = vpop.f32.mrf.mxu0
        %v2004 = vadd.f32 %v1783, %v2003
        %v2005 = vpop.f32.mrf.mxu0
        %v2006 = vpop.f32.mrf.mxu0
        %v2007 = vadd.f32 %v1783, %v2006
        %v2008 = vpop.f32.mrf.mxu0
        %2009 = vmatprep.mubr.bf16.mxu0 %v1739
        %2010 = vmatmul.mubr.bf16.gmra.mxu0 %v1738
        %v2011 = vpop.f32.mrf.mxu0
        %v2012 = vadd.f32 %v1783, %v2011
        %v2013 = vpop.f32.mrf.mxu0
        %v2014 = vpop.f32.mrf.mxu0
        %v2015 = vadd.f32 %v1783, %v2014
        %v2016 = vpop.f32.mrf.mxu0
        %2017 = vmatprep.mubr.bf16.mxu0 %v1741
        %2018 = vmatmul.mubr.bf16.gmra.mxu0 %v1740
        %v2019 = vpop.f32.mrf.mxu0
        %v2020 = vadd.f32 %v1783, %v2019
        %v2021 = vpop.f32.mrf.mxu0
        %v2022 = vpop.f32.mrf.mxu0
        %v2023 = vadd.f32 %v1783, %v2022
        %v2024 = vpop.f32.mrf.mxu0
        %2025 = vmatprep.mubr.bf16.mxu0 %v1743
        %2026 = vmatmul.mubr.bf16.gmra.mxu0 %v1742
        %v2027 = vpop.f32.mrf.mxu0
        %v2028 = vadd.f32 %v1783, %v2027
        %v2029 = vpop.f32.mrf.mxu0
        %v2030 = vpop.f32.mrf.mxu0
        %v2031 = vadd.f32 %v1783, %v2030
        %v2032 = vpop.f32.mrf.mxu0
        %2033 = vmatprep.mubr.bf16.mxu0 %v1745
        %2034 = vmatmul.mubr.bf16.gmra.mxu0 %v1744
        %v2035 = vpop.f32.mrf.mxu0
        %v2036 = vadd.f32 %v1783, %v2035
        %v2037 = vpop.f32.mrf.mxu0
        %v2038 = vpop.f32.mrf.mxu0
        %v2039 = vadd.f32 %v1783, %v2038
        %v2040 = vpop.f32.mrf.mxu0
        %2041 = vdwg.mxu0
        %2042 = vst [vmem:[%s341] sm:$0xff] %v1916
        %2043 = vst [vmem:[%s341 + $0x8] sm:$0xff] %v1919
        %2044 = vst [vmem:[%s341 + $0x10] sm:$0xff] %v1924
        %2045 = vst [vmem:[%s341 + $0x18] sm:$0xff] %v1927
        %2046 = vst [vmem:[%s341 + $0x20] sm:$0xff] %v1932
        %2047 = vst [vmem:[%s341 + $0x28] sm:$0xff] %v1935
        %2048 = vst [vmem:[%s341 + $0x30] sm:$0xff] %v1940
        %2049 = vst [vmem:[%s341 + $0x38] sm:$0xff] %v1943
        %2050 = vst [vmem:[%s341 + $0x40] sm:$0xff] %v1948
        %2051 = vst [vmem:[%s341 + $0x48] sm:$0xff] %v1951
        %2052 = vst [vmem:[%s341 + $0x50] sm:$0xff] %v1956
        %2053 = vst [vmem:[%s341 + $0x58] sm:$0xff] %v1959
        %2054 = vst [vmem:[%s341 + $0x60] sm:$0xff] %v1964
        %2055 = vst [vmem:[%s341 + $0x68] sm:$0xff] %v1967
        %2056 = vst [vmem:[%s341 + $0x70] sm:$0xff] %v1972
        %2057 = vst [vmem:[%s341 + $0x78] sm:$0xff] %v1975
        %2058 = vst [vmem:[%s341 + $0x80] sm:$0xff] %v1980
        %2059 = vst [vmem:[%s341 + $0x88] sm:$0xff] %v1983
        %2060 = vst [vmem:[%s341 + $0x90] sm:$0xff] %v1988
        %2061 = vst [vmem:[%s341 + $0x98] sm:$0xff] %v1991
        %2062 = vst [vmem:[%s341 + $0xa0] sm:$0xff] %v1996
        %2063 = vst [vmem:[%s341 + $0xa8] sm:$0xff] %v1999
        %2064 = vst [vmem:[%s341 + $0xb0] sm:$0xff] %v2004
        %2065 = vst [vmem:[%s341 + $0xb8] sm:$0xff] %v2007
        %2066 = vst [vmem:[%s341 + $0xc0] sm:$0xff] %v2012
        %2067 = vst [vmem:[%s341 + $0xc8] sm:$0xff] %v2015
        %2068 = vst [vmem:[%s341 + $0xd0] sm:$0xff] %v2020
        %2069 = vst [vmem:[%s341 + $0xd8] sm:$0xff] %v2023
        %2070 = vst [vmem:[%s341 + $0xe0] sm:$0xff] %v2028
        %2071 = vst [vmem:[%s341 + $0xe8] sm:$0xff] %v2031
        %2072 = vst [vmem:[%s341 + $0xf0] sm:$0xff] %v2036
        %2073 = vst [vmem:[%s341 + $0xf8] sm:$0xff] %v2039
        %s2074 = sand.u32 %s226, 1
        %s2075 = scalar_lea.sflag [#allocation4], %s2074
        %s2076 = sand.u32 %s226, 1
        %s2077 = smul.addr %s2076, 256
        %s2078 = scalar_lea.vmem [#allocation5], %s2077
        // Predicated region
        $region61: #{tpu_custom_call.1} parent=55 // pred_check
          %p2079 = pneg %p236
        $region62: #{tpu_custom_call.1} parent=55 // pred_check_branch
          %2081 = sbr.rel (%p2079) target = $region64
        $region63: #{tpu_custom_call.1} parent=55 // pred_region
          %s2082 = smul.u32 32, %s24
          %s2084 = ssub.s32 4096, 4096
          %2085 = vsyncadd %s2075, %s2084
          %s2086 = smul.addr %s2082, 128
          %s2087 = scalar_lea.hbm %s9, %s2086
          %s2088 = sshll.u32 %s2078, 4
          %s2089 = int_to_ptr.vmem [resolvable:$true] %s2088
          %2094 = dma.vmem_to_hbm [thread:$0]  %s2089, 4096, %s2087, %s2075, 128, 128, 8
        $region64: #{tpu_custom_call.1} parent=55 // pred_fallthru
          _
      $region56: #{tpu_custom_call.1} parent=5 // pred_fallthru
        _
      %p2095 = scmp.le.s32.totalorder 2, %s19
      // Predicated region
      $region65: #{tpu_custom_call.1} parent=5 // pred_check
        %p2096 = pneg %p2095
      $region66: #{tpu_custom_call.1} parent=5 // pred_check_branch
        %2098 = sbr.rel (%p2096) target = $region68
      $region67: #{tpu_custom_call.1} parent=5 // pred_region
        %s2099 = ssub.s32 %s19, 2
        // Predicated region
        $region69: #{tpu_custom_call.1} parent=67 // pred_check
          %p2100 = pneg %p242
        $region70: #{tpu_custom_call.1} parent=67 // pred_check_branch
          %2102 = sbr.rel (%p2100) target = $region72
        $region71: #{tpu_custom_call.1} parent=67 // pred_region
          %s2103 = sand.u32 %s227, 1
          %s2104 = scalar_lea.sflag [#allocation4], %s2103
          %s2105 = sand.u32 %s227, 1
          %s2106 = smul.addr %s2105, 256
          %s2107 = scalar_lea.vmem [#allocation5], %s2106
          %2108 = dma.done %s2104, 4096
        $region72: #{tpu_custom_call.1} parent=67 // pred_fallthru
          _
      $region68: #{tpu_custom_call.1} parent=5 // pred_fallthru
        _
    $region6: #{tpu_custom_call.1} parent=1 // loop_footer
      %s23 = sadd.s32 1, %s19
    $region7: #{tpu_custom_call.1} parent=1 // loop_footer_branch
      %18 = sbr.rel target = $region3
    $region8: #{tpu_custom_call.1} parent=1 // loop_exit
      _
    %2109 = vsyncpa [#allocation3], 1
    %s2110 = scalar_lea.sflag [#allocation3], 1
    %2111 = vsyncpa %s2110, 1
    %2112 = vsyncpa [#allocation4], 1
    %s2113 = scalar_lea.sflag [#allocation4], 1
    %2114 = vsyncpa %s2113, 1

</llo_original>
